<compile_context>
chip_gen: v5e
topology: v5e:2x2
jax: 0.10.0
libtpu: 0.0.40
codegen_flags: <defaults>
</compile_context>

<pallas_src>
import functools

import jax
import jax.numpy as jnp
import numpy as np
from jax.experimental import pallas as pl
from jax.experimental.pallas import tpu as pltpu


# --------------------- fused conv3x3 + BatchNorm + ReLU ----------------------
def _reconstruct_kernel(x_ref, w_ref, bias_ref, gamma_ref, beta_ref, mask_ref,
                        o_ref, *, n_pix, w_pad, c_in, k_sz, n_valid, eps):
    """x_ref  : (n_pix + margin, c_in)  zero-padded, row-flattened NHWC image
       w_ref  : (k*k*c_in, c_out)       tap-major ((kh, kw, cin)) weight matrix
       bias/gamma/beta : (1, c_out)
       mask_ref: (n_pix, 1)             1.0 at valid conv-output positions
       o_ref  : (n_pix, c_out)          conv+BN+ReLU at every padded position
                                        (border rows are sliced away outside)
    """
    c_out = o_ref.shape[-1]

    # Conv as k*k shifted matmuls over the flattened padded image.  The taps
    # are static row offsets (kh * w_pad + kw); slices are built in VMEM, so
    # no 9x-inflated im2col tensor ever touches HBM.
    acc = jnp.zeros((n_pix, c_out), jnp.float32)
    for kh in range(k_sz):
        for kw in range(k_sz):
            shift = kh * w_pad + kw
            tap = kh * k_sz + kw
            xs = x_ref[pl.ds(shift, n_pix), :]                # (n_pix, c_in)
            wt = w_ref[pl.ds(tap * c_in, c_in), :]            # (c_in, c_out)
            acc = acc + jnp.dot(xs, wt, preferred_element_type=jnp.float32)
    y = acc + bias_ref[...]                                   # (n_pix, c_out)

    # Training-mode BatchNorm2d statistics over the valid output pixels only.
    m = mask_ref[...]                                         # (n_pix, 1)
    ym = y * m
    inv_n = 1.0 / n_valid
    mean = jnp.sum(ym, axis=0, keepdims=True) * inv_n         # (1, c_out)
    var = jnp.sum(ym * y, axis=0, keepdims=True) * inv_n - mean * mean
    var = jnp.maximum(var, 0.0)                               # cancellation guard
    scale = gamma_ref[...] * jax.lax.rsqrt(var + eps)
    shift_bn = beta_ref[...] - mean * scale

    # BN + ReLU fused elementwise epilogue (border rows normalised too, then
    # discarded by the wrapper slice - harmless).
    o_ref[...] = jnp.maximum(y * scale + shift_bn, 0.0)


# --------------------------------- wrapper -----------------------------------
@functools.partial(jax.jit, static_argnames=("kernel_size", "scale_factor"))
def _reconstruct_impl(x_tokens, wmat, bias, gamma, beta, *, kernel_size,
                      scale_factor):
    B, n_patch, hidden = x_tokens.shape
    h = int(round(np.sqrt(n_patch)))
    w = h
    pad = 1 if kernel_size == 3 else 0

    # permute(0,2,1).contiguous().view(B, hidden, h, w) in NCHW is exactly
    # reshape -> (B, h, w, hidden) in NHWC.
    x = x_tokens.reshape(B, h, w, hidden)

    # nn.Upsample(scale_factor), default mode='nearest'.
    up = jnp.repeat(jnp.repeat(x, scale_factor, axis=1), scale_factor, axis=2)
    H, W = h * scale_factor, w * scale_factor
    Hp, Wp = H + 2 * pad, W + 2 * pad
    H_out, W_out = Hp - kernel_size + 1, Wp - kernel_size + 1

    # Zero-pad spatially, flatten pixels to rows, and add a row margin so every
    # conv tap becomes a plain static row-shifted slice inside the kernel.
    xp = jnp.pad(up, ((0, 0), (pad, pad), (pad, pad), (0, 0)))
    n_pix = B * Hp * Wp
    max_shift = (kernel_size - 1) * Wp + (kernel_size - 1)
    margin = ((max_shift + 7) // 8) * 8
    xf = jnp.pad(xp.reshape(n_pix, hidden), ((0, margin), (0, 0)))

    # Valid-output mask (window top-left fully inside the padded image),
    # built once on the host at trace time.
    ii = np.arange(Hp) < H_out
    jj = np.arange(Wp) < W_out
    m2d = np.logical_and(ii[:, None], jj[None, :])
    mask = jnp.asarray(
        np.broadcast_to(m2d, (B, Hp, Wp)).reshape(n_pix, 1).astype(np.float32))

    c_out = wmat.shape[1]
    kern = functools.partial(
        _reconstruct_kernel, n_pix=n_pix, w_pad=Wp, c_in=hidden,
        k_sz=kernel_size, n_valid=float(B * H_out * W_out), eps=1e-5)

    # Single fused pallas_call, single grid step, everything VMEM-resident
    # (~130 KB total at these shapes).
    y = pl.pallas_call(
        kern,
        out_shape=jax.ShapeDtypeStruct((n_pix, c_out), jnp.float32),
        in_specs=[pl.BlockSpec(memory_space=pltpu.MemorySpace.VMEM)] * 6,
        out_specs=pl.BlockSpec(memory_space=pltpu.MemorySpace.VMEM),
    )(xf, wmat, bias, gamma, beta, mask)

    out = y.reshape(B, Hp, Wp, c_out)[:, :H_out, :W_out, :]   # drop border rows
    return jnp.transpose(out, (0, 3, 1, 2))                   # NHWC -> NCHW


def reconstruct(x_tokens, wmat, bias, gamma, beta, *, kernel_size=3,
                scale_factor=2):
    """Reconstruct.forward with training-mode BatchNorm statistics."""
    if x_tokens is None:
        return None
    return _reconstruct_impl(x_tokens, wmat, bias, gamma, beta,
                             kernel_size=kernel_size, scale_factor=scale_factor)


# ----------------------------------- demo ------------------------------------
if __name__ == "__main__":
    key = jax.random.PRNGKey(0)
    k_x, k_w, k_b, k_g, k_be = jax.random.split(key, 5)

    B, n_patch, hidden = 2, 64, 32            # h = w = 8 token grid
    out_channels, kernel_size, scale_factor = 16, 3, 2
    H = W = int(np.sqrt(n_patch)) * scale_factor

    x = jax.random.normal(k_x, (B, n_patch, hidden), jnp.float32)

    # Conv2d(hidden, out_channels, 3, padding=1) weight (Cout, Cin, kh, kw),
    # repacked tap-major ((kh, kw, cin), cout) to match the in-kernel tap slices.
    wconv = jax.random.normal(
        k_w, (out_channels, hidden, kernel_size, kernel_size), jnp.float32) * 0.1
    wmat = jnp.transpose(wconv, (2, 3, 1, 0)).reshape(
        kernel_size * kernel_size * hidden, out_channels)
    bias = jax.random.normal(k_b, (1, out_channels), jnp.float32) * 0.05
    gamma = 1.0 + 0.1 * jax.random.normal(k_g, (1, out_channels), jnp.float32)
    beta = 0.1 * jax.random.normal(k_be, (1, out_channels), jnp.float32)

    out = reconstruct(x, wmat, bias, gamma, beta,
                      kernel_size=kernel_size, scale_factor=scale_factor)
    jax.block_until_ready(out)
    assert out.shape == (B, out_channels, H, W), out.shape
    print("KERNEL_OK")
</pallas_src>

<mosaic_0001>
module attributes {stable_mosaic.version = 11 : i64} {
  func.func @_reconstruct_kernel(%arg0: memref<688x32xf32, #tpu.memory_space<vmem>>, %arg1: memref<288x16xf32, #tpu.memory_space<vmem>>, %arg2: memref<1x16xf32, #tpu.memory_space<vmem>>, %arg3: memref<1x16xf32, #tpu.memory_space<vmem>>, %arg4: memref<1x16xf32, #tpu.memory_space<vmem>>, %arg5: memref<648x1xf32, #tpu.memory_space<vmem>>, %arg6: memref<648x16xf32, #tpu.memory_space<vmem>>) attributes {dimension_semantics = [], scalar_prefetch = 0 : i64, scratch_operands = 0 : i64, tpu.core_type = #tpu.core_type<tc>} {
    %cst = arith.constant 0.000000e+00 : f32
    %0 = vector.broadcast %cst : f32 to vector<648x16xf32>
    %c0 = arith.constant 0 : index
    %c0_0 = arith.constant 0 : index
    %1 = vector.load %arg0[%c0, %c0_0] : memref<688x32xf32, #tpu.memory_space<vmem>>, vector<648x32xf32>
    %c0_1 = arith.constant 0 : index
    %c0_2 = arith.constant 0 : index
    %2 = vector.load %arg1[%c0_1, %c0_2] : memref<288x16xf32, #tpu.memory_space<vmem>>, vector<32x16xf32>
    %cst_3 = arith.constant dense<0.000000e+00> : vector<648x16xf32>
    %3 = tpu.matmul %1, %2, %cst_3 {dimension_numbers = #tpu.dot_dimension_numbers<[1], [0], [0], [1], [0, 0, 1, 1], [], []>} : vector<648x32xf32>, vector<32x16xf32>, vector<648x16xf32> -> vector<648x16xf32>
    %4 = arith.addf %0, %3 : vector<648x16xf32>
    %c1 = arith.constant 1 : index
    %c0_4 = arith.constant 0 : index
    %5 = vector.load %arg0[%c1, %c0_4] : memref<688x32xf32, #tpu.memory_space<vmem>>, vector<648x32xf32>
    %c32 = arith.constant 32 : index
    %c0_5 = arith.constant 0 : index
    %6 = vector.load %arg1[%c32, %c0_5] : memref<288x16xf32, #tpu.memory_space<vmem>>, vector<32x16xf32>
    %cst_6 = arith.constant dense<0.000000e+00> : vector<648x16xf32>
    %7 = tpu.matmul %5, %6, %cst_6 {dimension_numbers = #tpu.dot_dimension_numbers<[1], [0], [0], [1], [0, 0, 1, 1], [], []>} : vector<648x32xf32>, vector<32x16xf32>, vector<648x16xf32> -> vector<648x16xf32>
    %8 = arith.addf %4, %7 : vector<648x16xf32>
    %c2 = arith.constant 2 : index
    %c0_7 = arith.constant 0 : index
    %9 = vector.load %arg0[%c2, %c0_7] : memref<688x32xf32, #tpu.memory_space<vmem>>, vector<648x32xf32>
    %c64 = arith.constant 64 : index
    %c0_8 = arith.constant 0 : index
    %10 = vector.load %arg1[%c64, %c0_8] : memref<288x16xf32, #tpu.memory_space<vmem>>, vector<32x16xf32>
    %cst_9 = arith.constant dense<0.000000e+00> : vector<648x16xf32>
    %11 = tpu.matmul %9, %10, %cst_9 {dimension_numbers = #tpu.dot_dimension_numbers<[1], [0], [0], [1], [0, 0, 1, 1], [], []>} : vector<648x32xf32>, vector<32x16xf32>, vector<648x16xf32> -> vector<648x16xf32>
    %12 = arith.addf %8, %11 : vector<648x16xf32>
    %c18 = arith.constant 18 : index
    %c0_10 = arith.constant 0 : index
    %13 = vector.load %arg0[%c18, %c0_10] : memref<688x32xf32, #tpu.memory_space<vmem>>, vector<648x32xf32>
    %c96 = arith.constant 96 : index
    %c0_11 = arith.constant 0 : index
    %14 = vector.load %arg1[%c96, %c0_11] : memref<288x16xf32, #tpu.memory_space<vmem>>, vector<32x16xf32>
    %cst_12 = arith.constant dense<0.000000e+00> : vector<648x16xf32>
    %15 = tpu.matmul %13, %14, %cst_12 {dimension_numbers = #tpu.dot_dimension_numbers<[1], [0], [0], [1], [0, 0, 1, 1], [], []>} : vector<648x32xf32>, vector<32x16xf32>, vector<648x16xf32> -> vector<648x16xf32>
    %16 = arith.addf %12, %15 : vector<648x16xf32>
    %c19 = arith.constant 19 : index
    %c0_13 = arith.constant 0 : index
    %17 = vector.load %arg0[%c19, %c0_13] : memref<688x32xf32, #tpu.memory_space<vmem>>, vector<648x32xf32>
    %c128 = arith.constant 128 : index
    %c0_14 = arith.constant 0 : index
    %18 = vector.load %arg1[%c128, %c0_14] : memref<288x16xf32, #tpu.memory_space<vmem>>, vector<32x16xf32>
    %cst_15 = arith.constant dense<0.000000e+00> : vector<648x16xf32>
    %19 = tpu.matmul %17, %18, %cst_15 {dimension_numbers = #tpu.dot_dimension_numbers<[1], [0], [0], [1], [0, 0, 1, 1], [], []>} : vector<648x32xf32>, vector<32x16xf32>, vector<648x16xf32> -> vector<648x16xf32>
    %20 = arith.addf %16, %19 : vector<648x16xf32>
    %c20 = arith.constant 20 : index
    %c0_16 = arith.constant 0 : index
    %21 = vector.load %arg0[%c20, %c0_16] : memref<688x32xf32, #tpu.memory_space<vmem>>, vector<648x32xf32>
    %c160 = arith.constant 160 : index
    %c0_17 = arith.constant 0 : index
    %22 = vector.load %arg1[%c160, %c0_17] : memref<288x16xf32, #tpu.memory_space<vmem>>, vector<32x16xf32>
    %cst_18 = arith.constant dense<0.000000e+00> : vector<648x16xf32>
    %23 = tpu.matmul %21, %22, %cst_18 {dimension_numbers = #tpu.dot_dimension_numbers<[1], [0], [0], [1], [0, 0, 1, 1], [], []>} : vector<648x32xf32>, vector<32x16xf32>, vector<648x16xf32> -> vector<648x16xf32>
    %24 = arith.addf %20, %23 : vector<648x16xf32>
    %c36 = arith.constant 36 : index
    %c0_19 = arith.constant 0 : index
    %25 = vector.load %arg0[%c36, %c0_19] : memref<688x32xf32, #tpu.memory_space<vmem>>, vector<648x32xf32>
    %c192 = arith.constant 192 : index
    %c0_20 = arith.constant 0 : index
    %26 = vector.load %arg1[%c192, %c0_20] : memref<288x16xf32, #tpu.memory_space<vmem>>, vector<32x16xf32>
    %cst_21 = arith.constant dense<0.000000e+00> : vector<648x16xf32>
    %27 = tpu.matmul %25, %26, %cst_21 {dimension_numbers = #tpu.dot_dimension_numbers<[1], [0], [0], [1], [0, 0, 1, 1], [], []>} : vector<648x32xf32>, vector<32x16xf32>, vector<648x16xf32> -> vector<648x16xf32>
    %28 = arith.addf %24, %27 : vector<648x16xf32>
    %c37 = arith.constant 37 : index
    %c0_22 = arith.constant 0 : index
    %29 = vector.load %arg0[%c37, %c0_22] : memref<688x32xf32, #tpu.memory_space<vmem>>, vector<648x32xf32>
    %c224 = arith.constant 224 : index
    %c0_23 = arith.constant 0 : index
    %30 = vector.load %arg1[%c224, %c0_23] : memref<288x16xf32, #tpu.memory_space<vmem>>, vector<32x16xf32>
    %cst_24 = arith.constant dense<0.000000e+00> : vector<648x16xf32>
    %31 = tpu.matmul %29, %30, %cst_24 {dimension_numbers = #tpu.dot_dimension_numbers<[1], [0], [0], [1], [0, 0, 1, 1], [], []>} : vector<648x32xf32>, vector<32x16xf32>, vector<648x16xf32> -> vector<648x16xf32>
    %32 = arith.addf %28, %31 : vector<648x16xf32>
    %c38 = arith.constant 38 : index
    %c0_25 = arith.constant 0 : index
    %33 = vector.load %arg0[%c38, %c0_25] : memref<688x32xf32, #tpu.memory_space<vmem>>, vector<648x32xf32>
    %c256 = arith.constant 256 : index
    %c0_26 = arith.constant 0 : index
    %34 = vector.load %arg1[%c256, %c0_26] : memref<288x16xf32, #tpu.memory_space<vmem>>, vector<32x16xf32>
    %cst_27 = arith.constant dense<0.000000e+00> : vector<648x16xf32>
    %35 = tpu.matmul %33, %34, %cst_27 {dimension_numbers = #tpu.dot_dimension_numbers<[1], [0], [0], [1], [0, 0, 1, 1], [], []>} : vector<648x32xf32>, vector<32x16xf32>, vector<648x16xf32> -> vector<648x16xf32>
    %36 = arith.addf %32, %35 : vector<648x16xf32>
    %c0_28 = arith.constant 0 : index
    %c0_29 = arith.constant 0 : index
    %37 = vector.load %arg2[%c0_28, %c0_29] : memref<1x16xf32, #tpu.memory_space<vmem>>, vector<1x16xf32>
    %38 = vector.broadcast %37 : vector<1x16xf32> to vector<648x16xf32>
    %39 = arith.addf %36, %38 : vector<648x16xf32>
    %c0_30 = arith.constant 0 : index
    %c0_31 = arith.constant 0 : index
    %40 = vector.load %arg5[%c0_30, %c0_31] : memref<648x1xf32, #tpu.memory_space<vmem>>, vector<648x1xf32>
    %41 = vector.broadcast %40 : vector<648x1xf32> to vector<648x16xf32>
    %42 = arith.mulf %39, %41 : vector<648x16xf32>
    %cst_32 = arith.constant dense<0.000000e+00> : vector<16xf32>
    %43 = vector.multi_reduction <add>, %42, %cst_32 [0] : vector<648x16xf32> to vector<16xf32>
    %44 = vector.shape_cast %43 : vector<16xf32> to vector<1x16xf32>
    %cst_33 = arith.constant 0.001953125 : f32
    %45 = vector.broadcast %cst_33 : f32 to vector<1x16xf32>
    %46 = arith.mulf %44, %45 : vector<1x16xf32>
    %47 = arith.mulf %42, %39 : vector<648x16xf32>
    %cst_34 = arith.constant dense<0.000000e+00> : vector<16xf32>
    %48 = vector.multi_reduction <add>, %47, %cst_34 [0] : vector<648x16xf32> to vector<16xf32>
    %49 = vector.shape_cast %48 : vector<16xf32> to vector<1x16xf32>
    %cst_35 = arith.constant 0.001953125 : f32
    %50 = vector.broadcast %cst_35 : f32 to vector<1x16xf32>
    %51 = arith.mulf %49, %50 : vector<1x16xf32>
    %52 = arith.mulf %46, %46 : vector<1x16xf32>
    %53 = arith.subf %51, %52 : vector<1x16xf32>
    %cst_36 = arith.constant 0.000000e+00 : f32
    %54 = vector.broadcast %cst_36 : f32 to vector<1x16xf32>
    %55 = arith.maximumf %53, %54 : vector<1x16xf32>
    %c0_37 = arith.constant 0 : index
    %c0_38 = arith.constant 0 : index
    %56 = vector.load %arg3[%c0_37, %c0_38] : memref<1x16xf32, #tpu.memory_space<vmem>>, vector<1x16xf32>
    %cst_39 = arith.constant 9.99999974E-6 : f32
    %57 = vector.broadcast %cst_39 : f32 to vector<1x16xf32>
    %58 = arith.addf %55, %57 : vector<1x16xf32>
    %59 = math.rsqrt %58 : vector<1x16xf32>
    %60 = arith.mulf %56, %59 : vector<1x16xf32>
    %c0_40 = arith.constant 0 : index
    %c0_41 = arith.constant 0 : index
    %61 = vector.load %arg4[%c0_40, %c0_41] : memref<1x16xf32, #tpu.memory_space<vmem>>, vector<1x16xf32>
    %62 = arith.mulf %46, %60 : vector<1x16xf32>
    %63 = arith.subf %61, %62 : vector<1x16xf32>
    %64 = vector.broadcast %60 : vector<1x16xf32> to vector<648x16xf32>
    %65 = arith.mulf %39, %64 : vector<648x16xf32>
    %66 = vector.broadcast %63 : vector<1x16xf32> to vector<648x16xf32>
    %67 = arith.addf %65, %66 : vector<648x16xf32>
    %cst_42 = arith.constant 0.000000e+00 : f32
    %68 = vector.broadcast %cst_42 : f32 to vector<648x16xf32>
    %69 = arith.maximumf %67, %68 : vector<648x16xf32>
    %c0_43 = arith.constant 0 : index
    %c0_44 = arith.constant 0 : index
    %70 = vector.load %arg6[%c0_43, %c0_44] : memref<648x16xf32, #tpu.memory_space<vmem>>, vector<648x16xf32>
    tpu.vector_store %arg6[%c0_43, %c0_44], %69 {strides = array<i32>} : memref<648x16xf32, #tpu.memory_space<vmem>>, vector<648x16xf32>,
    return
  }
}

</mosaic_0001>

<llo_original>
// kernel: _reconstruct_impl.1
$region0: #{_reconstruct_impl.1}
  #allocation0 [shape = 'u32[]', space=smem, size = 0x4, offset = 0x4, fixed_abs, tag = 'smem constant byte address 0x4 - core index']
  #allocation1 [shape = 'u32[72,128]{1,0:T(1,128)}', space=vmem, size = 0x9000, scoped, tag = 'internal scratch']
  %s0 = inlined_call_operand.vmem [shape: f32[688,32], index: 0, kind: input, shape index: {}]
  %s1 = inlined_call_operand.vmem [shape: f32[288,16], index: 1, kind: input, shape index: {}]
  %s2 = inlined_call_operand.vmem [shape: f32[1,16], index: 2, kind: input, shape index: {}]
  %s3 = inlined_call_operand.vmem [shape: f32[1,16], index: 3, kind: input, shape index: {}]
  %s4 = inlined_call_operand.vmem [shape: f32[1,16], index: 4, kind: input, shape index: {}]
  %s5 = inlined_call_operand.vmem [shape: f32[648,1], index: 5, kind: input, shape index: {}]
  %s6 = inlined_call_operand.vmem [shape: f32[648,16], index: 6, kind: output, shape index: {}]
  %s7 = sld [smem:[#allocation0]]
  $region34: #{_reconstruct_impl.1} parent=0
    _
  %s9 = ssub.s32 1, %s7
  %s10 = scalar_select 0, %s9, %s7
  // Predicated region
  $region2: #{_reconstruct_impl.1} parent=0 // pred_check
    _
  $region3: #{_reconstruct_impl.1} parent=0 // pred_check_branch
    %12 = sbr.rel (0) target = $region5
  $region4: #{_reconstruct_impl.1} parent=0 // pred_region
    _
  $region5: #{_reconstruct_impl.1} parent=0 // pred_fallthru
    _
  // Predicated region
  $region6: #{_reconstruct_impl.1} parent=0 // pred_check
    _
  $region7: #{_reconstruct_impl.1} parent=0 // pred_check_branch
    %14 = sbr.rel (0) target = $region9
  $region8: #{_reconstruct_impl.1} parent=0 // pred_region
    _
  $region9: #{_reconstruct_impl.1} parent=0 // pred_fallthru
    _
  // Predicated region
  $region10: #{_reconstruct_impl.1} parent=0 // pred_check
    _
  $region11: #{_reconstruct_impl.1} parent=0 // pred_check_branch
    %16 = sbr.rel (0) target = $region13
  $region12: #{_reconstruct_impl.1} parent=0 // pred_region
    _
  $region13: #{_reconstruct_impl.1} parent=0 // pred_fallthru
    _
  // Predicated region
  $region14: #{_reconstruct_impl.1} parent=0 // pred_check
    _
  $region15: #{_reconstruct_impl.1} parent=0 // pred_check_branch
    %18 = sbr.rel (0) target = $region17
  $region16: #{_reconstruct_impl.1} parent=0 // pred_region
    _
  $region17: #{_reconstruct_impl.1} parent=0 // pred_fallthru
    _
  // Predicated region
  $region18: #{_reconstruct_impl.1} parent=0 // pred_check
    _
  $region19: #{_reconstruct_impl.1} parent=0 // pred_check_branch
    %20 = sbr.rel (0) target = $region21
  $region20: #{_reconstruct_impl.1} parent=0 // pred_region
    _
  $region21: #{_reconstruct_impl.1} parent=0 // pred_fallthru
    _
  // Predicated region
  $region22: #{_reconstruct_impl.1} parent=0 // pred_check
    _
  $region23: #{_reconstruct_impl.1} parent=0 // pred_check_branch
    %22 = sbr.rel (0) target = $region25
  $region24: #{_reconstruct_impl.1} parent=0 // pred_region
    _
  $region25: #{_reconstruct_impl.1} parent=0 // pred_fallthru
    _
  %v23 = vld [vmem:[%s0] sm:$0xff]
  %v24 = vld [vmem:[%s0 + $0x8] sm:$0xff]
  %v25 = vld [vmem:[%s0 + $0x10] sm:$0xff]
  %v26 = vld [vmem:[%s0 + $0x18] sm:$0xff]
  %v27 = vld [vmem:[%s0 + $0x20] sm:$0xff]
  %v28 = vld [vmem:[%s0 + $0x28] sm:$0xff]
  %v29 = vld [vmem:[%s0 + $0x30] sm:$0xff]
  %v30 = vld [vmem:[%s0 + $0x38] sm:$0xff]
  %v31 = vld [vmem:[%s0 + $0x40] sm:$0xff]
  %v32 = vld [vmem:[%s0 + $0x48] sm:$0xff]
  %v33 = vld [vmem:[%s0 + $0x50] sm:$0xff]
  %v34 = vld [vmem:[%s0 + $0x58] sm:$0xff]
  %v35 = vld [vmem:[%s0 + $0x60] sm:$0xff]
  %v36 = vld [vmem:[%s0 + $0x68] sm:$0xff]
  %v37 = vld [vmem:[%s0 + $0x70] sm:$0xff]
  %v38 = vld [vmem:[%s0 + $0x78] sm:$0xff]
  %v39 = vld [vmem:[%s0 + $0x80] sm:$0xff]
  %v40 = vld [vmem:[%s0 + $0x88] sm:$0xff]
  %v41 = vld [vmem:[%s0 + $0x90] sm:$0xff]
  %v42 = vld [vmem:[%s0 + $0x98] sm:$0xff]
  %v43 = vld [vmem:[%s0 + $0xa0] sm:$0xff]
  %v44 = vld [vmem:[%s0 + $0xa8] sm:$0xff]
  %v45 = vld [vmem:[%s0 + $0xb0] sm:$0xff]
  %v46 = vld [vmem:[%s0 + $0xb8] sm:$0xff]
  %v47 = vld [vmem:[%s0 + $0xc0] sm:$0xff]
  %v48 = vld [vmem:[%s0 + $0xc8] sm:$0xff]
  %v49 = vld [vmem:[%s0 + $0xd0] sm:$0xff]
  %v50 = vld [vmem:[%s0 + $0xd8] sm:$0xff]
  %v51 = vld [vmem:[%s0 + $0xe0] sm:$0xff]
  %v52 = vld [vmem:[%s0 + $0xe8] sm:$0xff]
  %v53 = vld [vmem:[%s0 + $0xf0] sm:$0xff]
  %v54 = vld [vmem:[%s0 + $0xf8] sm:$0xff]
  %v55 = vld [vmem:[%s0 + $0x100] sm:$0xff]
  %v56 = vld [vmem:[%s0 + $0x108] sm:$0xff]
  %v57 = vld [vmem:[%s0 + $0x110] sm:$0xff]
  %v58 = vld [vmem:[%s0 + $0x118] sm:$0xff]
  %v59 = vld [vmem:[%s0 + $0x120] sm:$0xff]
  %v60 = vld [vmem:[%s0 + $0x128] sm:$0xff]
  %v61 = vld [vmem:[%s0 + $0x130] sm:$0xff]
  %v62 = vld [vmem:[%s0 + $0x138] sm:$0xff]
  %v63 = vld [vmem:[%s0 + $0x140] sm:$0xff]
  %v64 = vld [vmem:[%s0 + $0x148] sm:$0xff]
  %v65 = vld [vmem:[%s0 + $0x150] sm:$0xff]
  %v66 = vld [vmem:[%s0 + $0x158] sm:$0xff]
  %v67 = vld [vmem:[%s0 + $0x160] sm:$0xff]
  %v68 = vld [vmem:[%s0 + $0x168] sm:$0xff]
  %v69 = vld [vmem:[%s0 + $0x170] sm:$0xff]
  %v70 = vld [vmem:[%s0 + $0x178] sm:$0xff]
  %v71 = vld [vmem:[%s0 + $0x180] sm:$0xff]
  %v72 = vld [vmem:[%s0 + $0x188] sm:$0xff]
  %v73 = vld [vmem:[%s0 + $0x190] sm:$0xff]
  %v74 = vld [vmem:[%s0 + $0x198] sm:$0xff]
  %v75 = vld [vmem:[%s0 + $0x1a0] sm:$0xff]
  %v76 = vld [vmem:[%s0 + $0x1a8] sm:$0xff]
  %v77 = vld [vmem:[%s0 + $0x1b0] sm:$0xff]
  %v78 = vld [vmem:[%s0 + $0x1b8] sm:$0xff]
  %v79 = vld [vmem:[%s0 + $0x1c0] sm:$0xff]
  %v80 = vld [vmem:[%s0 + $0x1c8] sm:$0xff]
  %v81 = vld [vmem:[%s0 + $0x1d0] sm:$0xff]
  %v82 = vld [vmem:[%s0 + $0x1d8] sm:$0xff]
  %v83 = vld [vmem:[%s0 + $0x1e0] sm:$0xff]
  %v84 = vld [vmem:[%s0 + $0x1e8] sm:$0xff]
  %v85 = vld [vmem:[%s0 + $0x1f0] sm:$0xff]
  %v86 = vld [vmem:[%s0 + $0x1f8] sm:$0xff]
  %v87 = vld [vmem:[%s0 + $0x200] sm:$0xff]
  %v88 = vld [vmem:[%s0 + $0x208] sm:$0xff]
  %v89 = vld [vmem:[%s0 + $0x210] sm:$0xff]
  %v90 = vld [vmem:[%s0 + $0x218] sm:$0xff]
  %v91 = vld [vmem:[%s0 + $0x220] sm:$0xff]
  %v92 = vld [vmem:[%s0 + $0x228] sm:$0xff]
  %v93 = vld [vmem:[%s0 + $0x230] sm:$0xff]
  %v94 = vld [vmem:[%s0 + $0x238] sm:$0xff]
  %v95 = vld [vmem:[%s0 + $0x240] sm:$0xff]
  %v96 = vld [vmem:[%s0 + $0x248] sm:$0xff]
  %v97 = vld [vmem:[%s0 + $0x250] sm:$0xff]
  %v98 = vld [vmem:[%s0 + $0x258] sm:$0xff]
  %v99 = vld [vmem:[%s0 + $0x260] sm:$0xff]
  %v100 = vld [vmem:[%s0 + $0x268] sm:$0xff]
  %v101 = vld [vmem:[%s0 + $0x270] sm:$0xff]
  %v102 = vld [vmem:[%s0 + $0x278] sm:$0xff]
  %v103 = vld [vmem:[%s0 + $0x280] sm:$0xff]
  %v104 = vld [vmem:[%s1] sm:$0xff]
  %v105 = vld [vmem:[%s1 + $0x8] sm:$0xff]
  %v106 = vld [vmem:[%s1 + $0x10] sm:$0xff]
  %v107 = vld [vmem:[%s1 + $0x18] sm:$0xff]
  %v108 = vld [vmem:[%s0 + $0x1] sm:$0xff]
  %v109 = vld [vmem:[%s0 + $0x9] sm:$0xff]
  %v110 = vld [vmem:[%s0 + $0x11] sm:$0xff]
  %v111 = vld [vmem:[%s0 + $0x19] sm:$0xff]
  %v112 = vld [vmem:[%s0 + $0x21] sm:$0xff]
  %v113 = vld [vmem:[%s0 + $0x29] sm:$0xff]
  %v114 = vld [vmem:[%s0 + $0x31] sm:$0xff]
  %v115 = vld [vmem:[%s0 + $0x39] sm:$0xff]
  %v116 = vld [vmem:[%s0 + $0x41] sm:$0xff]
  %v117 = vld [vmem:[%s0 + $0x49] sm:$0xff]
  %v118 = vld [vmem:[%s0 + $0x51] sm:$0xff]
  %v119 = vld [vmem:[%s0 + $0x59] sm:$0xff]
  %v120 = vld [vmem:[%s0 + $0x61] sm:$0xff]
  %v121 = vld [vmem:[%s0 + $0x69] sm:$0xff]
  %v122 = vld [vmem:[%s0 + $0x71] sm:$0xff]
  %v123 = vld [vmem:[%s0 + $0x79] sm:$0xff]
  %v124 = vld [vmem:[%s0 + $0x81] sm:$0xff]
  %v125 = vld [vmem:[%s0 + $0x89] sm:$0xff]
  %v126 = vld [vmem:[%s0 + $0x91] sm:$0xff]
  %v127 = vld [vmem:[%s0 + $0x99] sm:$0xff]
  %v128 = vld [vmem:[%s0 + $0xa1] sm:$0xff]
  %v129 = vld [vmem:[%s0 + $0xa9] sm:$0xff]
  %v130 = vld [vmem:[%s0 + $0xb1] sm:$0xff]
  %v131 = vld [vmem:[%s0 + $0xb9] sm:$0xff]
  %v132 = vld [vmem:[%s0 + $0xc1] sm:$0xff]
  %v133 = vld [vmem:[%s0 + $0xc9] sm:$0xff]
  %v134 = vld [vmem:[%s0 + $0xd1] sm:$0xff]
  %v135 = vld [vmem:[%s0 + $0xd9] sm:$0xff]
  %v136 = vld [vmem:[%s0 + $0xe1] sm:$0xff]
  %v137 = vld [vmem:[%s0 + $0xe9] sm:$0xff]
  %v138 = vld [vmem:[%s0 + $0xf1] sm:$0xff]
  %v139 = vld [vmem:[%s0 + $0xf9] sm:$0xff]
  %v140 = vld [vmem:[%s0 + $0x101] sm:$0xff]
  %v141 = vld [vmem:[%s0 + $0x109] sm:$0xff]
  %v142 = vld [vmem:[%s0 + $0x111] sm:$0xff]
  %v143 = vld [vmem:[%s0 + $0x119] sm:$0xff]
  %v144 = vld [vmem:[%s0 + $0x121] sm:$0xff]
  %v145 = vld [vmem:[%s0 + $0x129] sm:$0xff]
  %v146 = vld [vmem:[%s0 + $0x131] sm:$0xff]
  %v147 = vld [vmem:[%s0 + $0x139] sm:$0xff]
  %v148 = vld [vmem:[%s0 + $0x141] sm:$0xff]
  %v149 = vld [vmem:[%s0 + $0x149] sm:$0xff]
  %v150 = vld [vmem:[%s0 + $0x151] sm:$0xff]
  %v151 = vld [vmem:[%s0 + $0x159] sm:$0xff]
  %v152 = vld [vmem:[%s0 + $0x161] sm:$0xff]
  %v153 = vld [vmem:[%s0 + $0x169] sm:$0xff]
  %v154 = vld [vmem:[%s0 + $0x171] sm:$0xff]
  %v155 = vld [vmem:[%s0 + $0x179] sm:$0xff]
  %v156 = vld [vmem:[%s0 + $0x181] sm:$0xff]
  %v157 = vld [vmem:[%s0 + $0x189] sm:$0xff]
  %v158 = vld [vmem:[%s0 + $0x191] sm:$0xff]
  %v159 = vld [vmem:[%s0 + $0x199] sm:$0xff]
  %v160 = vld [vmem:[%s0 + $0x1a1] sm:$0xff]
  %v161 = vld [vmem:[%s0 + $0x1a9] sm:$0xff]
  %v162 = vld [vmem:[%s0 + $0x1b1] sm:$0xff]
  %v163 = vld [vmem:[%s0 + $0x1b9] sm:$0xff]
  %v164 = vld [vmem:[%s0 + $0x1c1] sm:$0xff]
  %v165 = vld [vmem:[%s0 + $0x1c9] sm:$0xff]
  %v166 = vld [vmem:[%s0 + $0x1d1] sm:$0xff]
  %v167 = vld [vmem:[%s0 + $0x1d9] sm:$0xff]
  %v168 = vld [vmem:[%s0 + $0x1e1] sm:$0xff]
  %v169 = vld [vmem:[%s0 + $0x1e9] sm:$0xff]
  %v170 = vld [vmem:[%s0 + $0x1f1] sm:$0xff]
  %v171 = vld [vmem:[%s0 + $0x1f9] sm:$0xff]
  %v172 = vld [vmem:[%s0 + $0x201] sm:$0xff]
  %v173 = vld [vmem:[%s0 + $0x209] sm:$0xff]
  %v174 = vld [vmem:[%s0 + $0x211] sm:$0xff]
  %v175 = vld [vmem:[%s0 + $0x219] sm:$0xff]
  %v176 = vld [vmem:[%s0 + $0x221] sm:$0xff]
  %v177 = vld [vmem:[%s0 + $0x229] sm:$0xff]
  %v178 = vld [vmem:[%s0 + $0x231] sm:$0xff]
  %v179 = vld [vmem:[%s0 + $0x239] sm:$0xff]
  %v180 = vld [vmem:[%s0 + $0x241] sm:$0xff]
  %v181 = vld [vmem:[%s0 + $0x249] sm:$0xff]
  %v182 = vld [vmem:[%s0 + $0x251] sm:$0xff]
  %v183 = vld [vmem:[%s0 + $0x259] sm:$0xff]
  %v184 = vld [vmem:[%s0 + $0x261] sm:$0xff]
  %v185 = vld [vmem:[%s0 + $0x269] sm:$0xff]
  %v186 = vld [vmem:[%s0 + $0x271] sm:$0xff]
  %v187 = vld [vmem:[%s0 + $0x279] sm:$0xff]
  %v188 = vld [vmem:[%s0 + $0x281] sm:$0xff]
  %v189 = vld [vmem:[%s1 + $0x20] sm:$0xff]
  %v190 = vld [vmem:[%s1 + $0x28] sm:$0xff]
  %v191 = vld [vmem:[%s1 + $0x30] sm:$0xff]
  %v192 = vld [vmem:[%s1 + $0x38] sm:$0xff]
  %vm193 = vcmask 261120
  %v195 = vsel %vm193, %v108, 0
  %v198 = vsel %vm193, %v109, 0
  %v201 = vsel %vm193, %v110, 0
  %v204 = vsel %vm193, %v111, 0
  %v207 = vsel %vm193, %v112, 0
  %v210 = vsel %vm193, %v113, 0
  %v213 = vsel %vm193, %v114, 0
  %v216 = vsel %vm193, %v115, 0
  %v219 = vsel %vm193, %v116, 0
  %v222 = vsel %vm193, %v117, 0
  %v225 = vsel %vm193, %v118, 0
  %v228 = vsel %vm193, %v119, 0
  %v231 = vsel %vm193, %v120, 0
  %v234 = vsel %vm193, %v121, 0
  %v237 = vsel %vm193, %v122, 0
  %v240 = vsel %vm193, %v123, 0
  %v243 = vsel %vm193, %v124, 0
  %v246 = vsel %vm193, %v125, 0
  %v249 = vsel %vm193, %v126, 0
  %v252 = vsel %vm193, %v127, 0
  %v255 = vsel %vm193, %v128, 0
  %v258 = vsel %vm193, %v129, 0
  %v261 = vsel %vm193, %v130, 0
  %v264 = vsel %vm193, %v131, 0
  %v267 = vsel %vm193, %v132, 0
  %v270 = vsel %vm193, %v133, 0
  %v273 = vsel %vm193, %v134, 0
  %v276 = vsel %vm193, %v135, 0
  %v279 = vsel %vm193, %v136, 0
  %v282 = vsel %vm193, %v137, 0
  %v285 = vsel %vm193, %v138, 0
  %v288 = vsel %vm193, %v139, 0
  %v291 = vsel %vm193, %v140, 0
  %v294 = vsel %vm193, %v141, 0
  %v297 = vsel %vm193, %v142, 0
  %v300 = vsel %vm193, %v143, 0
  %v303 = vsel %vm193, %v144, 0
  %v306 = vsel %vm193, %v145, 0
  %v309 = vsel %vm193, %v146, 0
  %v312 = vsel %vm193, %v147, 0
  %v315 = vsel %vm193, %v148, 0
  %v318 = vsel %vm193, %v149, 0
  %v321 = vsel %vm193, %v150, 0
  %v324 = vsel %vm193, %v151, 0
  %v327 = vsel %vm193, %v152, 0
  %v330 = vsel %vm193, %v153, 0
  %v333 = vsel %vm193, %v154, 0
  %v336 = vsel %vm193, %v155, 0
  %v339 = vsel %vm193, %v156, 0
  %v342 = vsel %vm193, %v157, 0
  %v345 = vsel %vm193, %v158, 0
  %v348 = vsel %vm193, %v159, 0
  %v351 = vsel %vm193, %v160, 0
  %v354 = vsel %vm193, %v161, 0
  %v357 = vsel %vm193, %v162, 0
  %v360 = vsel %vm193, %v163, 0
  %v363 = vsel %vm193, %v164, 0
  %v366 = vsel %vm193, %v165, 0
  %v369 = vsel %vm193, %v166, 0
  %v372 = vsel %vm193, %v167, 0
  %v375 = vsel %vm193, %v168, 0
  %v378 = vsel %vm193, %v169, 0
  %v381 = vsel %vm193, %v170, 0
  %v384 = vsel %vm193, %v171, 0
  %v387 = vsel %vm193, %v172, 0
  %v390 = vsel %vm193, %v173, 0
  %v393 = vsel %vm193, %v174, 0
  %v396 = vsel %vm193, %v175, 0
  %v399 = vsel %vm193, %v176, 0
  %v402 = vsel %vm193, %v177, 0
  %v405 = vsel %vm193, %v178, 0
  %v408 = vsel %vm193, %v179, 0
  %v411 = vsel %vm193, %v180, 0
  %v414 = vsel %vm193, %v181, 0
  %v417 = vsel %vm193, %v182, 0
  %v420 = vsel %vm193, %v183, 0
  %v423 = vsel %vm193, %v184, 0
  %v426 = vsel %vm193, %v185, 0
  %v429 = vsel %vm193, %v186, 0
  %v432 = vsel %vm193, %v187, 0
  %v435 = vsel %vm193, %v188, 0
  %437 = vmatpush.msra.mxu0 0.0
  %438 = vmatpush.msra.mxu0 0.0
  %439 = vmatpush.msra.mxu0 0.0
  %440 = vmatpush.msra.mxu0 0.0
  %441 = vmatpush.msra.mxu0 0.0
  %442 = vmatpush.msra.mxu0 0.0
  %443 = vmatpush.msra.mxu0 0.0
  %444 = vmatpush.msra.mxu0 0.0
  %445 = vmatpush.msra.mxu0 0.0
  %446 = vmatpush.msra.mxu0 0.0
  %447 = vmatpush.msra.mxu0 0.0
  %448 = vmatpush.msra.mxu0 0.0
  %449 = vmatpush.msra.mxu0 %v192
  %450 = vmatpush.msra.mxu0 %v191
  %451 = vmatpush.msra.mxu0 %v190
  %452 = vmatpush.msra.mxu0 %v189
  %453 = vmatmul.f32.gmra.mxu0 %v195
  %v454 = vpop.f32.mrf.mxu0
  %v455 = vadd.f32 0.0, %v454
  %456 = vmatmul.f32.gmra.mxu0 %v198
  %v457 = vpop.f32.mrf.mxu0
  %v458 = vadd.f32 0.0, %v457
  %459 = vmatmul.f32.gmra.mxu0 %v201
  %v460 = vpop.f32.mrf.mxu0
  %v461 = vadd.f32 0.0, %v460
  %462 = vmatmul.f32.gmra.mxu0 %v204
  %v463 = vpop.f32.mrf.mxu0
  %v464 = vadd.f32 0.0, %v463
  %465 = vmatmul.f32.gmra.mxu0 %v207
  %v466 = vpop.f32.mrf.mxu0
  %v467 = vadd.f32 0.0, %v466
  %468 = vmatmul.f32.gmra.mxu0 %v210
  %v469 = vpop.f32.mrf.mxu0
  %v470 = vadd.f32 0.0, %v469
  %471 = vmatmul.f32.gmra.mxu0 %v213
  %v472 = vpop.f32.mrf.mxu0
  %v473 = vadd.f32 0.0, %v472
  %474 = vmatmul.f32.gmra.mxu0 %v216
  %v475 = vpop.f32.mrf.mxu0
  %v476 = vadd.f32 0.0, %v475
  %477 = vmatmul.f32.gmra.mxu0 %v219
  %v478 = vpop.f32.mrf.mxu0
  %v479 = vadd.f32 0.0, %v478
  %480 = vmatmul.f32.gmra.mxu0 %v222
  %v481 = vpop.f32.mrf.mxu0
  %v482 = vadd.f32 0.0, %v481
  %483 = vmatmul.f32.gmra.mxu0 %v225
  %v484 = vpop.f32.mrf.mxu0
  %v485 = vadd.f32 0.0, %v484
  %486 = vmatmul.f32.gmra.mxu0 %v228
  %v487 = vpop.f32.mrf.mxu0
  %v488 = vadd.f32 0.0, %v487
  %489 = vmatmul.f32.gmra.mxu0 %v231
  %v490 = vpop.f32.mrf.mxu0
  %v491 = vadd.f32 0.0, %v490
  %492 = vmatmul.f32.gmra.mxu0 %v234
  %v493 = vpop.f32.mrf.mxu0
  %v494 = vadd.f32 0.0, %v493
  %495 = vmatmul.f32.gmra.mxu0 %v237
  %v496 = vpop.f32.mrf.mxu0
  %v497 = vadd.f32 0.0, %v496
  %498 = vmatmul.f32.gmra.mxu0 %v240
  %v499 = vpop.f32.mrf.mxu0
  %v500 = vadd.f32 0.0, %v499
  %501 = vmatmul.f32.gmra.mxu0 %v243
  %v502 = vpop.f32.mrf.mxu0
  %v503 = vadd.f32 0.0, %v502
  %504 = vmatmul.f32.gmra.mxu0 %v246
  %v505 = vpop.f32.mrf.mxu0
  %v506 = vadd.f32 0.0, %v505
  %507 = vmatmul.f32.gmra.mxu0 %v249
  %v508 = vpop.f32.mrf.mxu0
  %v509 = vadd.f32 0.0, %v508
  %510 = vmatmul.f32.gmra.mxu0 %v252
  %v511 = vpop.f32.mrf.mxu0
  %v512 = vadd.f32 0.0, %v511
  %513 = vmatmul.f32.gmra.mxu0 %v255
  %v514 = vpop.f32.mrf.mxu0
  %v515 = vadd.f32 0.0, %v514
  %516 = vmatmul.f32.gmra.mxu0 %v258
  %v517 = vpop.f32.mrf.mxu0
  %v518 = vadd.f32 0.0, %v517
  %519 = vmatmul.f32.gmra.mxu0 %v261
  %v520 = vpop.f32.mrf.mxu0
  %v521 = vadd.f32 0.0, %v520
  %522 = vmatmul.f32.gmra.mxu0 %v264
  %v523 = vpop.f32.mrf.mxu0
  %v524 = vadd.f32 0.0, %v523
  %525 = vmatmul.f32.gmra.mxu0 %v267
  %v526 = vpop.f32.mrf.mxu0
  %v527 = vadd.f32 0.0, %v526
  %528 = vmatmul.f32.gmra.mxu0 %v270
  %v529 = vpop.f32.mrf.mxu0
  %v530 = vadd.f32 0.0, %v529
  %531 = vmatmul.f32.gmra.mxu0 %v273
  %v532 = vpop.f32.mrf.mxu0
  %v533 = vadd.f32 0.0, %v532
  %534 = vmatmul.f32.gmra.mxu0 %v276
  %v535 = vpop.f32.mrf.mxu0
  %v536 = vadd.f32 0.0, %v535
  %537 = vmatmul.f32.gmra.mxu0 %v279
  %v538 = vpop.f32.mrf.mxu0
  %v539 = vadd.f32 0.0, %v538
  %540 = vmatmul.f32.gmra.mxu0 %v282
  %v541 = vpop.f32.mrf.mxu0
  %v542 = vadd.f32 0.0, %v541
  %543 = vmatmul.f32.gmra.mxu0 %v285
  %v544 = vpop.f32.mrf.mxu0
  %v545 = vadd.f32 0.0, %v544
  %546 = vmatmul.f32.gmra.mxu0 %v288
  %v547 = vpop.f32.mrf.mxu0
  %v548 = vadd.f32 0.0, %v547
  %549 = vmatmul.f32.gmra.mxu0 %v291
  %v550 = vpop.f32.mrf.mxu0
  %v551 = vadd.f32 0.0, %v550
  %552 = vmatmul.f32.gmra.mxu0 %v294
  %v553 = vpop.f32.mrf.mxu0
  %v554 = vadd.f32 0.0, %v553
  %555 = vmatmul.f32.gmra.mxu0 %v297
  %v556 = vpop.f32.mrf.mxu0
  %v557 = vadd.f32 0.0, %v556
  %558 = vmatmul.f32.gmra.mxu0 %v300
  %v559 = vpop.f32.mrf.mxu0
  %v560 = vadd.f32 0.0, %v559
  %561 = vmatmul.f32.gmra.mxu0 %v303
  %v562 = vpop.f32.mrf.mxu0
  %v563 = vadd.f32 0.0, %v562
  %564 = vmatmul.f32.gmra.mxu0 %v306
  %v565 = vpop.f32.mrf.mxu0
  %v566 = vadd.f32 0.0, %v565
  %567 = vmatmul.f32.gmra.mxu0 %v309
  %v568 = vpop.f32.mrf.mxu0
  %v569 = vadd.f32 0.0, %v568
  %570 = vmatmul.f32.gmra.mxu0 %v312
  %v571 = vpop.f32.mrf.mxu0
  %v572 = vadd.f32 0.0, %v571
  %573 = vmatmul.f32.gmra.mxu0 %v315
  %v574 = vpop.f32.mrf.mxu0
  %v575 = vadd.f32 0.0, %v574
  %576 = vmatmul.f32.gmra.mxu0 %v318
  %v577 = vpop.f32.mrf.mxu0
  %v578 = vadd.f32 0.0, %v577
  %579 = vmatmul.f32.gmra.mxu0 %v321
  %v580 = vpop.f32.mrf.mxu0
  %v581 = vadd.f32 0.0, %v580
  %582 = vmatmul.f32.gmra.mxu0 %v324
  %v583 = vpop.f32.mrf.mxu0
  %v584 = vadd.f32 0.0, %v583
  %585 = vmatmul.f32.gmra.mxu0 %v327
  %v586 = vpop.f32.mrf.mxu0
  %v587 = vadd.f32 0.0, %v586
  %588 = vmatmul.f32.gmra.mxu0 %v330
  %v589 = vpop.f32.mrf.mxu0
  %v590 = vadd.f32 0.0, %v589
  %591 = vmatmul.f32.gmra.mxu0 %v333
  %v592 = vpop.f32.mrf.mxu0
  %v593 = vadd.f32 0.0, %v592
  %594 = vmatmul.f32.gmra.mxu0 %v336
  %v595 = vpop.f32.mrf.mxu0
  %v596 = vadd.f32 0.0, %v595
  %597 = vmatmul.f32.gmra.mxu0 %v339
  %v598 = vpop.f32.mrf.mxu0
  %v599 = vadd.f32 0.0, %v598
  %600 = vmatmul.f32.gmra.mxu0 %v342
  %v601 = vpop.f32.mrf.mxu0
  %v602 = vadd.f32 0.0, %v601
  %603 = vmatmul.f32.gmra.mxu0 %v345
  %v604 = vpop.f32.mrf.mxu0
  %v605 = vadd.f32 0.0, %v604
  %606 = vmatmul.f32.gmra.mxu0 %v348
  %v607 = vpop.f32.mrf.mxu0
  %v608 = vadd.f32 0.0, %v607
  %609 = vmatmul.f32.gmra.mxu0 %v351
  %v610 = vpop.f32.mrf.mxu0
  %v611 = vadd.f32 0.0, %v610
  %612 = vmatmul.f32.gmra.mxu0 %v354
  %v613 = vpop.f32.mrf.mxu0
  %v614 = vadd.f32 0.0, %v613
  %615 = vmatmul.f32.gmra.mxu0 %v357
  %v616 = vpop.f32.mrf.mxu0
  %v617 = vadd.f32 0.0, %v616
  %618 = vmatmul.f32.gmra.mxu0 %v360
  %v619 = vpop.f32.mrf.mxu0
  %v620 = vadd.f32 0.0, %v619
  %621 = vmatmul.f32.gmra.mxu0 %v363
  %v622 = vpop.f32.mrf.mxu0
  %v623 = vadd.f32 0.0, %v622
  %624 = vmatmul.f32.gmra.mxu0 %v366
  %v625 = vpop.f32.mrf.mxu0
  %v626 = vadd.f32 0.0, %v625
  %627 = vmatmul.f32.gmra.mxu0 %v369
  %v628 = vpop.f32.mrf.mxu0
  %v629 = vadd.f32 0.0, %v628
  %630 = vmatmul.f32.gmra.mxu0 %v372
  %v631 = vpop.f32.mrf.mxu0
  %v632 = vadd.f32 0.0, %v631
  %633 = vmatmul.f32.gmra.mxu0 %v375
  %v634 = vpop.f32.mrf.mxu0
  %v635 = vadd.f32 0.0, %v634
  %636 = vmatmul.f32.gmra.mxu0 %v378
  %v637 = vpop.f32.mrf.mxu0
  %v638 = vadd.f32 0.0, %v637
  %639 = vmatmul.f32.gmra.mxu0 %v381
  %v640 = vpop.f32.mrf.mxu0
  %v641 = vadd.f32 0.0, %v640
  %642 = vmatmul.f32.gmra.mxu0 %v384
  %v643 = vpop.f32.mrf.mxu0
  %v644 = vadd.f32 0.0, %v643
  %645 = vmatmul.f32.gmra.mxu0 %v387
  %v646 = vpop.f32.mrf.mxu0
  %v647 = vadd.f32 0.0, %v646
  %648 = vmatmul.f32.gmra.mxu0 %v390
  %v649 = vpop.f32.mrf.mxu0
  %v650 = vadd.f32 0.0, %v649
  %651 = vmatmul.f32.gmra.mxu0 %v393
  %v652 = vpop.f32.mrf.mxu0
  %v653 = vadd.f32 0.0, %v652
  %654 = vmatmul.f32.gmra.mxu0 %v396
  %v655 = vpop.f32.mrf.mxu0
  %v656 = vadd.f32 0.0, %v655
  %657 = vmatmul.f32.gmra.mxu0 %v399
  %v658 = vpop.f32.mrf.mxu0
  %v659 = vadd.f32 0.0, %v658
  %660 = vmatmul.f32.gmra.mxu0 %v402
  %v661 = vpop.f32.mrf.mxu0
  %v662 = vadd.f32 0.0, %v661
  %663 = vmatmul.f32.gmra.mxu0 %v405
  %v664 = vpop.f32.mrf.mxu0
  %v665 = vadd.f32 0.0, %v664
  %666 = vmatmul.f32.gmra.mxu0 %v408
  %v667 = vpop.f32.mrf.mxu0
  %v668 = vadd.f32 0.0, %v667
  %669 = vmatmul.f32.gmra.mxu0 %v411
  %v670 = vpop.f32.mrf.mxu0
  %v671 = vadd.f32 0.0, %v670
  %672 = vmatmul.f32.gmra.mxu0 %v414
  %v673 = vpop.f32.mrf.mxu0
  %v674 = vadd.f32 0.0, %v673
  %675 = vmatmul.f32.gmra.mxu0 %v417
  %v676 = vpop.f32.mrf.mxu0
  %v677 = vadd.f32 0.0, %v676
  %678 = vmatmul.f32.gmra.mxu0 %v420
  %v679 = vpop.f32.mrf.mxu0
  %v680 = vadd.f32 0.0, %v679
  %681 = vmatmul.f32.gmra.mxu0 %v423
  %v682 = vpop.f32.mrf.mxu0
  %v683 = vadd.f32 0.0, %v682
  %684 = vmatmul.f32.gmra.mxu0 %v426
  %v685 = vpop.f32.mrf.mxu0
  %v686 = vadd.f32 0.0, %v685
  %687 = vmatmul.f32.gmra.mxu0 %v429
  %v688 = vpop.f32.mrf.mxu0
  %v689 = vadd.f32 0.0, %v688
  %690 = vmatmul.f32.gmra.mxu0 %v432
  %v691 = vpop.f32.mrf.mxu0
  %v692 = vadd.f32 0.0, %v691
  %693 = vmatmul.f32.gmra.mxu0 %v435
  %v694 = vpop.f32.mrf.mxu0
  %v695 = vadd.f32 0.0, %v694
  %696 = vdwg.mxu0
  %v698 = vsel %vm193, %v23, 0
  %v701 = vsel %vm193, %v24, 0
  %v704 = vsel %vm193, %v25, 0
  %v707 = vsel %vm193, %v26, 0
  %v710 = vsel %vm193, %v27, 0
  %v713 = vsel %vm193, %v28, 0
  %v716 = vsel %vm193, %v29, 0
  %v719 = vsel %vm193, %v30, 0
  %v722 = vsel %vm193, %v31, 0
  %v725 = vsel %vm193, %v32, 0
  %v728 = vsel %vm193, %v33, 0
  %v731 = vsel %vm193, %v34, 0
  %v734 = vsel %vm193, %v35, 0
  %v737 = vsel %vm193, %v36, 0
  %v740 = vsel %vm193, %v37, 0
  %v743 = vsel %vm193, %v38, 0
  %v746 = vsel %vm193, %v39, 0
  %v749 = vsel %vm193, %v40, 0
  %v752 = vsel %vm193, %v41, 0
  %v755 = vsel %vm193, %v42, 0
  %v758 = vsel %vm193, %v43, 0
  %v761 = vsel %vm193, %v44, 0
  %v764 = vsel %vm193, %v45, 0
  %v767 = vsel %vm193, %v46, 0
  %v770 = vsel %vm193, %v47, 0
  %v773 = vsel %vm193, %v48, 0
  %v776 = vsel %vm193, %v49, 0
  %v779 = vsel %vm193, %v50, 0
  %v782 = vsel %vm193, %v51, 0
  %v785 = vsel %vm193, %v52, 0
  %v788 = vsel %vm193, %v53, 0
  %v791 = vsel %vm193, %v54, 0
  %v794 = vsel %vm193, %v55, 0
  %v797 = vsel %vm193, %v56, 0
  %v800 = vsel %vm193, %v57, 0
  %v803 = vsel %vm193, %v58, 0
  %v806 = vsel %vm193, %v59, 0
  %v809 = vsel %vm193, %v60, 0
  %v812 = vsel %vm193, %v61, 0
  %v815 = vsel %vm193, %v62, 0
  %v818 = vsel %vm193, %v63, 0
  %v821 = vsel %vm193, %v64, 0
  %v824 = vsel %vm193, %v65, 0
  %v827 = vsel %vm193, %v66, 0
  %v830 = vsel %vm193, %v67, 0
  %v833 = vsel %vm193, %v68, 0
  %v836 = vsel %vm193, %v69, 0
  %v839 = vsel %vm193, %v70, 0
  %v842 = vsel %vm193, %v71, 0
  %v845 = vsel %vm193, %v72, 0
  %v848 = vsel %vm193, %v73, 0
  %v851 = vsel %vm193, %v74, 0
  %v854 = vsel %vm193, %v75, 0
  %v857 = vsel %vm193, %v76, 0
  %v860 = vsel %vm193, %v77, 0
  %v863 = vsel %vm193, %v78, 0
  %v866 = vsel %vm193, %v79, 0
  %v869 = vsel %vm193, %v80, 0
  %v872 = vsel %vm193, %v81, 0
  %v875 = vsel %vm193, %v82, 0
  %v878 = vsel %vm193, %v83, 0
  %v881 = vsel %vm193, %v84, 0
  %v884 = vsel %vm193, %v85, 0
  %v887 = vsel %vm193, %v86, 0
  %v890 = vsel %vm193, %v87, 0
  %v893 = vsel %vm193, %v88, 0
  %v896 = vsel %vm193, %v89, 0
  %v899 = vsel %vm193, %v90, 0
  %v902 = vsel %vm193, %v91, 0
  %v905 = vsel %vm193, %v92, 0
  %v908 = vsel %vm193, %v93, 0
  %v911 = vsel %vm193, %v94, 0
  %v914 = vsel %vm193, %v95, 0
  %v917 = vsel %vm193, %v96, 0
  %v920 = vsel %vm193, %v97, 0
  %v923 = vsel %vm193, %v98, 0
  %v926 = vsel %vm193, %v99, 0
  %v929 = vsel %vm193, %v100, 0
  %v932 = vsel %vm193, %v101, 0
  %v935 = vsel %vm193, %v102, 0
  %v938 = vsel %vm193, %v103, 0
  %940 = vmatpush.msra.mxu0 0.0
  %941 = vmatpush.msra.mxu0 0.0
  %942 = vmatpush.msra.mxu0 0.0
  %943 = vmatpush.msra.mxu0 0.0
  %944 = vmatpush.msra.mxu0 0.0
  %945 = vmatpush.msra.mxu0 0.0
  %946 = vmatpush.msra.mxu0 0.0
  %947 = vmatpush.msra.mxu0 0.0
  %948 = vmatpush.msra.mxu0 0.0
  %949 = vmatpush.msra.mxu0 0.0
  %950 = vmatpush.msra.mxu0 0.0
  %951 = vmatpush.msra.mxu0 0.0
  %952 = vmatpush.msra.mxu0 %v107
  %953 = vmatpush.msra.mxu0 %v106
  %954 = vmatpush.msra.mxu0 %v105
  %955 = vmatpush.msra.mxu0 %v104
  %956 = vmatmul.f32.gmra.mxu0 %v698
  %v957 = vpop.f32.mrf.mxu0
  %v958 = vadd.f32 %v455, %v957
  %959 = vmatmul.f32.gmra.mxu0 %v701
  %v960 = vpop.f32.mrf.mxu0
  %v961 = vadd.f32 %v458, %v960
  %962 = vmatmul.f32.gmra.mxu0 %v704
  %v963 = vpop.f32.mrf.mxu0
  %v964 = vadd.f32 %v461, %v963
  %965 = vmatmul.f32.gmra.mxu0 %v707
  %v966 = vpop.f32.mrf.mxu0
  %v967 = vadd.f32 %v464, %v966
  %968 = vmatmul.f32.gmra.mxu0 %v710
  %v969 = vpop.f32.mrf.mxu0
  %v970 = vadd.f32 %v467, %v969
  %971 = vmatmul.f32.gmra.mxu0 %v713
  %v972 = vpop.f32.mrf.mxu0
  %v973 = vadd.f32 %v470, %v972
  %974 = vmatmul.f32.gmra.mxu0 %v716
  %v975 = vpop.f32.mrf.mxu0
  %v976 = vadd.f32 %v473, %v975
  %977 = vmatmul.f32.gmra.mxu0 %v719
  %v978 = vpop.f32.mrf.mxu0
  %v979 = vadd.f32 %v476, %v978
  %980 = vmatmul.f32.gmra.mxu0 %v722
  %v981 = vpop.f32.mrf.mxu0
  %v982 = vadd.f32 %v479, %v981
  %983 = vmatmul.f32.gmra.mxu0 %v725
  %v984 = vpop.f32.mrf.mxu0
  %v985 = vadd.f32 %v482, %v984
  %986 = vmatmul.f32.gmra.mxu0 %v728
  %v987 = vpop.f32.mrf.mxu0
  %v988 = vadd.f32 %v485, %v987
  %989 = vmatmul.f32.gmra.mxu0 %v731
  %v990 = vpop.f32.mrf.mxu0
  %v991 = vadd.f32 %v488, %v990
  %992 = vmatmul.f32.gmra.mxu0 %v734
  %v993 = vpop.f32.mrf.mxu0
  %v994 = vadd.f32 %v491, %v993
  %995 = vmatmul.f32.gmra.mxu0 %v737
  %v996 = vpop.f32.mrf.mxu0
  %v997 = vadd.f32 %v494, %v996
  %998 = vmatmul.f32.gmra.mxu0 %v740
  %v999 = vpop.f32.mrf.mxu0
  %v1000 = vadd.f32 %v497, %v999
  %1001 = vmatmul.f32.gmra.mxu0 %v743
  %v1002 = vpop.f32.mrf.mxu0
  %v1003 = vadd.f32 %v500, %v1002
  %1004 = vmatmul.f32.gmra.mxu0 %v746
  %v1005 = vpop.f32.mrf.mxu0
  %v1006 = vadd.f32 %v503, %v1005
  %1007 = vmatmul.f32.gmra.mxu0 %v749
  %v1008 = vpop.f32.mrf.mxu0
  %v1009 = vadd.f32 %v506, %v1008
  %1010 = vmatmul.f32.gmra.mxu0 %v752
  %v1011 = vpop.f32.mrf.mxu0
  %v1012 = vadd.f32 %v509, %v1011
  %1013 = vmatmul.f32.gmra.mxu0 %v755
  %v1014 = vpop.f32.mrf.mxu0
  %v1015 = vadd.f32 %v512, %v1014
  %1016 = vmatmul.f32.gmra.mxu0 %v758
  %v1017 = vpop.f32.mrf.mxu0
  %v1018 = vadd.f32 %v515, %v1017
  %1019 = vmatmul.f32.gmra.mxu0 %v761
  %v1020 = vpop.f32.mrf.mxu0
  %v1021 = vadd.f32 %v518, %v1020
  %1022 = vmatmul.f32.gmra.mxu0 %v764
  %v1023 = vpop.f32.mrf.mxu0
  %v1024 = vadd.f32 %v521, %v1023
  %1025 = vmatmul.f32.gmra.mxu0 %v767
  %v1026 = vpop.f32.mrf.mxu0
  %v1027 = vadd.f32 %v524, %v1026
  %1028 = vmatmul.f32.gmra.mxu0 %v770
  %v1029 = vpop.f32.mrf.mxu0
  %v1030 = vadd.f32 %v527, %v1029
  %1031 = vmatmul.f32.gmra.mxu0 %v773
  %v1032 = vpop.f32.mrf.mxu0
  %v1033 = vadd.f32 %v530, %v1032
  %1034 = vmatmul.f32.gmra.mxu0 %v776
  %v1035 = vpop.f32.mrf.mxu0
  %v1036 = vadd.f32 %v533, %v1035
  %1037 = vmatmul.f32.gmra.mxu0 %v779
  %v1038 = vpop.f32.mrf.mxu0
  %v1039 = vadd.f32 %v536, %v1038
  %1040 = vmatmul.f32.gmra.mxu0 %v782
  %v1041 = vpop.f32.mrf.mxu0
  %v1042 = vadd.f32 %v539, %v1041
  %1043 = vmatmul.f32.gmra.mxu0 %v785
  %v1044 = vpop.f32.mrf.mxu0
  %v1045 = vadd.f32 %v542, %v1044
  %1046 = vmatmul.f32.gmra.mxu0 %v788
  %v1047 = vpop.f32.mrf.mxu0
  %v1048 = vadd.f32 %v545, %v1047
  %1049 = vmatmul.f32.gmra.mxu0 %v791
  %v1050 = vpop.f32.mrf.mxu0
  %v1051 = vadd.f32 %v548, %v1050
  %1052 = vmatmul.f32.gmra.mxu0 %v794
  %v1053 = vpop.f32.mrf.mxu0
  %v1054 = vadd.f32 %v551, %v1053
  %1055 = vmatmul.f32.gmra.mxu0 %v797
  %v1056 = vpop.f32.mrf.mxu0
  %v1057 = vadd.f32 %v554, %v1056
  %1058 = vmatmul.f32.gmra.mxu0 %v800
  %v1059 = vpop.f32.mrf.mxu0
  %v1060 = vadd.f32 %v557, %v1059
  %1061 = vmatmul.f32.gmra.mxu0 %v803
  %v1062 = vpop.f32.mrf.mxu0
  %v1063 = vadd.f32 %v560, %v1062
  %1064 = vmatmul.f32.gmra.mxu0 %v806
  %v1065 = vpop.f32.mrf.mxu0
  %v1066 = vadd.f32 %v563, %v1065
  %1067 = vmatmul.f32.gmra.mxu0 %v809
  %v1068 = vpop.f32.mrf.mxu0
  %v1069 = vadd.f32 %v566, %v1068
  %1070 = vmatmul.f32.gmra.mxu0 %v812
  %v1071 = vpop.f32.mrf.mxu0
  %v1072 = vadd.f32 %v569, %v1071
  %1073 = vmatmul.f32.gmra.mxu0 %v815
  %v1074 = vpop.f32.mrf.mxu0
  %v1075 = vadd.f32 %v572, %v1074
  %1076 = vmatmul.f32.gmra.mxu0 %v818
  %v1077 = vpop.f32.mrf.mxu0
  %v1078 = vadd.f32 %v575, %v1077
  %1079 = vmatmul.f32.gmra.mxu0 %v821
  %v1080 = vpop.f32.mrf.mxu0
  %v1081 = vadd.f32 %v578, %v1080
  %1082 = vmatmul.f32.gmra.mxu0 %v824
  %v1083 = vpop.f32.mrf.mxu0
  %v1084 = vadd.f32 %v581, %v1083
  %1085 = vmatmul.f32.gmra.mxu0 %v827
  %v1086 = vpop.f32.mrf.mxu0
  %v1087 = vadd.f32 %v584, %v1086
  %1088 = vmatmul.f32.gmra.mxu0 %v830
  %v1089 = vpop.f32.mrf.mxu0
  %v1090 = vadd.f32 %v587, %v1089
  %1091 = vmatmul.f32.gmra.mxu0 %v833
  %v1092 = vpop.f32.mrf.mxu0
  %v1093 = vadd.f32 %v590, %v1092
  %1094 = vmatmul.f32.gmra.mxu0 %v836
  %v1095 = vpop.f32.mrf.mxu0
  %v1096 = vadd.f32 %v593, %v1095
  %1097 = vmatmul.f32.gmra.mxu0 %v839
  %v1098 = vpop.f32.mrf.mxu0
  %v1099 = vadd.f32 %v596, %v1098
  %1100 = vmatmul.f32.gmra.mxu0 %v842
  %v1101 = vpop.f32.mrf.mxu0
  %v1102 = vadd.f32 %v599, %v1101
  %1103 = vmatmul.f32.gmra.mxu0 %v845
  %v1104 = vpop.f32.mrf.mxu0
  %v1105 = vadd.f32 %v602, %v1104
  %1106 = vmatmul.f32.gmra.mxu0 %v848
  %v1107 = vpop.f32.mrf.mxu0
  %v1108 = vadd.f32 %v605, %v1107
  %1109 = vmatmul.f32.gmra.mxu0 %v851
  %v1110 = vpop.f32.mrf.mxu0
  %v1111 = vadd.f32 %v608, %v1110
  %1112 = vmatmul.f32.gmra.mxu0 %v854
  %v1113 = vpop.f32.mrf.mxu0
  %v1114 = vadd.f32 %v611, %v1113
  %1115 = vmatmul.f32.gmra.mxu0 %v857
  %v1116 = vpop.f32.mrf.mxu0
  %v1117 = vadd.f32 %v614, %v1116
  %1118 = vmatmul.f32.gmra.mxu0 %v860
  %v1119 = vpop.f32.mrf.mxu0
  %v1120 = vadd.f32 %v617, %v1119
  %1121 = vmatmul.f32.gmra.mxu0 %v863
  %v1122 = vpop.f32.mrf.mxu0
  %v1123 = vadd.f32 %v620, %v1122
  %1124 = vmatmul.f32.gmra.mxu0 %v866
  %v1125 = vpop.f32.mrf.mxu0
  %v1126 = vadd.f32 %v623, %v1125
  %1127 = vmatmul.f32.gmra.mxu0 %v869
  %v1128 = vpop.f32.mrf.mxu0
  %v1129 = vadd.f32 %v626, %v1128
  %1130 = vmatmul.f32.gmra.mxu0 %v872
  %v1131 = vpop.f32.mrf.mxu0
  %v1132 = vadd.f32 %v629, %v1131
  %1133 = vmatmul.f32.gmra.mxu0 %v875
  %v1134 = vpop.f32.mrf.mxu0
  %v1135 = vadd.f32 %v632, %v1134
  %1136 = vmatmul.f32.gmra.mxu0 %v878
  %v1137 = vpop.f32.mrf.mxu0
  %v1138 = vadd.f32 %v635, %v1137
  %1139 = vmatmul.f32.gmra.mxu0 %v881
  %v1140 = vpop.f32.mrf.mxu0
  %v1141 = vadd.f32 %v638, %v1140
  %1142 = vmatmul.f32.gmra.mxu0 %v884
  %v1143 = vpop.f32.mrf.mxu0
  %v1144 = vadd.f32 %v641, %v1143
  %1145 = vmatmul.f32.gmra.mxu0 %v887
  %v1146 = vpop.f32.mrf.mxu0
  %v1147 = vadd.f32 %v644, %v1146
  %1148 = vmatmul.f32.gmra.mxu0 %v890
  %v1149 = vpop.f32.mrf.mxu0
  %v1150 = vadd.f32 %v647, %v1149
  %1151 = vmatmul.f32.gmra.mxu0 %v893
  %v1152 = vpop.f32.mrf.mxu0
  %v1153 = vadd.f32 %v650, %v1152
  %1154 = vmatmul.f32.gmra.mxu0 %v896
  %v1155 = vpop.f32.mrf.mxu0
  %v1156 = vadd.f32 %v653, %v1155
  %1157 = vmatmul.f32.gmra.mxu0 %v899
  %v1158 = vpop.f32.mrf.mxu0
  %v1159 = vadd.f32 %v656, %v1158
  %1160 = vmatmul.f32.gmra.mxu0 %v902
  %v1161 = vpop.f32.mrf.mxu0
  %v1162 = vadd.f32 %v659, %v1161
  %1163 = vmatmul.f32.gmra.mxu0 %v905
  %v1164 = vpop.f32.mrf.mxu0
  %v1165 = vadd.f32 %v662, %v1164
  %1166 = vmatmul.f32.gmra.mxu0 %v908
  %v1167 = vpop.f32.mrf.mxu0
  %v1168 = vadd.f32 %v665, %v1167
  %1169 = vmatmul.f32.gmra.mxu0 %v911
  %v1170 = vpop.f32.mrf.mxu0
  %v1171 = vadd.f32 %v668, %v1170
  %1172 = vmatmul.f32.gmra.mxu0 %v914
  %v1173 = vpop.f32.mrf.mxu0
  %v1174 = vadd.f32 %v671, %v1173
  %1175 = vmatmul.f32.gmra.mxu0 %v917
  %v1176 = vpop.f32.mrf.mxu0
  %v1177 = vadd.f32 %v674, %v1176
  %1178 = vmatmul.f32.gmra.mxu0 %v920
  %v1179 = vpop.f32.mrf.mxu0
  %v1180 = vadd.f32 %v677, %v1179
  %1181 = vmatmul.f32.gmra.mxu0 %v923
  %v1182 = vpop.f32.mrf.mxu0
  %v1183 = vadd.f32 %v680, %v1182
  %1184 = vmatmul.f32.gmra.mxu0 %v926
  %v1185 = vpop.f32.mrf.mxu0
  %v1186 = vadd.f32 %v683, %v1185
  %1187 = vmatmul.f32.gmra.mxu0 %v929
  %v1188 = vpop.f32.mrf.mxu0
  %v1189 = vadd.f32 %v686, %v1188
  %1190 = vmatmul.f32.gmra.mxu0 %v932
  %v1191 = vpop.f32.mrf.mxu0
  %v1192 = vadd.f32 %v689, %v1191
  %1193 = vmatmul.f32.gmra.mxu0 %v935
  %v1194 = vpop.f32.mrf.mxu0
  %v1195 = vadd.f32 %v692, %v1194
  %1196 = vmatmul.f32.gmra.mxu0 %v938
  %v1197 = vpop.f32.mrf.mxu0
  %v1198 = vadd.f32 %v695, %v1197
  %1199 = vdwg.mxu0
  %v1200 = vld [vmem:[%s0 + $0x2] sm:$0xff]
  %v1201 = vld [vmem:[%s0 + $0xa] sm:$0xff]
  %v1202 = vld [vmem:[%s0 + $0x12] sm:$0xff]
  %v1203 = vld [vmem:[%s0 + $0x1a] sm:$0xff]
  %v1204 = vld [vmem:[%s0 + $0x22] sm:$0xff]
  %v1205 = vld [vmem:[%s0 + $0x2a] sm:$0xff]
  %v1206 = vld [vmem:[%s0 + $0x32] sm:$0xff]
  %v1207 = vld [vmem:[%s0 + $0x3a] sm:$0xff]
  %v1208 = vld [vmem:[%s0 + $0x42] sm:$0xff]
  %v1209 = vld [vmem:[%s0 + $0x4a] sm:$0xff]
  %v1210 = vld [vmem:[%s0 + $0x52] sm:$0xff]
  %v1211 = vld [vmem:[%s0 + $0x5a] sm:$0xff]
  %v1212 = vld [vmem:[%s0 + $0x62] sm:$0xff]
  %v1213 = vld [vmem:[%s0 + $0x6a] sm:$0xff]
  %v1214 = vld [vmem:[%s0 + $0x72] sm:$0xff]
  %v1215 = vld [vmem:[%s0 + $0x7a] sm:$0xff]
  %v1216 = vld [vmem:[%s0 + $0x82] sm:$0xff]
  %v1217 = vld [vmem:[%s0 + $0x8a] sm:$0xff]
  %v1218 = vld [vmem:[%s0 + $0x92] sm:$0xff]
  %v1219 = vld [vmem:[%s0 + $0x9a] sm:$0xff]
  %v1220 = vld [vmem:[%s0 + $0xa2] sm:$0xff]
  %v1221 = vld [vmem:[%s0 + $0xaa] sm:$0xff]
  %v1222 = vld [vmem:[%s0 + $0xb2] sm:$0xff]
  %v1223 = vld [vmem:[%s0 + $0xba] sm:$0xff]
  %v1224 = vld [vmem:[%s0 + $0xc2] sm:$0xff]
  %v1225 = vld [vmem:[%s0 + $0xca] sm:$0xff]
  %v1226 = vld [vmem:[%s0 + $0xd2] sm:$0xff]
  %v1227 = vld [vmem:[%s0 + $0xda] sm:$0xff]
  %v1228 = vld [vmem:[%s0 + $0xe2] sm:$0xff]
  %v1229 = vld [vmem:[%s0 + $0xea] sm:$0xff]
  %v1230 = vld [vmem:[%s0 + $0xf2] sm:$0xff]
  %v1231 = vld [vmem:[%s0 + $0xfa] sm:$0xff]
  %v1232 = vld [vmem:[%s0 + $0x102] sm:$0xff]
  %v1233 = vld [vmem:[%s0 + $0x10a] sm:$0xff]
  %v1234 = vld [vmem:[%s0 + $0x112] sm:$0xff]
  %v1235 = vld [vmem:[%s0 + $0x11a] sm:$0xff]
  %v1236 = vld [vmem:[%s0 + $0x122] sm:$0xff]
  %v1237 = vld [vmem:[%s0 + $0x12a] sm:$0xff]
  %v1238 = vld [vmem:[%s0 + $0x132] sm:$0xff]
  %v1239 = vld [vmem:[%s0 + $0x13a] sm:$0xff]
  %v1240 = vld [vmem:[%s0 + $0x142] sm:$0xff]
  %v1241 = vld [vmem:[%s0 + $0x14a] sm:$0xff]
  %v1242 = vld [vmem:[%s0 + $0x152] sm:$0xff]
  %v1243 = vld [vmem:[%s0 + $0x15a] sm:$0xff]
  %v1244 = vld [vmem:[%s0 + $0x162] sm:$0xff]
  %v1245 = vld [vmem:[%s0 + $0x16a] sm:$0xff]
  %v1246 = vld [vmem:[%s0 + $0x172] sm:$0xff]
  %v1247 = vld [vmem:[%s0 + $0x17a] sm:$0xff]
  %v1248 = vld [vmem:[%s0 + $0x182] sm:$0xff]
  %v1249 = vld [vmem:[%s0 + $0x18a] sm:$0xff]
  %v1250 = vld [vmem:[%s0 + $0x192] sm:$0xff]
  %v1251 = vld [vmem:[%s0 + $0x19a] sm:$0xff]
  %v1252 = vld [vmem:[%s0 + $0x1a2] sm:$0xff]
  %v1253 = vld [vmem:[%s0 + $0x1aa] sm:$0xff]
  %v1254 = vld [vmem:[%s0 + $0x1b2] sm:$0xff]
  %v1255 = vld [vmem:[%s0 + $0x1ba] sm:$0xff]
  %v1256 = vld [vmem:[%s0 + $0x1c2] sm:$0xff]
  %v1257 = vld [vmem:[%s0 + $0x1ca] sm:$0xff]
  %v1258 = vld [vmem:[%s0 + $0x1d2] sm:$0xff]
  %v1259 = vld [vmem:[%s0 + $0x1da] sm:$0xff]
  %v1260 = vld [vmem:[%s0 + $0x1e2] sm:$0xff]
  %v1261 = vld [vmem:[%s0 + $0x1ea] sm:$0xff]
  %v1262 = vld [vmem:[%s0 + $0x1f2] sm:$0xff]
  %v1263 = vld [vmem:[%s0 + $0x1fa] sm:$0xff]
  %v1264 = vld [vmem:[%s0 + $0x202] sm:$0xff]
  %v1265 = vld [vmem:[%s0 + $0x20a] sm:$0xff]
  %v1266 = vld [vmem:[%s0 + $0x212] sm:$0xff]
  %v1267 = vld [vmem:[%s0 + $0x21a] sm:$0xff]
  %v1268 = vld [vmem:[%s0 + $0x222] sm:$0xff]
  %v1269 = vld [vmem:[%s0 + $0x22a] sm:$0xff]
  %v1270 = vld [vmem:[%s0 + $0x232] sm:$0xff]
  %v1271 = vld [vmem:[%s0 + $0x23a] sm:$0xff]
  %v1272 = vld [vmem:[%s0 + $0x242] sm:$0xff]
  %v1273 = vld [vmem:[%s0 + $0x24a] sm:$0xff]
  %v1274 = vld [vmem:[%s0 + $0x252] sm:$0xff]
  %v1275 = vld [vmem:[%s0 + $0x25a] sm:$0xff]
  %v1276 = vld [vmem:[%s0 + $0x262] sm:$0xff]
  %v1277 = vld [vmem:[%s0 + $0x26a] sm:$0xff]
  %v1278 = vld [vmem:[%s0 + $0x272] sm:$0xff]
  %v1279 = vld [vmem:[%s0 + $0x27a] sm:$0xff]
  %v1280 = vld [vmem:[%s0 + $0x282] sm:$0xff]
  %v1281 = vld [vmem:[%s1 + $0x40] sm:$0xff]
  %v1282 = vld [vmem:[%s1 + $0x48] sm:$0xff]
  %v1283 = vld [vmem:[%s1 + $0x50] sm:$0xff]
  %v1284 = vld [vmem:[%s1 + $0x58] sm:$0xff]
  %v1286 = vsel %vm193, %v1200, 0
  %v1289 = vsel %vm193, %v1201, 0
  %v1292 = vsel %vm193, %v1202, 0
  %v1295 = vsel %vm193, %v1203, 0
  %v1298 = vsel %vm193, %v1204, 0
  %v1301 = vsel %vm193, %v1205, 0
  %v1304 = vsel %vm193, %v1206, 0
  %v1307 = vsel %vm193, %v1207, 0
  %v1310 = vsel %vm193, %v1208, 0
  %v1313 = vsel %vm193, %v1209, 0
  %v1316 = vsel %vm193, %v1210, 0
  %v1319 = vsel %vm193, %v1211, 0
  %v1322 = vsel %vm193, %v1212, 0
  %v1325 = vsel %vm193, %v1213, 0
  %v1328 = vsel %vm193, %v1214, 0
  %v1331 = vsel %vm193, %v1215, 0
  %v1334 = vsel %vm193, %v1216, 0
  %v1337 = vsel %vm193, %v1217, 0
  %v1340 = vsel %vm193, %v1218, 0
  %v1343 = vsel %vm193, %v1219, 0
  %v1346 = vsel %vm193, %v1220, 0
  %v1349 = vsel %vm193, %v1221, 0
  %v1352 = vsel %vm193, %v1222, 0
  %v1355 = vsel %vm193, %v1223, 0
  %v1358 = vsel %vm193, %v1224, 0
  %v1361 = vsel %vm193, %v1225, 0
  %v1364 = vsel %vm193, %v1226, 0
  %v1367 = vsel %vm193, %v1227, 0
  %v1370 = vsel %vm193, %v1228, 0
  %v1373 = vsel %vm193, %v1229, 0
  %v1376 = vsel %vm193, %v1230, 0
  %v1379 = vsel %vm193, %v1231, 0
  %v1382 = vsel %vm193, %v1232, 0
  %v1385 = vsel %vm193, %v1233, 0
  %v1388 = vsel %vm193, %v1234, 0
  %v1391 = vsel %vm193, %v1235, 0
  %v1394 = vsel %vm193, %v1236, 0
  %v1397 = vsel %vm193, %v1237, 0
  %v1400 = vsel %vm193, %v1238, 0
  %v1403 = vsel %vm193, %v1239, 0
  %v1406 = vsel %vm193, %v1240, 0
  %v1409 = vsel %vm193, %v1241, 0
  %v1412 = vsel %vm193, %v1242, 0
  %v1415 = vsel %vm193, %v1243, 0
  %v1418 = vsel %vm193, %v1244, 0
  %v1421 = vsel %vm193, %v1245, 0
  %v1424 = vsel %vm193, %v1246, 0
  %v1427 = vsel %vm193, %v1247, 0
  %v1430 = vsel %vm193, %v1248, 0
  %v1433 = vsel %vm193, %v1249, 0
  %v1436 = vsel %vm193, %v1250, 0
  %v1439 = vsel %vm193, %v1251, 0
  %v1442 = vsel %vm193, %v1252, 0
  %v1445 = vsel %vm193, %v1253, 0
  %v1448 = vsel %vm193, %v1254, 0
  %v1451 = vsel %vm193, %v1255, 0
  %v1454 = vsel %vm193, %v1256, 0
  %v1457 = vsel %vm193, %v1257, 0
  %v1460 = vsel %vm193, %v1258, 0
  %v1463 = vsel %vm193, %v1259, 0
  %v1466 = vsel %vm193, %v1260, 0
  %v1469 = vsel %vm193, %v1261, 0
  %v1472 = vsel %vm193, %v1262, 0
  %v1475 = vsel %vm193, %v1263, 0
  %v1478 = vsel %vm193, %v1264, 0
  %v1481 = vsel %vm193, %v1265, 0
  %v1484 = vsel %vm193, %v1266, 0
  %v1487 = vsel %vm193, %v1267, 0
  %v1490 = vsel %vm193, %v1268, 0
  %v1493 = vsel %vm193, %v1269, 0
  %v1496 = vsel %vm193, %v1270, 0
  %v1499 = vsel %vm193, %v1271, 0
  %v1502 = vsel %vm193, %v1272, 0
  %v1505 = vsel %vm193, %v1273, 0
  %v1508 = vsel %vm193, %v1274, 0
  %v1511 = vsel %vm193, %v1275, 0
  %v1514 = vsel %vm193, %v1276, 0
  %v1517 = vsel %vm193, %v1277, 0
  %v1520 = vsel %vm193, %v1278, 0
  %v1523 = vsel %vm193, %v1279, 0
  %v1526 = vsel %vm193, %v1280, 0
  %1528 = vmatpush.msra.mxu0 0.0
  %1529 = vmatpush.msra.mxu0 0.0
  %1530 = vmatpush.msra.mxu0 0.0
  %1531 = vmatpush.msra.mxu0 0.0
  %1532 = vmatpush.msra.mxu0 0.0
  %1533 = vmatpush.msra.mxu0 0.0
  %1534 = vmatpush.msra.mxu0 0.0
  %1535 = vmatpush.msra.mxu0 0.0
  %1536 = vmatpush.msra.mxu0 0.0
  %1537 = vmatpush.msra.mxu0 0.0
  %1538 = vmatpush.msra.mxu0 0.0
  %1539 = vmatpush.msra.mxu0 0.0
  %1540 = vmatpush.msra.mxu0 %v1284
  %1541 = vmatpush.msra.mxu0 %v1283
  %1542 = vmatpush.msra.mxu0 %v1282
  %1543 = vmatpush.msra.mxu0 %v1281
  %1544 = vmatmul.f32.gmra.mxu0 %v1286
  %v1545 = vpop.f32.mrf.mxu0
  %v1546 = vadd.f32 0.0, %v1545
  %1547 = vmatmul.f32.gmra.mxu0 %v1289
  %v1548 = vpop.f32.mrf.mxu0
  %v1549 = vadd.f32 0.0, %v1548
  %1550 = vmatmul.f32.gmra.mxu0 %v1292
  %v1551 = vpop.f32.mrf.mxu0
  %v1552 = vadd.f32 0.0, %v1551
  %1553 = vmatmul.f32.gmra.mxu0 %v1295
  %v1554 = vpop.f32.mrf.mxu0
  %v1555 = vadd.f32 0.0, %v1554
  %1556 = vmatmul.f32.gmra.mxu0 %v1298
  %v1557 = vpop.f32.mrf.mxu0
  %v1558 = vadd.f32 0.0, %v1557
  %1559 = vmatmul.f32.gmra.mxu0 %v1301
  %v1560 = vpop.f32.mrf.mxu0
  %v1561 = vadd.f32 0.0, %v1560
  %1562 = vmatmul.f32.gmra.mxu0 %v1304
  %v1563 = vpop.f32.mrf.mxu0
  %v1564 = vadd.f32 0.0, %v1563
  %1565 = vmatmul.f32.gmra.mxu0 %v1307
  %v1566 = vpop.f32.mrf.mxu0
  %v1567 = vadd.f32 0.0, %v1566
  %1568 = vmatmul.f32.gmra.mxu0 %v1310
  %v1569 = vpop.f32.mrf.mxu0
  %v1570 = vadd.f32 0.0, %v1569
  %1571 = vmatmul.f32.gmra.mxu0 %v1313
  %v1572 = vpop.f32.mrf.mxu0
  %v1573 = vadd.f32 0.0, %v1572
  %1574 = vmatmul.f32.gmra.mxu0 %v1316
  %v1575 = vpop.f32.mrf.mxu0
  %v1576 = vadd.f32 0.0, %v1575
  %1577 = vmatmul.f32.gmra.mxu0 %v1319
  %v1578 = vpop.f32.mrf.mxu0
  %v1579 = vadd.f32 0.0, %v1578
  %1580 = vmatmul.f32.gmra.mxu0 %v1322
  %v1581 = vpop.f32.mrf.mxu0
  %v1582 = vadd.f32 0.0, %v1581
  %1583 = vmatmul.f32.gmra.mxu0 %v1325
  %v1584 = vpop.f32.mrf.mxu0
  %v1585 = vadd.f32 0.0, %v1584
  %1586 = vmatmul.f32.gmra.mxu0 %v1328
  %v1587 = vpop.f32.mrf.mxu0
  %v1588 = vadd.f32 0.0, %v1587
  %1589 = vmatmul.f32.gmra.mxu0 %v1331
  %v1590 = vpop.f32.mrf.mxu0
  %v1591 = vadd.f32 0.0, %v1590
  %1592 = vmatmul.f32.gmra.mxu0 %v1334
  %v1593 = vpop.f32.mrf.mxu0
  %v1594 = vadd.f32 0.0, %v1593
  %1595 = vmatmul.f32.gmra.mxu0 %v1337
  %v1596 = vpop.f32.mrf.mxu0
  %v1597 = vadd.f32 0.0, %v1596
  %1598 = vmatmul.f32.gmra.mxu0 %v1340
  %v1599 = vpop.f32.mrf.mxu0
  %v1600 = vadd.f32 0.0, %v1599
  %1601 = vmatmul.f32.gmra.mxu0 %v1343
  %v1602 = vpop.f32.mrf.mxu0
  %v1603 = vadd.f32 0.0, %v1602
  %1604 = vmatmul.f32.gmra.mxu0 %v1346
  %v1605 = vpop.f32.mrf.mxu0
  %v1606 = vadd.f32 0.0, %v1605
  %1607 = vmatmul.f32.gmra.mxu0 %v1349
  %v1608 = vpop.f32.mrf.mxu0
  %v1609 = vadd.f32 0.0, %v1608
  %1610 = vmatmul.f32.gmra.mxu0 %v1352
  %v1611 = vpop.f32.mrf.mxu0
  %v1612 = vadd.f32 0.0, %v1611
  %1613 = vmatmul.f32.gmra.mxu0 %v1355
  %v1614 = vpop.f32.mrf.mxu0
  %v1615 = vadd.f32 0.0, %v1614
  %1616 = vmatmul.f32.gmra.mxu0 %v1358
  %v1617 = vpop.f32.mrf.mxu0
  %v1618 = vadd.f32 0.0, %v1617
  %1619 = vmatmul.f32.gmra.mxu0 %v1361
  %v1620 = vpop.f32.mrf.mxu0
  %v1621 = vadd.f32 0.0, %v1620
  %1622 = vmatmul.f32.gmra.mxu0 %v1364
  %v1623 = vpop.f32.mrf.mxu0
  %v1624 = vadd.f32 0.0, %v1623
  %1625 = vmatmul.f32.gmra.mxu0 %v1367
  %v1626 = vpop.f32.mrf.mxu0
  %v1627 = vadd.f32 0.0, %v1626
  %1628 = vmatmul.f32.gmra.mxu0 %v1370
  %v1629 = vpop.f32.mrf.mxu0
  %v1630 = vadd.f32 0.0, %v1629
  %1631 = vmatmul.f32.gmra.mxu0 %v1373
  %v1632 = vpop.f32.mrf.mxu0
  %v1633 = vadd.f32 0.0, %v1632
  %1634 = vmatmul.f32.gmra.mxu0 %v1376
  %v1635 = vpop.f32.mrf.mxu0
  %v1636 = vadd.f32 0.0, %v1635
  %1637 = vmatmul.f32.gmra.mxu0 %v1379
  %v1638 = vpop.f32.mrf.mxu0
  %v1639 = vadd.f32 0.0, %v1638
  %1640 = vmatmul.f32.gmra.mxu0 %v1382
  %v1641 = vpop.f32.mrf.mxu0
  %v1642 = vadd.f32 0.0, %v1641
  %1643 = vmatmul.f32.gmra.mxu0 %v1385
  %v1644 = vpop.f32.mrf.mxu0
  %v1645 = vadd.f32 0.0, %v1644
  %1646 = vmatmul.f32.gmra.mxu0 %v1388
  %v1647 = vpop.f32.mrf.mxu0
  %v1648 = vadd.f32 0.0, %v1647
  %1649 = vmatmul.f32.gmra.mxu0 %v1391
  %v1650 = vpop.f32.mrf.mxu0
  %v1651 = vadd.f32 0.0, %v1650
  %1652 = vmatmul.f32.gmra.mxu0 %v1394
  %v1653 = vpop.f32.mrf.mxu0
  %v1654 = vadd.f32 0.0, %v1653
  %1655 = vmatmul.f32.gmra.mxu0 %v1397
  %v1656 = vpop.f32.mrf.mxu0
  %v1657 = vadd.f32 0.0, %v1656
  %1658 = vmatmul.f32.gmra.mxu0 %v1400
  %v1659 = vpop.f32.mrf.mxu0
  %v1660 = vadd.f32 0.0, %v1659
  %1661 = vmatmul.f32.gmra.mxu0 %v1403
  %v1662 = vpop.f32.mrf.mxu0
  %v1663 = vadd.f32 0.0, %v1662
  %1664 = vmatmul.f32.gmra.mxu0 %v1406
  %v1665 = vpop.f32.mrf.mxu0
  %v1666 = vadd.f32 0.0, %v1665
  %1667 = vmatmul.f32.gmra.mxu0 %v1409
  %v1668 = vpop.f32.mrf.mxu0
  %v1669 = vadd.f32 0.0, %v1668
  %1670 = vmatmul.f32.gmra.mxu0 %v1412
  %v1671 = vpop.f32.mrf.mxu0
  %v1672 = vadd.f32 0.0, %v1671
  %1673 = vmatmul.f32.gmra.mxu0 %v1415
  %v1674 = vpop.f32.mrf.mxu0
  %v1675 = vadd.f32 0.0, %v1674
  %1676 = vmatmul.f32.gmra.mxu0 %v1418
  %v1677 = vpop.f32.mrf.mxu0
  %v1678 = vadd.f32 0.0, %v1677
  %1679 = vmatmul.f32.gmra.mxu0 %v1421
  %v1680 = vpop.f32.mrf.mxu0
  %v1681 = vadd.f32 0.0, %v1680
  %1682 = vmatmul.f32.gmra.mxu0 %v1424
  %v1683 = vpop.f32.mrf.mxu0
  %v1684 = vadd.f32 0.0, %v1683
  %1685 = vmatmul.f32.gmra.mxu0 %v1427
  %v1686 = vpop.f32.mrf.mxu0
  %v1687 = vadd.f32 0.0, %v1686
  %1688 = vmatmul.f32.gmra.mxu0 %v1430
  %v1689 = vpop.f32.mrf.mxu0
  %v1690 = vadd.f32 0.0, %v1689
  %1691 = vmatmul.f32.gmra.mxu0 %v1433
  %v1692 = vpop.f32.mrf.mxu0
  %v1693 = vadd.f32 0.0, %v1692
  %1694 = vmatmul.f32.gmra.mxu0 %v1436
  %v1695 = vpop.f32.mrf.mxu0
  %v1696 = vadd.f32 0.0, %v1695
  %1697 = vmatmul.f32.gmra.mxu0 %v1439
  %v1698 = vpop.f32.mrf.mxu0
  %v1699 = vadd.f32 0.0, %v1698
  %1700 = vmatmul.f32.gmra.mxu0 %v1442
  %v1701 = vpop.f32.mrf.mxu0
  %v1702 = vadd.f32 0.0, %v1701
  %1703 = vmatmul.f32.gmra.mxu0 %v1445
  %v1704 = vpop.f32.mrf.mxu0
  %v1705 = vadd.f32 0.0, %v1704
  %1706 = vmatmul.f32.gmra.mxu0 %v1448
  %v1707 = vpop.f32.mrf.mxu0
  %v1708 = vadd.f32 0.0, %v1707
  %1709 = vmatmul.f32.gmra.mxu0 %v1451
  %v1710 = vpop.f32.mrf.mxu0
  %v1711 = vadd.f32 0.0, %v1710
  %1712 = vmatmul.f32.gmra.mxu0 %v1454
  %v1713 = vpop.f32.mrf.mxu0
  %v1714 = vadd.f32 0.0, %v1713
  %1715 = vmatmul.f32.gmra.mxu0 %v1457
  %v1716 = vpop.f32.mrf.mxu0
  %v1717 = vadd.f32 0.0, %v1716
  %1718 = vmatmul.f32.gmra.mxu0 %v1460
  %v1719 = vpop.f32.mrf.mxu0
  %v1720 = vadd.f32 0.0, %v1719
  %1721 = vmatmul.f32.gmra.mxu0 %v1463
  %v1722 = vpop.f32.mrf.mxu0
  %v1723 = vadd.f32 0.0, %v1722
  %1724 = vmatmul.f32.gmra.mxu0 %v1466
  %v1725 = vpop.f32.mrf.mxu0
  %v1726 = vadd.f32 0.0, %v1725
  %1727 = vmatmul.f32.gmra.mxu0 %v1469
  %v1728 = vpop.f32.mrf.mxu0
  %v1729 = vadd.f32 0.0, %v1728
  %1730 = vmatmul.f32.gmra.mxu0 %v1472
  %v1731 = vpop.f32.mrf.mxu0
  %v1732 = vadd.f32 0.0, %v1731
  %1733 = vmatmul.f32.gmra.mxu0 %v1475
  %v1734 = vpop.f32.mrf.mxu0
  %v1735 = vadd.f32 0.0, %v1734
  %1736 = vmatmul.f32.gmra.mxu0 %v1478
  %v1737 = vpop.f32.mrf.mxu0
  %v1738 = vadd.f32 0.0, %v1737
  %1739 = vmatmul.f32.gmra.mxu0 %v1481
  %v1740 = vpop.f32.mrf.mxu0
  %v1741 = vadd.f32 0.0, %v1740
  %1742 = vmatmul.f32.gmra.mxu0 %v1484
  %v1743 = vpop.f32.mrf.mxu0
  %v1744 = vadd.f32 0.0, %v1743
  %1745 = vmatmul.f32.gmra.mxu0 %v1487
  %v1746 = vpop.f32.mrf.mxu0
  %v1747 = vadd.f32 0.0, %v1746
  %1748 = vmatmul.f32.gmra.mxu0 %v1490
  %v1749 = vpop.f32.mrf.mxu0
  %v1750 = vadd.f32 0.0, %v1749
  %1751 = vmatmul.f32.gmra.mxu0 %v1493
  %v1752 = vpop.f32.mrf.mxu0
  %v1753 = vadd.f32 0.0, %v1752
  %1754 = vmatmul.f32.gmra.mxu0 %v1496
  %v1755 = vpop.f32.mrf.mxu0
  %v1756 = vadd.f32 0.0, %v1755
  %1757 = vmatmul.f32.gmra.mxu0 %v1499
  %v1758 = vpop.f32.mrf.mxu0
  %v1759 = vadd.f32 0.0, %v1758
  %1760 = vmatmul.f32.gmra.mxu0 %v1502
  %v1761 = vpop.f32.mrf.mxu0
  %v1762 = vadd.f32 0.0, %v1761
  %1763 = vmatmul.f32.gmra.mxu0 %v1505
  %v1764 = vpop.f32.mrf.mxu0
  %v1765 = vadd.f32 0.0, %v1764
  %1766 = vmatmul.f32.gmra.mxu0 %v1508
  %v1767 = vpop.f32.mrf.mxu0
  %v1768 = vadd.f32 0.0, %v1767
  %1769 = vmatmul.f32.gmra.mxu0 %v1511
  %v1770 = vpop.f32.mrf.mxu0
  %v1771 = vadd.f32 0.0, %v1770
  %1772 = vmatmul.f32.gmra.mxu0 %v1514
  %v1773 = vpop.f32.mrf.mxu0
  %v1774 = vadd.f32 0.0, %v1773
  %1775 = vmatmul.f32.gmra.mxu0 %v1517
  %v1776 = vpop.f32.mrf.mxu0
  %v1777 = vadd.f32 0.0, %v1776
  %1778 = vmatmul.f32.gmra.mxu0 %v1520
  %v1779 = vpop.f32.mrf.mxu0
  %v1780 = vadd.f32 0.0, %v1779
  %1781 = vmatmul.f32.gmra.mxu0 %v1523
  %v1782 = vpop.f32.mrf.mxu0
  %v1783 = vadd.f32 0.0, %v1782
  %1784 = vmatmul.f32.gmra.mxu0 %v1526
  %v1785 = vpop.f32.mrf.mxu0
  %v1786 = vadd.f32 0.0, %v1785
  %1787 = vdwg.mxu0
  %v1788 = vadd.f32 %v958, %v1546
  %v1789 = vadd.f32 %v961, %v1549
  %v1790 = vadd.f32 %v964, %v1552
  %v1791 = vadd.f32 %v967, %v1555
  %v1792 = vadd.f32 %v970, %v1558
  %v1793 = vadd.f32 %v973, %v1561
  %v1794 = vadd.f32 %v976, %v1564
  %v1795 = vadd.f32 %v979, %v1567
  %v1796 = vadd.f32 %v982, %v1570
  %v1797 = vadd.f32 %v985, %v1573
  %v1798 = vadd.f32 %v988, %v1576
  %v1799 = vadd.f32 %v991, %v1579
  %v1800 = vadd.f32 %v994, %v1582
  %v1801 = vadd.f32 %v997, %v1585
  %v1802 = vadd.f32 %v1000, %v1588
  %v1803 = vadd.f32 %v1003, %v1591
  %v1804 = vadd.f32 %v1006, %v1594
  %v1805 = vadd.f32 %v1009, %v1597
  %v1806 = vadd.f32 %v1012, %v1600
  %v1807 = vadd.f32 %v1015, %v1603
  %v1808 = vadd.f32 %v1018, %v1606
  %v1809 = vadd.f32 %v1021, %v1609
  %v1810 = vadd.f32 %v1024, %v1612
  %v1811 = vadd.f32 %v1027, %v1615
  %v1812 = vadd.f32 %v1030, %v1618
  %v1813 = vadd.f32 %v1033, %v1621
  %v1814 = vadd.f32 %v1036, %v1624
  %v1815 = vadd.f32 %v1039, %v1627
  %v1816 = vadd.f32 %v1042, %v1630
  %v1817 = vadd.f32 %v1045, %v1633
  %v1818 = vadd.f32 %v1048, %v1636
  %v1819 = vadd.f32 %v1051, %v1639
  %v1820 = vadd.f32 %v1054, %v1642
  %v1821 = vadd.f32 %v1057, %v1645
  %v1822 = vadd.f32 %v1060, %v1648
  %v1823 = vadd.f32 %v1063, %v1651
  %v1824 = vadd.f32 %v1066, %v1654
  %v1825 = vadd.f32 %v1069, %v1657
  %v1826 = vadd.f32 %v1072, %v1660
  %v1827 = vadd.f32 %v1075, %v1663
  %v1828 = vadd.f32 %v1078, %v1666
  %v1829 = vadd.f32 %v1081, %v1669
  %v1830 = vadd.f32 %v1084, %v1672
  %v1831 = vadd.f32 %v1087, %v1675
  %v1832 = vadd.f32 %v1090, %v1678
  %v1833 = vadd.f32 %v1093, %v1681
  %v1834 = vadd.f32 %v1096, %v1684
  %v1835 = vadd.f32 %v1099, %v1687
  %v1836 = vadd.f32 %v1102, %v1690
  %v1837 = vadd.f32 %v1105, %v1693
  %v1838 = vadd.f32 %v1108, %v1696
  %v1839 = vadd.f32 %v1111, %v1699
  %v1840 = vadd.f32 %v1114, %v1702
  %v1841 = vadd.f32 %v1117, %v1705
  %v1842 = vadd.f32 %v1120, %v1708
  %v1843 = vadd.f32 %v1123, %v1711
  %v1844 = vadd.f32 %v1126, %v1714
  %v1845 = vadd.f32 %v1129, %v1717
  %v1846 = vadd.f32 %v1132, %v1720
  %v1847 = vadd.f32 %v1135, %v1723
  %v1848 = vadd.f32 %v1138, %v1726
  %v1849 = vadd.f32 %v1141, %v1729
  %v1850 = vadd.f32 %v1144, %v1732
  %v1851 = vadd.f32 %v1147, %v1735
  %v1852 = vadd.f32 %v1150, %v1738
  %v1853 = vadd.f32 %v1153, %v1741
  %v1854 = vadd.f32 %v1156, %v1744
  %v1855 = vadd.f32 %v1159, %v1747
  %v1856 = vadd.f32 %v1162, %v1750
  %v1857 = vadd.f32 %v1165, %v1753
  %v1858 = vadd.f32 %v1168, %v1756
  %v1859 = vadd.f32 %v1171, %v1759
  %v1860 = vadd.f32 %v1174, %v1762
  %v1861 = vadd.f32 %v1177, %v1765
  %v1862 = vadd.f32 %v1180, %v1768
  %v1863 = vadd.f32 %v1183, %v1771
  %v1864 = vadd.f32 %v1186, %v1774
  %v1865 = vadd.f32 %v1189, %v1777
  %v1866 = vadd.f32 %v1192, %v1780
  %v1867 = vadd.f32 %v1195, %v1783
  %v1868 = vadd.f32 %v1198, %v1786
  %v1869 = vld [vmem:[%s0 + $0x12] sm:$0xff]
  %v1870 = vld [vmem:[%s0 + $0x1a] sm:$0xff]
  %v1871 = vld [vmem:[%s0 + $0x22] sm:$0xff]
  %v1872 = vld [vmem:[%s0 + $0x2a] sm:$0xff]
  %v1873 = vld [vmem:[%s0 + $0x32] sm:$0xff]
  %v1874 = vld [vmem:[%s0 + $0x3a] sm:$0xff]
  %v1875 = vld [vmem:[%s0 + $0x42] sm:$0xff]
  %v1876 = vld [vmem:[%s0 + $0x4a] sm:$0xff]
  %v1877 = vld [vmem:[%s0 + $0x52] sm:$0xff]
  %v1878 = vld [vmem:[%s0 + $0x5a] sm:$0xff]
  %v1879 = vld [vmem:[%s0 + $0x62] sm:$0xff]
  %v1880 = vld [vmem:[%s0 + $0x6a] sm:$0xff]
  %v1881 = vld [vmem:[%s0 + $0x72] sm:$0xff]
  %v1882 = vld [vmem:[%s0 + $0x7a] sm:$0xff]
  %v1883 = vld [vmem:[%s0 + $0x82] sm:$0xff]
  %v1884 = vld [vmem:[%s0 + $0x8a] sm:$0xff]
  %v1885 = vld [vmem:[%s0 + $0x92] sm:$0xff]
  %v1886 = vld [vmem:[%s0 + $0x9a] sm:$0xff]
  %v1887 = vld [vmem:[%s0 + $0xa2] sm:$0xff]
  %v1888 = vld [vmem:[%s0 + $0xaa] sm:$0xff]
  %v1889 = vld [vmem:[%s0 + $0xb2] sm:$0xff]
  %v1890 = vld [vmem:[%s0 + $0xba] sm:$0xff]
  %v1891 = vld [vmem:[%s0 + $0xc2] sm:$0xff]
  %v1892 = vld [vmem:[%s0 + $0xca] sm:$0xff]
  %v1893 = vld [vmem:[%s0 + $0xd2] sm:$0xff]
  %v1894 = vld [vmem:[%s0 + $0xda] sm:$0xff]
  %v1895 = vld [vmem:[%s0 + $0xe2] sm:$0xff]
  %v1896 = vld [vmem:[%s0 + $0xea] sm:$0xff]
  %v1897 = vld [vmem:[%s0 + $0xf2] sm:$0xff]
  %v1898 = vld [vmem:[%s0 + $0xfa] sm:$0xff]
  %v1899 = vld [vmem:[%s0 + $0x102] sm:$0xff]
  %v1900 = vld [vmem:[%s0 + $0x10a] sm:$0xff]
  %v1901 = vld [vmem:[%s0 + $0x112] sm:$0xff]
  %v1902 = vld [vmem:[%s0 + $0x11a] sm:$0xff]
  %v1903 = vld [vmem:[%s0 + $0x122] sm:$0xff]
  %v1904 = vld [vmem:[%s0 + $0x12a] sm:$0xff]
  %v1905 = vld [vmem:[%s0 + $0x132] sm:$0xff]
  %v1906 = vld [vmem:[%s0 + $0x13a] sm:$0xff]
  %v1907 = vld [vmem:[%s0 + $0x142] sm:$0xff]
  %v1908 = vld [vmem:[%s0 + $0x14a] sm:$0xff]
  %v1909 = vld [vmem:[%s0 + $0x152] sm:$0xff]
  %v1910 = vld [vmem:[%s0 + $0x15a] sm:$0xff]
  %v1911 = vld [vmem:[%s0 + $0x162] sm:$0xff]
  %v1912 = vld [vmem:[%s0 + $0x16a] sm:$0xff]
  %v1913 = vld [vmem:[%s0 + $0x172] sm:$0xff]
  %v1914 = vld [vmem:[%s0 + $0x17a] sm:$0xff]
  %v1915 = vld [vmem:[%s0 + $0x182] sm:$0xff]
  %v1916 = vld [vmem:[%s0 + $0x18a] sm:$0xff]
  %v1917 = vld [vmem:[%s0 + $0x192] sm:$0xff]
  %v1918 = vld [vmem:[%s0 + $0x19a] sm:$0xff]
  %v1919 = vld [vmem:[%s0 + $0x1a2] sm:$0xff]
  %v1920 = vld [vmem:[%s0 + $0x1aa] sm:$0xff]
  %v1921 = vld [vmem:[%s0 + $0x1b2] sm:$0xff]
  %v1922 = vld [vmem:[%s0 + $0x1ba] sm:$0xff]
  %v1923 = vld [vmem:[%s0 + $0x1c2] sm:$0xff]
  %v1924 = vld [vmem:[%s0 + $0x1ca] sm:$0xff]
  %v1925 = vld [vmem:[%s0 + $0x1d2] sm:$0xff]
  %v1926 = vld [vmem:[%s0 + $0x1da] sm:$0xff]
  %v1927 = vld [vmem:[%s0 + $0x1e2] sm:$0xff]
  %v1928 = vld [vmem:[%s0 + $0x1ea] sm:$0xff]
  %v1929 = vld [vmem:[%s0 + $0x1f2] sm:$0xff]
  %v1930 = vld [vmem:[%s0 + $0x1fa] sm:$0xff]
  %v1931 = vld [vmem:[%s0 + $0x202] sm:$0xff]
  %v1932 = vld [vmem:[%s0 + $0x20a] sm:$0xff]
  %v1933 = vld [vmem:[%s0 + $0x212] sm:$0xff]
  %v1934 = vld [vmem:[%s0 + $0x21a] sm:$0xff]
  %v1935 = vld [vmem:[%s0 + $0x222] sm:$0xff]
  %v1936 = vld [vmem:[%s0 + $0x22a] sm:$0xff]
  %v1937 = vld [vmem:[%s0 + $0x232] sm:$0xff]
  %v1938 = vld [vmem:[%s0 + $0x23a] sm:$0xff]
  %v1939 = vld [vmem:[%s0 + $0x242] sm:$0xff]
  %v1940 = vld [vmem:[%s0 + $0x24a] sm:$0xff]
  %v1941 = vld [vmem:[%s0 + $0x252] sm:$0xff]
  %v1942 = vld [vmem:[%s0 + $0x25a] sm:$0xff]
  %v1943 = vld [vmem:[%s0 + $0x262] sm:$0xff]
  %v1944 = vld [vmem:[%s0 + $0x26a] sm:$0xff]
  %v1945 = vld [vmem:[%s0 + $0x272] sm:$0xff]
  %v1946 = vld [vmem:[%s0 + $0x27a] sm:$0xff]
  %v1947 = vld [vmem:[%s0 + $0x282] sm:$0xff]
  %v1948 = vld [vmem:[%s0 + $0x28a] sm:$0xff]
  %v1949 = vld [vmem:[%s0 + $0x292] sm:$0xff]
  %v1950 = vld [vmem:[%s1 + $0x60] sm:$0xff]
  %v1951 = vld [vmem:[%s1 + $0x68] sm:$0xff]
  %v1952 = vld [vmem:[%s1 + $0x70] sm:$0xff]
  %v1953 = vld [vmem:[%s1 + $0x78] sm:$0xff]
  %v1955 = vsel %vm193, %v1869, 0
  %v1958 = vsel %vm193, %v1870, 0
  %v1961 = vsel %vm193, %v1871, 0
  %v1964 = vsel %vm193, %v1872, 0
  %v1967 = vsel %vm193, %v1873, 0
  %v1970 = vsel %vm193, %v1874, 0
  %v1973 = vsel %vm193, %v1875, 0
  %v1976 = vsel %vm193, %v1876, 0
  %v1979 = vsel %vm193, %v1877, 0
  %v1982 = vsel %vm193, %v1878, 0
  %v1985 = vsel %vm193, %v1879, 0
  %v1988 = vsel %vm193, %v1880, 0
  %v1991 = vsel %vm193, %v1881, 0
  %v1994 = vsel %vm193, %v1882, 0
  %v1997 = vsel %vm193, %v1883, 0
  %v2000 = vsel %vm193, %v1884, 0
  %v2003 = vsel %vm193, %v1885, 0
  %v2006 = vsel %vm193, %v1886, 0
  %v2009 = vsel %vm193, %v1887, 0
  %v2012 = vsel %vm193, %v1888, 0
  %v2015 = vsel %vm193, %v1889, 0
  %v2018 = vsel %vm193, %v1890, 0
  %v2021 = vsel %vm193, %v1891, 0
  %v2024 = vsel %vm193, %v1892, 0
  %v2027 = vsel %vm193, %v1893, 0
  %v2030 = vsel %vm193, %v1894, 0
  %v2033 = vsel %vm193, %v1895, 0
  %v2036 = vsel %vm193, %v1896, 0
  %v2039 = vsel %vm193, %v1897, 0
  %v2042 = vsel %vm193, %v1898, 0
  %v2045 = vsel %vm193, %v1899, 0
  %v2048 = vsel %vm193, %v1900, 0
  %v2051 = vsel %vm193, %v1901, 0
  %v2054 = vsel %vm193, %v1902, 0
  %v2057 = vsel %vm193, %v1903, 0
  %v2060 = vsel %vm193, %v1904, 0
  %v2063 = vsel %vm193, %v1905, 0
  %v2066 = vsel %vm193, %v1906, 0
  %v2069 = vsel %vm193, %v1907, 0
  %v2072 = vsel %vm193, %v1908, 0
  %v2075 = vsel %vm193, %v1909, 0
  %v2078 = vsel %vm193, %v1910, 0
  %v2081 = vsel %vm193, %v1911, 0
  %v2084 = vsel %vm193, %v1912, 0
  %v2087 = vsel %vm193, %v1913, 0
  %v2090 = vsel %vm193, %v1914, 0
  %v2093 = vsel %vm193, %v1915, 0
  %v2096 = vsel %vm193, %v1916, 0
  %v2099 = vsel %vm193, %v1917, 0
  %v2102 = vsel %vm193, %v1918, 0
  %v2105 = vsel %vm193, %v1919, 0
  %v2108 = vsel %vm193, %v1920, 0
  %v2111 = vsel %vm193, %v1921, 0
  %v2114 = vsel %vm193, %v1922, 0
  %v2117 = vsel %vm193, %v1923, 0
  %v2120 = vsel %vm193, %v1924, 0
  %v2123 = vsel %vm193, %v1925, 0
  %v2126 = vsel %vm193, %v1926, 0
  %v2129 = vsel %vm193, %v1927, 0
  %v2132 = vsel %vm193, %v1928, 0
  %v2135 = vsel %vm193, %v1929, 0
  %v2138 = vsel %vm193, %v1930, 0
  %v2141 = vsel %vm193, %v1931, 0
  %v2144 = vsel %vm193, %v1932, 0
  %v2147 = vsel %vm193, %v1933, 0
  %v2150 = vsel %vm193, %v1934, 0
  %v2153 = vsel %vm193, %v1935, 0
  %v2156 = vsel %vm193, %v1936, 0
  %v2159 = vsel %vm193, %v1937, 0
  %v2162 = vsel %vm193, %v1938, 0
  %v2165 = vsel %vm193, %v1939, 0
  %v2168 = vsel %vm193, %v1940, 0
  %v2171 = vsel %vm193, %v1941, 0
  %v2174 = vsel %vm193, %v1942, 0
  %v2177 = vsel %vm193, %v1943, 0
  %v2180 = vsel %vm193, %v1944, 0
  %v2183 = vsel %vm193, %v1945, 0
  %v2186 = vsel %vm193, %v1946, 0
  %v2189 = vsel %vm193, %v1947, 0
  %v2192 = vsel %vm193, %v1948, 0
  %v2195 = vsel %vm193, %v1949, 0
  %2197 = vmatpush.msra.mxu0 0.0
  %2198 = vmatpush.msra.mxu0 0.0
  %2199 = vmatpush.msra.mxu0 0.0
  %2200 = vmatpush.msra.mxu0 0.0
  %2201 = vmatpush.msra.mxu0 0.0
  %2202 = vmatpush.msra.mxu0 0.0
  %2203 = vmatpush.msra.mxu0 0.0
  %2204 = vmatpush.msra.mxu0 0.0
  %2205 = vmatpush.msra.mxu0 0.0
  %2206 = vmatpush.msra.mxu0 0.0
  %2207 = vmatpush.msra.mxu0 0.0
  %2208 = vmatpush.msra.mxu0 0.0
  %2209 = vmatpush.msra.mxu0 %v1953
  %2210 = vmatpush.msra.mxu0 %v1952
  %2211 = vmatpush.msra.mxu0 %v1951
  %2212 = vmatpush.msra.mxu0 %v1950
  %2213 = vmatmul.f32.gmra.mxu0 %v1955
  %v2214 = vpop.f32.mrf.mxu0
  %v2215 = vadd.f32 0.0, %v2214
  %2216 = vmatmul.f32.gmra.mxu0 %v1958
  %v2217 = vpop.f32.mrf.mxu0
  %v2218 = vadd.f32 0.0, %v2217
  %2219 = vmatmul.f32.gmra.mxu0 %v1961
  %v2220 = vpop.f32.mrf.mxu0
  %v2221 = vadd.f32 0.0, %v2220
  %2222 = vmatmul.f32.gmra.mxu0 %v1964
  %v2223 = vpop.f32.mrf.mxu0
  %v2224 = vadd.f32 0.0, %v2223
  %2225 = vmatmul.f32.gmra.mxu0 %v1967
  %v2226 = vpop.f32.mrf.mxu0
  %v2227 = vadd.f32 0.0, %v2226
  %2228 = vmatmul.f32.gmra.mxu0 %v1970
  %v2229 = vpop.f32.mrf.mxu0
  %v2230 = vadd.f32 0.0, %v2229
  %2231 = vmatmul.f32.gmra.mxu0 %v1973
  %v2232 = vpop.f32.mrf.mxu0
  %v2233 = vadd.f32 0.0, %v2232
  %2234 = vmatmul.f32.gmra.mxu0 %v1976
  %v2235 = vpop.f32.mrf.mxu0
  %v2236 = vadd.f32 0.0, %v2235
  %2237 = vmatmul.f32.gmra.mxu0 %v1979
  %v2238 = vpop.f32.mrf.mxu0
  %v2239 = vadd.f32 0.0, %v2238
  %2240 = vmatmul.f32.gmra.mxu0 %v1982
  %v2241 = vpop.f32.mrf.mxu0
  %v2242 = vadd.f32 0.0, %v2241
  %2243 = vmatmul.f32.gmra.mxu0 %v1985
  %v2244 = vpop.f32.mrf.mxu0
  %v2245 = vadd.f32 0.0, %v2244
  %2246 = vmatmul.f32.gmra.mxu0 %v1988
  %v2247 = vpop.f32.mrf.mxu0
  %v2248 = vadd.f32 0.0, %v2247
  %2249 = vmatmul.f32.gmra.mxu0 %v1991
  %v2250 = vpop.f32.mrf.mxu0
  %v2251 = vadd.f32 0.0, %v2250
  %2252 = vmatmul.f32.gmra.mxu0 %v1994
  %v2253 = vpop.f32.mrf.mxu0
  %v2254 = vadd.f32 0.0, %v2253
  %2255 = vmatmul.f32.gmra.mxu0 %v1997
  %v2256 = vpop.f32.mrf.mxu0
  %v2257 = vadd.f32 0.0, %v2256
  %2258 = vmatmul.f32.gmra.mxu0 %v2000
  %v2259 = vpop.f32.mrf.mxu0
  %v2260 = vadd.f32 0.0, %v2259
  %2261 = vmatmul.f32.gmra.mxu0 %v2003
  %v2262 = vpop.f32.mrf.mxu0
  %v2263 = vadd.f32 0.0, %v2262
  %2264 = vmatmul.f32.gmra.mxu0 %v2006
  %v2265 = vpop.f32.mrf.mxu0
  %v2266 = vadd.f32 0.0, %v2265
  %2267 = vmatmul.f32.gmra.mxu0 %v2009
  %v2268 = vpop.f32.mrf.mxu0
  %v2269 = vadd.f32 0.0, %v2268
  %2270 = vmatmul.f32.gmra.mxu0 %v2012
  %v2271 = vpop.f32.mrf.mxu0
  %v2272 = vadd.f32 0.0, %v2271
  %2273 = vmatmul.f32.gmra.mxu0 %v2015
  %v2274 = vpop.f32.mrf.mxu0
  %v2275 = vadd.f32 0.0, %v2274
  %2276 = vmatmul.f32.gmra.mxu0 %v2018
  %v2277 = vpop.f32.mrf.mxu0
  %v2278 = vadd.f32 0.0, %v2277
  %2279 = vmatmul.f32.gmra.mxu0 %v2021
  %v2280 = vpop.f32.mrf.mxu0
  %v2281 = vadd.f32 0.0, %v2280
  %2282 = vmatmul.f32.gmra.mxu0 %v2024
  %v2283 = vpop.f32.mrf.mxu0
  %v2284 = vadd.f32 0.0, %v2283
  %2285 = vmatmul.f32.gmra.mxu0 %v2027
  %v2286 = vpop.f32.mrf.mxu0
  %v2287 = vadd.f32 0.0, %v2286
  %2288 = vmatmul.f32.gmra.mxu0 %v2030
  %v2289 = vpop.f32.mrf.mxu0
  %v2290 = vadd.f32 0.0, %v2289
  %2291 = vmatmul.f32.gmra.mxu0 %v2033
  %v2292 = vpop.f32.mrf.mxu0
  %v2293 = vadd.f32 0.0, %v2292
  %2294 = vmatmul.f32.gmra.mxu0 %v2036
  %v2295 = vpop.f32.mrf.mxu0
  %v2296 = vadd.f32 0.0, %v2295
  %2297 = vmatmul.f32.gmra.mxu0 %v2039
  %v2298 = vpop.f32.mrf.mxu0
  %v2299 = vadd.f32 0.0, %v2298
  %2300 = vmatmul.f32.gmra.mxu0 %v2042
  %v2301 = vpop.f32.mrf.mxu0
  %v2302 = vadd.f32 0.0, %v2301
  %2303 = vmatmul.f32.gmra.mxu0 %v2045
  %v2304 = vpop.f32.mrf.mxu0
  %v2305 = vadd.f32 0.0, %v2304
  %2306 = vmatmul.f32.gmra.mxu0 %v2048
  %v2307 = vpop.f32.mrf.mxu0
  %v2308 = vadd.f32 0.0, %v2307
  %2309 = vmatmul.f32.gmra.mxu0 %v2051
  %v2310 = vpop.f32.mrf.mxu0
  %v2311 = vadd.f32 0.0, %v2310
  %2312 = vmatmul.f32.gmra.mxu0 %v2054
  %v2313 = vpop.f32.mrf.mxu0
  %v2314 = vadd.f32 0.0, %v2313
  %2315 = vmatmul.f32.gmra.mxu0 %v2057
  %v2316 = vpop.f32.mrf.mxu0
  %v2317 = vadd.f32 0.0, %v2316
  %2318 = vmatmul.f32.gmra.mxu0 %v2060
  %v2319 = vpop.f32.mrf.mxu0
  %v2320 = vadd.f32 0.0, %v2319
  %2321 = vmatmul.f32.gmra.mxu0 %v2063
  %v2322 = vpop.f32.mrf.mxu0
  %v2323 = vadd.f32 0.0, %v2322
  %2324 = vmatmul.f32.gmra.mxu0 %v2066
  %v2325 = vpop.f32.mrf.mxu0
  %v2326 = vadd.f32 0.0, %v2325
  %2327 = vmatmul.f32.gmra.mxu0 %v2069
  %v2328 = vpop.f32.mrf.mxu0
  %v2329 = vadd.f32 0.0, %v2328
  %2330 = vmatmul.f32.gmra.mxu0 %v2072
  %v2331 = vpop.f32.mrf.mxu0
  %v2332 = vadd.f32 0.0, %v2331
  %2333 = vmatmul.f32.gmra.mxu0 %v2075
  %v2334 = vpop.f32.mrf.mxu0
  %v2335 = vadd.f32 0.0, %v2334
  %2336 = vmatmul.f32.gmra.mxu0 %v2078
  %v2337 = vpop.f32.mrf.mxu0
  %v2338 = vadd.f32 0.0, %v2337
  %2339 = vmatmul.f32.gmra.mxu0 %v2081
  %v2340 = vpop.f32.mrf.mxu0
  %v2341 = vadd.f32 0.0, %v2340
  %2342 = vmatmul.f32.gmra.mxu0 %v2084
  %v2343 = vpop.f32.mrf.mxu0
  %v2344 = vadd.f32 0.0, %v2343
  %2345 = vmatmul.f32.gmra.mxu0 %v2087
  %v2346 = vpop.f32.mrf.mxu0
  %v2347 = vadd.f32 0.0, %v2346
  %2348 = vmatmul.f32.gmra.mxu0 %v2090
  %v2349 = vpop.f32.mrf.mxu0
  %v2350 = vadd.f32 0.0, %v2349
  %2351 = vmatmul.f32.gmra.mxu0 %v2093
  %v2352 = vpop.f32.mrf.mxu0
  %v2353 = vadd.f32 0.0, %v2352
  %2354 = vmatmul.f32.gmra.mxu0 %v2096
  %v2355 = vpop.f32.mrf.mxu0
  %v2356 = vadd.f32 0.0, %v2355
  %2357 = vmatmul.f32.gmra.mxu0 %v2099
  %v2358 = vpop.f32.mrf.mxu0
  %v2359 = vadd.f32 0.0, %v2358
  %2360 = vmatmul.f32.gmra.mxu0 %v2102
  %v2361 = vpop.f32.mrf.mxu0
  %v2362 = vadd.f32 0.0, %v2361
  %2363 = vmatmul.f32.gmra.mxu0 %v2105
  %v2364 = vpop.f32.mrf.mxu0
  %v2365 = vadd.f32 0.0, %v2364
  %2366 = vmatmul.f32.gmra.mxu0 %v2108
  %v2367 = vpop.f32.mrf.mxu0
  %v2368 = vadd.f32 0.0, %v2367
  %2369 = vmatmul.f32.gmra.mxu0 %v2111
  %v2370 = vpop.f32.mrf.mxu0
  %v2371 = vadd.f32 0.0, %v2370
  %2372 = vmatmul.f32.gmra.mxu0 %v2114
  %v2373 = vpop.f32.mrf.mxu0
  %v2374 = vadd.f32 0.0, %v2373
  %2375 = vmatmul.f32.gmra.mxu0 %v2117
  %v2376 = vpop.f32.mrf.mxu0
  %v2377 = vadd.f32 0.0, %v2376
  %2378 = vmatmul.f32.gmra.mxu0 %v2120
  %v2379 = vpop.f32.mrf.mxu0
  %v2380 = vadd.f32 0.0, %v2379
  %2381 = vmatmul.f32.gmra.mxu0 %v2123
  %v2382 = vpop.f32.mrf.mxu0
  %v2383 = vadd.f32 0.0, %v2382
  %2384 = vmatmul.f32.gmra.mxu0 %v2126
  %v2385 = vpop.f32.mrf.mxu0
  %v2386 = vadd.f32 0.0, %v2385
  %2387 = vmatmul.f32.gmra.mxu0 %v2129
  %v2388 = vpop.f32.mrf.mxu0
  %v2389 = vadd.f32 0.0, %v2388
  %2390 = vmatmul.f32.gmra.mxu0 %v2132
  %v2391 = vpop.f32.mrf.mxu0
  %v2392 = vadd.f32 0.0, %v2391
  %2393 = vmatmul.f32.gmra.mxu0 %v2135
  %v2394 = vpop.f32.mrf.mxu0
  %v2395 = vadd.f32 0.0, %v2394
  %2396 = vmatmul.f32.gmra.mxu0 %v2138
  %v2397 = vpop.f32.mrf.mxu0
  %v2398 = vadd.f32 0.0, %v2397
  %2399 = vmatmul.f32.gmra.mxu0 %v2141
  %v2400 = vpop.f32.mrf.mxu0
  %v2401 = vadd.f32 0.0, %v2400
  %2402 = vmatmul.f32.gmra.mxu0 %v2144
  %v2403 = vpop.f32.mrf.mxu0
  %v2404 = vadd.f32 0.0, %v2403
  %2405 = vmatmul.f32.gmra.mxu0 %v2147
  %v2406 = vpop.f32.mrf.mxu0
  %v2407 = vadd.f32 0.0, %v2406
  %2408 = vmatmul.f32.gmra.mxu0 %v2150
  %v2409 = vpop.f32.mrf.mxu0
  %v2410 = vadd.f32 0.0, %v2409
  %2411 = vmatmul.f32.gmra.mxu0 %v2153
  %v2412 = vpop.f32.mrf.mxu0
  %v2413 = vadd.f32 0.0, %v2412
  %2414 = vmatmul.f32.gmra.mxu0 %v2156
  %v2415 = vpop.f32.mrf.mxu0
  %v2416 = vadd.f32 0.0, %v2415
  %2417 = vmatmul.f32.gmra.mxu0 %v2159
  %v2418 = vpop.f32.mrf.mxu0
  %v2419 = vadd.f32 0.0, %v2418
  %2420 = vmatmul.f32.gmra.mxu0 %v2162
  %v2421 = vpop.f32.mrf.mxu0
  %v2422 = vadd.f32 0.0, %v2421
  %2423 = vmatmul.f32.gmra.mxu0 %v2165
  %v2424 = vpop.f32.mrf.mxu0
  %v2425 = vadd.f32 0.0, %v2424
  %2426 = vmatmul.f32.gmra.mxu0 %v2168
  %v2427 = vpop.f32.mrf.mxu0
  %v2428 = vadd.f32 0.0, %v2427
  %2429 = vmatmul.f32.gmra.mxu0 %v2171
  %v2430 = vpop.f32.mrf.mxu0
  %v2431 = vadd.f32 0.0, %v2430
  %2432 = vmatmul.f32.gmra.mxu0 %v2174
  %v2433 = vpop.f32.mrf.mxu0
  %v2434 = vadd.f32 0.0, %v2433
  %2435 = vmatmul.f32.gmra.mxu0 %v2177
  %v2436 = vpop.f32.mrf.mxu0
  %v2437 = vadd.f32 0.0, %v2436
  %2438 = vmatmul.f32.gmra.mxu0 %v2180
  %v2439 = vpop.f32.mrf.mxu0
  %v2440 = vadd.f32 0.0, %v2439
  %2441 = vmatmul.f32.gmra.mxu0 %v2183
  %v2442 = vpop.f32.mrf.mxu0
  %v2443 = vadd.f32 0.0, %v2442
  %2444 = vmatmul.f32.gmra.mxu0 %v2186
  %v2445 = vpop.f32.mrf.mxu0
  %v2446 = vadd.f32 0.0, %v2445
  %2447 = vmatmul.f32.gmra.mxu0 %v2189
  %v2448 = vpop.f32.mrf.mxu0
  %v2449 = vadd.f32 0.0, %v2448
  %2450 = vmatmul.f32.gmra.mxu0 %v2192
  %v2451 = vpop.f32.mrf.mxu0
  %v2452 = vadd.f32 0.0, %v2451
  %2453 = vmatmul.f32.gmra.mxu0 %v2195
  %v2454 = vpop.f32.mrf.mxu0
  %v2455 = vadd.f32 0.0, %v2454
  %2456 = vdwg.mxu0
  %v2457 = vadd.f32 %v1788, %v2215
  %v2458 = vadd.f32 %v1789, %v2218
  %v2459 = vadd.f32 %v1790, %v2221
  %v2460 = vadd.f32 %v1791, %v2224
  %v2461 = vadd.f32 %v1792, %v2227
  %v2462 = vadd.f32 %v1793, %v2230
  %v2463 = vadd.f32 %v1794, %v2233
  %v2464 = vadd.f32 %v1795, %v2236
  %v2465 = vadd.f32 %v1796, %v2239
  %v2466 = vadd.f32 %v1797, %v2242
  %v2467 = vadd.f32 %v1798, %v2245
  %v2468 = vadd.f32 %v1799, %v2248
  %v2469 = vadd.f32 %v1800, %v2251
  %v2470 = vadd.f32 %v1801, %v2254
  %v2471 = vadd.f32 %v1802, %v2257
  %v2472 = vadd.f32 %v1803, %v2260
  %v2473 = vadd.f32 %v1804, %v2263
  %v2474 = vadd.f32 %v1805, %v2266
  %v2475 = vadd.f32 %v1806, %v2269
  %v2476 = vadd.f32 %v1807, %v2272
  %v2477 = vadd.f32 %v1808, %v2275
  %v2478 = vadd.f32 %v1809, %v2278
  %v2479 = vadd.f32 %v1810, %v2281
  %v2480 = vadd.f32 %v1811, %v2284
  %v2481 = vadd.f32 %v1812, %v2287
  %v2482 = vadd.f32 %v1813, %v2290
  %v2483 = vadd.f32 %v1814, %v2293
  %v2484 = vadd.f32 %v1815, %v2296
  %v2485 = vadd.f32 %v1816, %v2299
  %v2486 = vadd.f32 %v1817, %v2302
  %v2487 = vadd.f32 %v1818, %v2305
  %v2488 = vadd.f32 %v1819, %v2308
  %v2489 = vadd.f32 %v1820, %v2311
  %v2490 = vadd.f32 %v1821, %v2314
  %v2491 = vadd.f32 %v1822, %v2317
  %v2492 = vadd.f32 %v1823, %v2320
  %v2493 = vadd.f32 %v1824, %v2323
  %v2494 = vadd.f32 %v1825, %v2326
  %v2495 = vadd.f32 %v1826, %v2329
  %v2496 = vadd.f32 %v1827, %v2332
  %v2497 = vadd.f32 %v1828, %v2335
  %v2498 = vadd.f32 %v1829, %v2338
  %v2499 = vadd.f32 %v1830, %v2341
  %v2500 = vadd.f32 %v1831, %v2344
  %v2501 = vadd.f32 %v1832, %v2347
  %v2502 = vadd.f32 %v1833, %v2350
  %v2503 = vadd.f32 %v1834, %v2353
  %v2504 = vadd.f32 %v1835, %v2356
  %v2505 = vadd.f32 %v1836, %v2359
  %v2506 = vadd.f32 %v1837, %v2362
  %v2507 = vadd.f32 %v1838, %v2365
  %v2508 = vadd.f32 %v1839, %v2368
  %v2509 = vadd.f32 %v1840, %v2371
  %v2510 = vadd.f32 %v1841, %v2374
  %v2511 = vadd.f32 %v1842, %v2377
  %v2512 = vadd.f32 %v1843, %v2380
  %v2513 = vadd.f32 %v1844, %v2383
  %v2514 = vadd.f32 %v1845, %v2386
  %v2515 = vadd.f32 %v1846, %v2389
  %v2516 = vadd.f32 %v1847, %v2392
  %v2517 = vadd.f32 %v1848, %v2395
  %v2518 = vadd.f32 %v1849, %v2398
  %v2519 = vadd.f32 %v1850, %v2401
  %v2520 = vadd.f32 %v1851, %v2404
  %v2521 = vadd.f32 %v1852, %v2407
  %v2522 = vadd.f32 %v1853, %v2410
  %v2523 = vadd.f32 %v1854, %v2413
  %v2524 = vadd.f32 %v1855, %v2416
  %v2525 = vadd.f32 %v1856, %v2419
  %v2526 = vadd.f32 %v1857, %v2422
  %v2527 = vadd.f32 %v1858, %v2425
  %v2528 = vadd.f32 %v1859, %v2428
  %v2529 = vadd.f32 %v1860, %v2431
  %v2530 = vadd.f32 %v1861, %v2434
  %v2531 = vadd.f32 %v1862, %v2437
  %v2532 = vadd.f32 %v1863, %v2440
  %v2533 = vadd.f32 %v1864, %v2443
  %v2534 = vadd.f32 %v1865, %v2446
  %v2535 = vadd.f32 %v1866, %v2449
  %v2536 = vadd.f32 %v1867, %v2452
  %v2537 = vadd.f32 %v1868, %v2455
  %v2538 = vld [vmem:[%s0 + $0x13] sm:$0xff]
  %v2539 = vld [vmem:[%s0 + $0x1b] sm:$0xff]
  %v2540 = vld [vmem:[%s0 + $0x23] sm:$0xff]
  %v2541 = vld [vmem:[%s0 + $0x2b] sm:$0xff]
  %v2542 = vld [vmem:[%s0 + $0x33] sm:$0xff]
  %v2543 = vld [vmem:[%s0 + $0x3b] sm:$0xff]
  %v2544 = vld [vmem:[%s0 + $0x43] sm:$0xff]
  %v2545 = vld [vmem:[%s0 + $0x4b] sm:$0xff]
  %v2546 = vld [vmem:[%s0 + $0x53] sm:$0xff]
  %v2547 = vld [vmem:[%s0 + $0x5b] sm:$0xff]
  %v2548 = vld [vmem:[%s0 + $0x63] sm:$0xff]
  %v2549 = vld [vmem:[%s0 + $0x6b] sm:$0xff]
  %v2550 = vld [vmem:[%s0 + $0x73] sm:$0xff]
  %v2551 = vld [vmem:[%s0 + $0x7b] sm:$0xff]
  %v2552 = vld [vmem:[%s0 + $0x83] sm:$0xff]
  %v2553 = vld [vmem:[%s0 + $0x8b] sm:$0xff]
  %v2554 = vld [vmem:[%s0 + $0x93] sm:$0xff]
  %v2555 = vld [vmem:[%s0 + $0x9b] sm:$0xff]
  %v2556 = vld [vmem:[%s0 + $0xa3] sm:$0xff]
  %v2557 = vld [vmem:[%s0 + $0xab] sm:$0xff]
  %v2558 = vld [vmem:[%s0 + $0xb3] sm:$0xff]
  %v2559 = vld [vmem:[%s0 + $0xbb] sm:$0xff]
  %v2560 = vld [vmem:[%s0 + $0xc3] sm:$0xff]
  %v2561 = vld [vmem:[%s0 + $0xcb] sm:$0xff]
  %v2562 = vld [vmem:[%s0 + $0xd3] sm:$0xff]
  %v2563 = vld [vmem:[%s0 + $0xdb] sm:$0xff]
  %v2564 = vld [vmem:[%s0 + $0xe3] sm:$0xff]
  %v2565 = vld [vmem:[%s0 + $0xeb] sm:$0xff]
  %v2566 = vld [vmem:[%s0 + $0xf3] sm:$0xff]
  %v2567 = vld [vmem:[%s0 + $0xfb] sm:$0xff]
  %v2568 = vld [vmem:[%s0 + $0x103] sm:$0xff]
  %v2569 = vld [vmem:[%s0 + $0x10b] sm:$0xff]
  %v2570 = vld [vmem:[%s0 + $0x113] sm:$0xff]
  %v2571 = vld [vmem:[%s0 + $0x11b] sm:$0xff]
  %v2572 = vld [vmem:[%s0 + $0x123] sm:$0xff]
  %v2573 = vld [vmem:[%s0 + $0x12b] sm:$0xff]
  %v2574 = vld [vmem:[%s0 + $0x133] sm:$0xff]
  %v2575 = vld [vmem:[%s0 + $0x13b] sm:$0xff]
  %v2576 = vld [vmem:[%s0 + $0x143] sm:$0xff]
  %v2577 = vld [vmem:[%s0 + $0x14b] sm:$0xff]
  %v2578 = vld [vmem:[%s0 + $0x153] sm:$0xff]
  %v2579 = vld [vmem:[%s0 + $0x15b] sm:$0xff]
  %v2580 = vld [vmem:[%s0 + $0x163] sm:$0xff]
  %v2581 = vld [vmem:[%s0 + $0x16b] sm:$0xff]
  %v2582 = vld [vmem:[%s0 + $0x173] sm:$0xff]
  %v2583 = vld [vmem:[%s0 + $0x17b] sm:$0xff]
  %v2584 = vld [vmem:[%s0 + $0x183] sm:$0xff]
  %v2585 = vld [vmem:[%s0 + $0x18b] sm:$0xff]
  %v2586 = vld [vmem:[%s0 + $0x193] sm:$0xff]
  %v2587 = vld [vmem:[%s0 + $0x19b] sm:$0xff]
  %v2588 = vld [vmem:[%s0 + $0x1a3] sm:$0xff]
  %v2589 = vld [vmem:[%s0 + $0x1ab] sm:$0xff]
  %v2590 = vld [vmem:[%s0 + $0x1b3] sm:$0xff]
  %v2591 = vld [vmem:[%s0 + $0x1bb] sm:$0xff]
  %v2592 = vld [vmem:[%s0 + $0x1c3] sm:$0xff]
  %v2593 = vld [vmem:[%s0 + $0x1cb] sm:$0xff]
  %v2594 = vld [vmem:[%s0 + $0x1d3] sm:$0xff]
  %v2595 = vld [vmem:[%s0 + $0x1db] sm:$0xff]
  %v2596 = vld [vmem:[%s0 + $0x1e3] sm:$0xff]
  %v2597 = vld [vmem:[%s0 + $0x1eb] sm:$0xff]
  %v2598 = vld [vmem:[%s0 + $0x1f3] sm:$0xff]
  %v2599 = vld [vmem:[%s0 + $0x1fb] sm:$0xff]
  %v2600 = vld [vmem:[%s0 + $0x203] sm:$0xff]
  %v2601 = vld [vmem:[%s0 + $0x20b] sm:$0xff]
  %v2602 = vld [vmem:[%s0 + $0x213] sm:$0xff]
  %v2603 = vld [vmem:[%s0 + $0x21b] sm:$0xff]
  %v2604 = vld [vmem:[%s0 + $0x223] sm:$0xff]
  %v2605 = vld [vmem:[%s0 + $0x22b] sm:$0xff]
  %v2606 = vld [vmem:[%s0 + $0x233] sm:$0xff]
  %v2607 = vld [vmem:[%s0 + $0x23b] sm:$0xff]
  %v2608 = vld [vmem:[%s0 + $0x243] sm:$0xff]
  %v2609 = vld [vmem:[%s0 + $0x24b] sm:$0xff]
  %v2610 = vld [vmem:[%s0 + $0x253] sm:$0xff]
  %v2611 = vld [vmem:[%s0 + $0x25b] sm:$0xff]
  %v2612 = vld [vmem:[%s0 + $0x263] sm:$0xff]
  %v2613 = vld [vmem:[%s0 + $0x26b] sm:$0xff]
  %v2614 = vld [vmem:[%s0 + $0x273] sm:$0xff]
  %v2615 = vld [vmem:[%s0 + $0x27b] sm:$0xff]
  %v2616 = vld [vmem:[%s0 + $0x283] sm:$0xff]
  %v2617 = vld [vmem:[%s0 + $0x28b] sm:$0xff]
  %v2618 = vld [vmem:[%s0 + $0x293] sm:$0xff]
  %v2619 = vld [vmem:[%s1 + $0x80] sm:$0xff]
  %v2620 = vld [vmem:[%s1 + $0x88] sm:$0xff]
  %v2621 = vld [vmem:[%s1 + $0x90] sm:$0xff]
  %v2622 = vld [vmem:[%s1 + $0x98] sm:$0xff]
  %v2624 = vsel %vm193, %v2538, 0
  %v2627 = vsel %vm193, %v2539, 0
  %v2630 = vsel %vm193, %v2540, 0
  %v2633 = vsel %vm193, %v2541, 0
  %v2636 = vsel %vm193, %v2542, 0
  %v2639 = vsel %vm193, %v2543, 0
  %v2642 = vsel %vm193, %v2544, 0
  %v2645 = vsel %vm193, %v2545, 0
  %v2648 = vsel %vm193, %v2546, 0
  %v2651 = vsel %vm193, %v2547, 0
  %v2654 = vsel %vm193, %v2548, 0
  %v2657 = vsel %vm193, %v2549, 0
  %v2660 = vsel %vm193, %v2550, 0
  %v2663 = vsel %vm193, %v2551, 0
  %v2666 = vsel %vm193, %v2552, 0
  %v2669 = vsel %vm193, %v2553, 0
  %v2672 = vsel %vm193, %v2554, 0
  %v2675 = vsel %vm193, %v2555, 0
  %v2678 = vsel %vm193, %v2556, 0
  %v2681 = vsel %vm193, %v2557, 0
  %v2684 = vsel %vm193, %v2558, 0
  %v2687 = vsel %vm193, %v2559, 0
  %v2690 = vsel %vm193, %v2560, 0
  %v2693 = vsel %vm193, %v2561, 0
  %v2696 = vsel %vm193, %v2562, 0
  %v2699 = vsel %vm193, %v2563, 0
  %v2702 = vsel %vm193, %v2564, 0
  %v2705 = vsel %vm193, %v2565, 0
  %v2708 = vsel %vm193, %v2566, 0
  %v2711 = vsel %vm193, %v2567, 0
  %v2714 = vsel %vm193, %v2568, 0
  %v2717 = vsel %vm193, %v2569, 0
  %v2720 = vsel %vm193, %v2570, 0
  %v2723 = vsel %vm193, %v2571, 0
  %v2726 = vsel %vm193, %v2572, 0
  %v2729 = vsel %vm193, %v2573, 0
  %v2732 = vsel %vm193, %v2574, 0
  %v2735 = vsel %vm193, %v2575, 0
  %v2738 = vsel %vm193, %v2576, 0
  %v2741 = vsel %vm193, %v2577, 0
  %v2744 = vsel %vm193, %v2578, 0
  %v2747 = vsel %vm193, %v2579, 0
  %v2750 = vsel %vm193, %v2580, 0
  %v2753 = vsel %vm193, %v2581, 0
  %v2756 = vsel %vm193, %v2582, 0
  %v2759 = vsel %vm193, %v2583, 0
  %v2762 = vsel %vm193, %v2584, 0
  %v2765 = vsel %vm193, %v2585, 0
  %v2768 = vsel %vm193, %v2586, 0
  %v2771 = vsel %vm193, %v2587, 0
  %v2774 = vsel %vm193, %v2588, 0
  %v2777 = vsel %vm193, %v2589, 0
  %v2780 = vsel %vm193, %v2590, 0
  %v2783 = vsel %vm193, %v2591, 0
  %v2786 = vsel %vm193, %v2592, 0
  %v2789 = vsel %vm193, %v2593, 0
  %v2792 = vsel %vm193, %v2594, 0
  %v2795 = vsel %vm193, %v2595, 0
  %v2798 = vsel %vm193, %v2596, 0
  %v2801 = vsel %vm193, %v2597, 0
  %v2804 = vsel %vm193, %v2598, 0
  %v2807 = vsel %vm193, %v2599, 0
  %v2810 = vsel %vm193, %v2600, 0
  %v2813 = vsel %vm193, %v2601, 0
  %v2816 = vsel %vm193, %v2602, 0
  %v2819 = vsel %vm193, %v2603, 0
  %v2822 = vsel %vm193, %v2604, 0
  %v2825 = vsel %vm193, %v2605, 0
  %v2828 = vsel %vm193, %v2606, 0
  %v2831 = vsel %vm193, %v2607, 0
  %v2834 = vsel %vm193, %v2608, 0
  %v2837 = vsel %vm193, %v2609, 0
  %v2840 = vsel %vm193, %v2610, 0
  %v2843 = vsel %vm193, %v2611, 0
  %v2846 = vsel %vm193, %v2612, 0
  %v2849 = vsel %vm193, %v2613, 0
  %v2852 = vsel %vm193, %v2614, 0
  %v2855 = vsel %vm193, %v2615, 0
  %v2858 = vsel %vm193, %v2616, 0
  %v2861 = vsel %vm193, %v2617, 0
  %v2864 = vsel %vm193, %v2618, 0
  %2866 = vmatpush.msra.mxu0 0.0
  %2867 = vmatpush.msra.mxu0 0.0
  %2868 = vmatpush.msra.mxu0 0.0
  %2869 = vmatpush.msra.mxu0 0.0
  %2870 = vmatpush.msra.mxu0 0.0
  %2871 = vmatpush.msra.mxu0 0.0
  %2872 = vmatpush.msra.mxu0 0.0
  %2873 = vmatpush.msra.mxu0 0.0
  %2874 = vmatpush.msra.mxu0 0.0
  %2875 = vmatpush.msra.mxu0 0.0
  %2876 = vmatpush.msra.mxu0 0.0
  %2877 = vmatpush.msra.mxu0 0.0
  %2878 = vmatpush.msra.mxu0 %v2622
  %2879 = vmatpush.msra.mxu0 %v2621
  %2880 = vmatpush.msra.mxu0 %v2620
  %2881 = vmatpush.msra.mxu0 %v2619
  %2882 = vmatmul.f32.gmra.mxu0 %v2624
  %v2883 = vpop.f32.mrf.mxu0
  %v2884 = vadd.f32 0.0, %v2883
  %2885 = vmatmul.f32.gmra.mxu0 %v2627
  %v2886 = vpop.f32.mrf.mxu0
  %v2887 = vadd.f32 0.0, %v2886
  %2888 = vmatmul.f32.gmra.mxu0 %v2630
  %v2889 = vpop.f32.mrf.mxu0
  %v2890 = vadd.f32 0.0, %v2889
  %2891 = vmatmul.f32.gmra.mxu0 %v2633
  %v2892 = vpop.f32.mrf.mxu0
  %v2893 = vadd.f32 0.0, %v2892
  %2894 = vmatmul.f32.gmra.mxu0 %v2636
  %v2895 = vpop.f32.mrf.mxu0
  %v2896 = vadd.f32 0.0, %v2895
  %2897 = vmatmul.f32.gmra.mxu0 %v2639
  %v2898 = vpop.f32.mrf.mxu0
  %v2899 = vadd.f32 0.0, %v2898
  %2900 = vmatmul.f32.gmra.mxu0 %v2642
  %v2901 = vpop.f32.mrf.mxu0
  %v2902 = vadd.f32 0.0, %v2901
  %2903 = vmatmul.f32.gmra.mxu0 %v2645
  %v2904 = vpop.f32.mrf.mxu0
  %v2905 = vadd.f32 0.0, %v2904
  %2906 = vmatmul.f32.gmra.mxu0 %v2648
  %v2907 = vpop.f32.mrf.mxu0
  %v2908 = vadd.f32 0.0, %v2907
  %2909 = vmatmul.f32.gmra.mxu0 %v2651
  %v2910 = vpop.f32.mrf.mxu0
  %v2911 = vadd.f32 0.0, %v2910
  %2912 = vmatmul.f32.gmra.mxu0 %v2654
  %v2913 = vpop.f32.mrf.mxu0
  %v2914 = vadd.f32 0.0, %v2913
  %2915 = vmatmul.f32.gmra.mxu0 %v2657
  %v2916 = vpop.f32.mrf.mxu0
  %v2917 = vadd.f32 0.0, %v2916
  %2918 = vmatmul.f32.gmra.mxu0 %v2660
  %v2919 = vpop.f32.mrf.mxu0
  %v2920 = vadd.f32 0.0, %v2919
  %2921 = vmatmul.f32.gmra.mxu0 %v2663
  %v2922 = vpop.f32.mrf.mxu0
  %v2923 = vadd.f32 0.0, %v2922
  %2924 = vmatmul.f32.gmra.mxu0 %v2666
  %v2925 = vpop.f32.mrf.mxu0
  %v2926 = vadd.f32 0.0, %v2925
  %2927 = vmatmul.f32.gmra.mxu0 %v2669
  %v2928 = vpop.f32.mrf.mxu0
  %v2929 = vadd.f32 0.0, %v2928
  %2930 = vmatmul.f32.gmra.mxu0 %v2672
  %v2931 = vpop.f32.mrf.mxu0
  %v2932 = vadd.f32 0.0, %v2931
  %2933 = vmatmul.f32.gmra.mxu0 %v2675
  %v2934 = vpop.f32.mrf.mxu0
  %v2935 = vadd.f32 0.0, %v2934
  %2936 = vmatmul.f32.gmra.mxu0 %v2678
  %v2937 = vpop.f32.mrf.mxu0
  %v2938 = vadd.f32 0.0, %v2937
  %2939 = vmatmul.f32.gmra.mxu0 %v2681
  %v2940 = vpop.f32.mrf.mxu0
  %v2941 = vadd.f32 0.0, %v2940
  %2942 = vmatmul.f32.gmra.mxu0 %v2684
  %v2943 = vpop.f32.mrf.mxu0
  %v2944 = vadd.f32 0.0, %v2943
  %2945 = vmatmul.f32.gmra.mxu0 %v2687
  %v2946 = vpop.f32.mrf.mxu0
  %v2947 = vadd.f32 0.0, %v2946
  %2948 = vmatmul.f32.gmra.mxu0 %v2690
  %v2949 = vpop.f32.mrf.mxu0
  %v2950 = vadd.f32 0.0, %v2949
  %2951 = vmatmul.f32.gmra.mxu0 %v2693
  %v2952 = vpop.f32.mrf.mxu0
  %v2953 = vadd.f32 0.0, %v2952
  %2954 = vmatmul.f32.gmra.mxu0 %v2696
  %v2955 = vpop.f32.mrf.mxu0
  %v2956 = vadd.f32 0.0, %v2955
  %2957 = vmatmul.f32.gmra.mxu0 %v2699
  %v2958 = vpop.f32.mrf.mxu0
  %v2959 = vadd.f32 0.0, %v2958
  %2960 = vmatmul.f32.gmra.mxu0 %v2702
  %v2961 = vpop.f32.mrf.mxu0
  %v2962 = vadd.f32 0.0, %v2961
  %2963 = vmatmul.f32.gmra.mxu0 %v2705
  %v2964 = vpop.f32.mrf.mxu0
  %v2965 = vadd.f32 0.0, %v2964
  %2966 = vmatmul.f32.gmra.mxu0 %v2708
  %v2967 = vpop.f32.mrf.mxu0
  %v2968 = vadd.f32 0.0, %v2967
  %2969 = vmatmul.f32.gmra.mxu0 %v2711
  %v2970 = vpop.f32.mrf.mxu0
  %v2971 = vadd.f32 0.0, %v2970
  %2972 = vmatmul.f32.gmra.mxu0 %v2714
  %v2973 = vpop.f32.mrf.mxu0
  %v2974 = vadd.f32 0.0, %v2973
  %2975 = vmatmul.f32.gmra.mxu0 %v2717
  %v2976 = vpop.f32.mrf.mxu0
  %v2977 = vadd.f32 0.0, %v2976
  %2978 = vmatmul.f32.gmra.mxu0 %v2720
  %v2979 = vpop.f32.mrf.mxu0
  %v2980 = vadd.f32 0.0, %v2979
  %2981 = vmatmul.f32.gmra.mxu0 %v2723
  %v2982 = vpop.f32.mrf.mxu0
  %v2983 = vadd.f32 0.0, %v2982
  %2984 = vmatmul.f32.gmra.mxu0 %v2726
  %v2985 = vpop.f32.mrf.mxu0
  %v2986 = vadd.f32 0.0, %v2985
  %2987 = vmatmul.f32.gmra.mxu0 %v2729
  %v2988 = vpop.f32.mrf.mxu0
  %v2989 = vadd.f32 0.0, %v2988
  %2990 = vmatmul.f32.gmra.mxu0 %v2732
  %v2991 = vpop.f32.mrf.mxu0
  %v2992 = vadd.f32 0.0, %v2991
  %2993 = vmatmul.f32.gmra.mxu0 %v2735
  %v2994 = vpop.f32.mrf.mxu0
  %v2995 = vadd.f32 0.0, %v2994
  %2996 = vmatmul.f32.gmra.mxu0 %v2738
  %v2997 = vpop.f32.mrf.mxu0
  %v2998 = vadd.f32 0.0, %v2997
  %2999 = vmatmul.f32.gmra.mxu0 %v2741
  %v3000 = vpop.f32.mrf.mxu0
  %v3001 = vadd.f32 0.0, %v3000
  %3002 = vmatmul.f32.gmra.mxu0 %v2744
  %v3003 = vpop.f32.mrf.mxu0
  %v3004 = vadd.f32 0.0, %v3003
  %3005 = vmatmul.f32.gmra.mxu0 %v2747
  %v3006 = vpop.f32.mrf.mxu0
  %v3007 = vadd.f32 0.0, %v3006
  %3008 = vmatmul.f32.gmra.mxu0 %v2750
  %v3009 = vpop.f32.mrf.mxu0
  %v3010 = vadd.f32 0.0, %v3009
  %3011 = vmatmul.f32.gmra.mxu0 %v2753
  %v3012 = vpop.f32.mrf.mxu0
  %v3013 = vadd.f32 0.0, %v3012
  %3014 = vmatmul.f32.gmra.mxu0 %v2756
  %v3015 = vpop.f32.mrf.mxu0
  %v3016 = vadd.f32 0.0, %v3015
  %3017 = vmatmul.f32.gmra.mxu0 %v2759
  %v3018 = vpop.f32.mrf.mxu0
  %v3019 = vadd.f32 0.0, %v3018
  %3020 = vmatmul.f32.gmra.mxu0 %v2762
  %v3021 = vpop.f32.mrf.mxu0
  %v3022 = vadd.f32 0.0, %v3021
  %3023 = vmatmul.f32.gmra.mxu0 %v2765
  %v3024 = vpop.f32.mrf.mxu0
  %v3025 = vadd.f32 0.0, %v3024
  %3026 = vmatmul.f32.gmra.mxu0 %v2768
  %v3027 = vpop.f32.mrf.mxu0
  %v3028 = vadd.f32 0.0, %v3027
  %3029 = vmatmul.f32.gmra.mxu0 %v2771
  %v3030 = vpop.f32.mrf.mxu0
  %v3031 = vadd.f32 0.0, %v3030
  %3032 = vmatmul.f32.gmra.mxu0 %v2774
  %v3033 = vpop.f32.mrf.mxu0
  %v3034 = vadd.f32 0.0, %v3033
  %3035 = vmatmul.f32.gmra.mxu0 %v2777
  %v3036 = vpop.f32.mrf.mxu0
  %v3037 = vadd.f32 0.0, %v3036
  %3038 = vmatmul.f32.gmra.mxu0 %v2780
  %v3039 = vpop.f32.mrf.mxu0
  %v3040 = vadd.f32 0.0, %v3039
  %3041 = vmatmul.f32.gmra.mxu0 %v2783
  %v3042 = vpop.f32.mrf.mxu0
  %v3043 = vadd.f32 0.0, %v3042
  %3044 = vmatmul.f32.gmra.mxu0 %v2786
  %v3045 = vpop.f32.mrf.mxu0
  %v3046 = vadd.f32 0.0, %v3045
  %3047 = vmatmul.f32.gmra.mxu0 %v2789
  %v3048 = vpop.f32.mrf.mxu0
  %v3049 = vadd.f32 0.0, %v3048
  %3050 = vmatmul.f32.gmra.mxu0 %v2792
  %v3051 = vpop.f32.mrf.mxu0
  %v3052 = vadd.f32 0.0, %v3051
  %3053 = vmatmul.f32.gmra.mxu0 %v2795
  %v3054 = vpop.f32.mrf.mxu0
  %v3055 = vadd.f32 0.0, %v3054
  %3056 = vmatmul.f32.gmra.mxu0 %v2798
  %v3057 = vpop.f32.mrf.mxu0
  %v3058 = vadd.f32 0.0, %v3057
  %3059 = vmatmul.f32.gmra.mxu0 %v2801
  %v3060 = vpop.f32.mrf.mxu0
  %v3061 = vadd.f32 0.0, %v3060
  %3062 = vmatmul.f32.gmra.mxu0 %v2804
  %v3063 = vpop.f32.mrf.mxu0
  %v3064 = vadd.f32 0.0, %v3063
  %3065 = vmatmul.f32.gmra.mxu0 %v2807
  %v3066 = vpop.f32.mrf.mxu0
  %v3067 = vadd.f32 0.0, %v3066
  %3068 = vmatmul.f32.gmra.mxu0 %v2810
  %v3069 = vpop.f32.mrf.mxu0
  %v3070 = vadd.f32 0.0, %v3069
  %3071 = vmatmul.f32.gmra.mxu0 %v2813
  %v3072 = vpop.f32.mrf.mxu0
  %v3073 = vadd.f32 0.0, %v3072
  %3074 = vmatmul.f32.gmra.mxu0 %v2816
  %v3075 = vpop.f32.mrf.mxu0
  %v3076 = vadd.f32 0.0, %v3075
  %3077 = vmatmul.f32.gmra.mxu0 %v2819
  %v3078 = vpop.f32.mrf.mxu0
  %v3079 = vadd.f32 0.0, %v3078
  %3080 = vmatmul.f32.gmra.mxu0 %v2822
  %v3081 = vpop.f32.mrf.mxu0
  %v3082 = vadd.f32 0.0, %v3081
  %3083 = vmatmul.f32.gmra.mxu0 %v2825
  %v3084 = vpop.f32.mrf.mxu0
  %v3085 = vadd.f32 0.0, %v3084
  %3086 = vmatmul.f32.gmra.mxu0 %v2828
  %v3087 = vpop.f32.mrf.mxu0
  %v3088 = vadd.f32 0.0, %v3087
  %3089 = vmatmul.f32.gmra.mxu0 %v2831
  %v3090 = vpop.f32.mrf.mxu0
  %v3091 = vadd.f32 0.0, %v3090
  %3092 = vmatmul.f32.gmra.mxu0 %v2834
  %v3093 = vpop.f32.mrf.mxu0
  %v3094 = vadd.f32 0.0, %v3093
  %3095 = vmatmul.f32.gmra.mxu0 %v2837
  %v3096 = vpop.f32.mrf.mxu0
  %v3097 = vadd.f32 0.0, %v3096
  %3098 = vmatmul.f32.gmra.mxu0 %v2840
  %v3099 = vpop.f32.mrf.mxu0
  %v3100 = vadd.f32 0.0, %v3099
  %3101 = vmatmul.f32.gmra.mxu0 %v2843
  %v3102 = vpop.f32.mrf.mxu0
  %v3103 = vadd.f32 0.0, %v3102
  %3104 = vmatmul.f32.gmra.mxu0 %v2846
  %v3105 = vpop.f32.mrf.mxu0
  %v3106 = vadd.f32 0.0, %v3105
  %3107 = vmatmul.f32.gmra.mxu0 %v2849
  %v3108 = vpop.f32.mrf.mxu0
  %v3109 = vadd.f32 0.0, %v3108
  %3110 = vmatmul.f32.gmra.mxu0 %v2852
  %v3111 = vpop.f32.mrf.mxu0
  %v3112 = vadd.f32 0.0, %v3111
  %3113 = vmatmul.f32.gmra.mxu0 %v2855
  %v3114 = vpop.f32.mrf.mxu0
  %v3115 = vadd.f32 0.0, %v3114
  %3116 = vmatmul.f32.gmra.mxu0 %v2858
  %v3117 = vpop.f32.mrf.mxu0
  %v3118 = vadd.f32 0.0, %v3117
  %3119 = vmatmul.f32.gmra.mxu0 %v2861
  %v3120 = vpop.f32.mrf.mxu0
  %v3121 = vadd.f32 0.0, %v3120
  %3122 = vmatmul.f32.gmra.mxu0 %v2864
  %v3123 = vpop.f32.mrf.mxu0
  %v3124 = vadd.f32 0.0, %v3123
  %3125 = vdwg.mxu0
  %v3126 = vadd.f32 %v2457, %v2884
  %v3127 = vadd.f32 %v2458, %v2887
  %v3128 = vadd.f32 %v2459, %v2890
  %v3129 = vadd.f32 %v2460, %v2893
  %v3130 = vadd.f32 %v2461, %v2896
  %v3131 = vadd.f32 %v2462, %v2899
  %v3132 = vadd.f32 %v2463, %v2902
  %v3133 = vadd.f32 %v2464, %v2905
  %v3134 = vadd.f32 %v2465, %v2908
  %v3135 = vadd.f32 %v2466, %v2911
  %v3136 = vadd.f32 %v2467, %v2914
  %v3137 = vadd.f32 %v2468, %v2917
  %v3138 = vadd.f32 %v2469, %v2920
  %v3139 = vadd.f32 %v2470, %v2923
  %v3140 = vadd.f32 %v2471, %v2926
  %v3141 = vadd.f32 %v2472, %v2929
  %v3142 = vadd.f32 %v2473, %v2932
  %v3143 = vadd.f32 %v2474, %v2935
  %v3144 = vadd.f32 %v2475, %v2938
  %v3145 = vadd.f32 %v2476, %v2941
  %v3146 = vadd.f32 %v2477, %v2944
  %v3147 = vadd.f32 %v2478, %v2947
  %v3148 = vadd.f32 %v2479, %v2950
  %v3149 = vadd.f32 %v2480, %v2953
  %v3150 = vadd.f32 %v2481, %v2956
  %v3151 = vadd.f32 %v2482, %v2959
  %v3152 = vadd.f32 %v2483, %v2962
  %v3153 = vadd.f32 %v2484, %v2965
  %v3154 = vadd.f32 %v2485, %v2968
  %v3155 = vadd.f32 %v2486, %v2971
  %v3156 = vadd.f32 %v2487, %v2974
  %v3157 = vadd.f32 %v2488, %v2977
  %v3158 = vadd.f32 %v2489, %v2980
  %v3159 = vadd.f32 %v2490, %v2983
  %v3160 = vadd.f32 %v2491, %v2986
  %v3161 = vadd.f32 %v2492, %v2989
  %v3162 = vadd.f32 %v2493, %v2992
  %v3163 = vadd.f32 %v2494, %v2995
  %v3164 = vadd.f32 %v2495, %v2998
  %v3165 = vadd.f32 %v2496, %v3001
  %v3166 = vadd.f32 %v2497, %v3004
  %v3167 = vadd.f32 %v2498, %v3007
  %v3168 = vadd.f32 %v2499, %v3010
  %v3169 = vadd.f32 %v2500, %v3013
  %v3170 = vadd.f32 %v2501, %v3016
  %v3171 = vadd.f32 %v2502, %v3019
  %v3172 = vadd.f32 %v2503, %v3022
  %v3173 = vadd.f32 %v2504, %v3025
  %v3174 = vadd.f32 %v2505, %v3028
  %v3175 = vadd.f32 %v2506, %v3031
  %v3176 = vadd.f32 %v2507, %v3034
  %v3177 = vadd.f32 %v2508, %v3037
  %v3178 = vadd.f32 %v2509, %v3040
  %v3179 = vadd.f32 %v2510, %v3043
  %v3180 = vadd.f32 %v2511, %v3046
  %v3181 = vadd.f32 %v2512, %v3049
  %v3182 = vadd.f32 %v2513, %v3052
  %v3183 = vadd.f32 %v2514, %v3055
  %v3184 = vadd.f32 %v2515, %v3058
  %v3185 = vadd.f32 %v2516, %v3061
  %v3186 = vadd.f32 %v2517, %v3064
  %v3187 = vadd.f32 %v2518, %v3067
  %v3188 = vadd.f32 %v2519, %v3070
  %v3189 = vadd.f32 %v2520, %v3073
  %v3190 = vadd.f32 %v2521, %v3076
  %v3191 = vadd.f32 %v2522, %v3079
  %v3192 = vadd.f32 %v2523, %v3082
  %v3193 = vadd.f32 %v2524, %v3085
  %v3194 = vadd.f32 %v2525, %v3088
  %v3195 = vadd.f32 %v2526, %v3091
  %v3196 = vadd.f32 %v2527, %v3094
  %v3197 = vadd.f32 %v2528, %v3097
  %v3198 = vadd.f32 %v2529, %v3100
  %v3199 = vadd.f32 %v2530, %v3103
  %v3200 = vadd.f32 %v2531, %v3106
  %v3201 = vadd.f32 %v2532, %v3109
  %v3202 = vadd.f32 %v2533, %v3112
  %v3203 = vadd.f32 %v2534, %v3115
  %v3204 = vadd.f32 %v2535, %v3118
  %v3205 = vadd.f32 %v2536, %v3121
  %v3206 = vadd.f32 %v2537, %v3124
  %v3207 = vld [vmem:[%s0 + $0x14] sm:$0xff]
  %v3208 = vld [vmem:[%s0 + $0x1c] sm:$0xff]
  %v3209 = vld [vmem:[%s0 + $0x24] sm:$0xff]
  %v3210 = vld [vmem:[%s0 + $0x2c] sm:$0xff]
  %v3211 = vld [vmem:[%s0 + $0x34] sm:$0xff]
  %v3212 = vld [vmem:[%s0 + $0x3c] sm:$0xff]
  %v3213 = vld [vmem:[%s0 + $0x44] sm:$0xff]
  %v3214 = vld [vmem:[%s0 + $0x4c] sm:$0xff]
  %v3215 = vld [vmem:[%s0 + $0x54] sm:$0xff]
  %v3216 = vld [vmem:[%s0 + $0x5c] sm:$0xff]
  %v3217 = vld [vmem:[%s0 + $0x64] sm:$0xff]
  %v3218 = vld [vmem:[%s0 + $0x6c] sm:$0xff]
  %v3219 = vld [vmem:[%s0 + $0x74] sm:$0xff]
  %v3220 = vld [vmem:[%s0 + $0x7c] sm:$0xff]
  %v3221 = vld [vmem:[%s0 + $0x84] sm:$0xff]
  %v3222 = vld [vmem:[%s0 + $0x8c] sm:$0xff]
  %v3223 = vld [vmem:[%s0 + $0x94] sm:$0xff]
  %v3224 = vld [vmem:[%s0 + $0x9c] sm:$0xff]
  %v3225 = vld [vmem:[%s0 + $0xa4] sm:$0xff]
  %v3226 = vld [vmem:[%s0 + $0xac] sm:$0xff]
  %v3227 = vld [vmem:[%s0 + $0xb4] sm:$0xff]
  %v3228 = vld [vmem:[%s0 + $0xbc] sm:$0xff]
  %v3229 = vld [vmem:[%s0 + $0xc4] sm:$0xff]
  %v3230 = vld [vmem:[%s0 + $0xcc] sm:$0xff]
  %v3231 = vld [vmem:[%s0 + $0xd4] sm:$0xff]
  %v3232 = vld [vmem:[%s0 + $0xdc] sm:$0xff]
  %v3233 = vld [vmem:[%s0 + $0xe4] sm:$0xff]
  %v3234 = vld [vmem:[%s0 + $0xec] sm:$0xff]
  %v3235 = vld [vmem:[%s0 + $0xf4] sm:$0xff]
  %v3236 = vld [vmem:[%s0 + $0xfc] sm:$0xff]
  %v3237 = vld [vmem:[%s0 + $0x104] sm:$0xff]
  %v3238 = vld [vmem:[%s0 + $0x10c] sm:$0xff]
  %v3239 = vld [vmem:[%s0 + $0x114] sm:$0xff]
  %v3240 = vld [vmem:[%s0 + $0x11c] sm:$0xff]
  %v3241 = vld [vmem:[%s0 + $0x124] sm:$0xff]
  %v3242 = vld [vmem:[%s0 + $0x12c] sm:$0xff]
  %v3243 = vld [vmem:[%s0 + $0x134] sm:$0xff]
  %v3244 = vld [vmem:[%s0 + $0x13c] sm:$0xff]
  %v3245 = vld [vmem:[%s0 + $0x144] sm:$0xff]
  %v3246 = vld [vmem:[%s0 + $0x14c] sm:$0xff]
  %v3247 = vld [vmem:[%s0 + $0x154] sm:$0xff]
  %v3248 = vld [vmem:[%s0 + $0x15c] sm:$0xff]
  %v3249 = vld [vmem:[%s0 + $0x164] sm:$0xff]
  %v3250 = vld [vmem:[%s0 + $0x16c] sm:$0xff]
  %v3251 = vld [vmem:[%s0 + $0x174] sm:$0xff]
  %v3252 = vld [vmem:[%s0 + $0x17c] sm:$0xff]
  %v3253 = vld [vmem:[%s0 + $0x184] sm:$0xff]
  %v3254 = vld [vmem:[%s0 + $0x18c] sm:$0xff]
  %v3255 = vld [vmem:[%s0 + $0x194] sm:$0xff]
  %v3256 = vld [vmem:[%s0 + $0x19c] sm:$0xff]
  %v3257 = vld [vmem:[%s0 + $0x1a4] sm:$0xff]
  %v3258 = vld [vmem:[%s0 + $0x1ac] sm:$0xff]
  %v3259 = vld [vmem:[%s0 + $0x1b4] sm:$0xff]
  %v3260 = vld [vmem:[%s0 + $0x1bc] sm:$0xff]
  %v3261 = vld [vmem:[%s0 + $0x1c4] sm:$0xff]
  %v3262 = vld [vmem:[%s0 + $0x1cc] sm:$0xff]
  %v3263 = vld [vmem:[%s0 + $0x1d4] sm:$0xff]
  %v3264 = vld [vmem:[%s0 + $0x1dc] sm:$0xff]
  %v3265 = vld [vmem:[%s0 + $0x1e4] sm:$0xff]
  %v3266 = vld [vmem:[%s0 + $0x1ec] sm:$0xff]
  %v3267 = vld [vmem:[%s0 + $0x1f4] sm:$0xff]
  %v3268 = vld [vmem:[%s0 + $0x1fc] sm:$0xff]
  %v3269 = vld [vmem:[%s0 + $0x204] sm:$0xff]
  %v3270 = vld [vmem:[%s0 + $0x20c] sm:$0xff]
  %v3271 = vld [vmem:[%s0 + $0x214] sm:$0xff]
  %v3272 = vld [vmem:[%s0 + $0x21c] sm:$0xff]
  %v3273 = vld [vmem:[%s0 + $0x224] sm:$0xff]
  %v3274 = vld [vmem:[%s0 + $0x22c] sm:$0xff]
  %v3275 = vld [vmem:[%s0 + $0x234] sm:$0xff]
  %v3276 = vld [vmem:[%s0 + $0x23c] sm:$0xff]
  %v3277 = vld [vmem:[%s0 + $0x244] sm:$0xff]
  %v3278 = vld [vmem:[%s0 + $0x24c] sm:$0xff]
  %v3279 = vld [vmem:[%s0 + $0x254] sm:$0xff]
  %v3280 = vld [vmem:[%s0 + $0x25c] sm:$0xff]
  %v3281 = vld [vmem:[%s0 + $0x264] sm:$0xff]
  %v3282 = vld [vmem:[%s0 + $0x26c] sm:$0xff]
  %v3283 = vld [vmem:[%s0 + $0x274] sm:$0xff]
  %v3284 = vld [vmem:[%s0 + $0x27c] sm:$0xff]
  %v3285 = vld [vmem:[%s0 + $0x284] sm:$0xff]
  %v3286 = vld [vmem:[%s0 + $0x28c] sm:$0xff]
  %v3287 = vld [vmem:[%s0 + $0x294] sm:$0xff]
  %v3288 = vld [vmem:[%s1 + $0xa0] sm:$0xff]
  %v3289 = vld [vmem:[%s1 + $0xa8] sm:$0xff]
  %v3290 = vld [vmem:[%s1 + $0xb0] sm:$0xff]
  %v3291 = vld [vmem:[%s1 + $0xb8] sm:$0xff]
  %v3293 = vsel %vm193, %v3207, 0
  %v3296 = vsel %vm193, %v3208, 0
  %v3299 = vsel %vm193, %v3209, 0
  %v3302 = vsel %vm193, %v3210, 0
  %v3305 = vsel %vm193, %v3211, 0
  %v3308 = vsel %vm193, %v3212, 0
  %v3311 = vsel %vm193, %v3213, 0
  %v3314 = vsel %vm193, %v3214, 0
  %v3317 = vsel %vm193, %v3215, 0
  %v3320 = vsel %vm193, %v3216, 0
  %v3323 = vsel %vm193, %v3217, 0
  %v3326 = vsel %vm193, %v3218, 0
  %v3329 = vsel %vm193, %v3219, 0
  %v3332 = vsel %vm193, %v3220, 0
  %v3335 = vsel %vm193, %v3221, 0
  %v3338 = vsel %vm193, %v3222, 0
  %v3341 = vsel %vm193, %v3223, 0
  %v3344 = vsel %vm193, %v3224, 0
  %v3347 = vsel %vm193, %v3225, 0
  %v3350 = vsel %vm193, %v3226, 0
  %v3353 = vsel %vm193, %v3227, 0
  %v3356 = vsel %vm193, %v3228, 0
  %v3359 = vsel %vm193, %v3229, 0
  %v3362 = vsel %vm193, %v3230, 0
  %v3365 = vsel %vm193, %v3231, 0
  %v3368 = vsel %vm193, %v3232, 0
  %v3371 = vsel %vm193, %v3233, 0
  %v3374 = vsel %vm193, %v3234, 0
  %v3377 = vsel %vm193, %v3235, 0
  %v3380 = vsel %vm193, %v3236, 0
  %v3383 = vsel %vm193, %v3237, 0
  %v3386 = vsel %vm193, %v3238, 0
  %v3389 = vsel %vm193, %v3239, 0
  %v3392 = vsel %vm193, %v3240, 0
  %v3395 = vsel %vm193, %v3241, 0
  %v3398 = vsel %vm193, %v3242, 0
  %v3401 = vsel %vm193, %v3243, 0
  %v3404 = vsel %vm193, %v3244, 0
  %v3407 = vsel %vm193, %v3245, 0
  %v3410 = vsel %vm193, %v3246, 0
  %v3413 = vsel %vm193, %v3247, 0
  %v3416 = vsel %vm193, %v3248, 0
  %v3419 = vsel %vm193, %v3249, 0
  %v3422 = vsel %vm193, %v3250, 0
  %v3425 = vsel %vm193, %v3251, 0
  %v3428 = vsel %vm193, %v3252, 0
  %v3431 = vsel %vm193, %v3253, 0
  %v3434 = vsel %vm193, %v3254, 0
  %v3437 = vsel %vm193, %v3255, 0
  %v3440 = vsel %vm193, %v3256, 0
  %v3443 = vsel %vm193, %v3257, 0
  %v3446 = vsel %vm193, %v3258, 0
  %v3449 = vsel %vm193, %v3259, 0
  %v3452 = vsel %vm193, %v3260, 0
  %v3455 = vsel %vm193, %v3261, 0
  %v3458 = vsel %vm193, %v3262, 0
  %v3461 = vsel %vm193, %v3263, 0
  %v3464 = vsel %vm193, %v3264, 0
  %v3467 = vsel %vm193, %v3265, 0
  %v3470 = vsel %vm193, %v3266, 0
  %v3473 = vsel %vm193, %v3267, 0
  %v3476 = vsel %vm193, %v3268, 0
  %v3479 = vsel %vm193, %v3269, 0
  %v3482 = vsel %vm193, %v3270, 0
  %v3485 = vsel %vm193, %v3271, 0
  %v3488 = vsel %vm193, %v3272, 0
  %v3491 = vsel %vm193, %v3273, 0
  %v3494 = vsel %vm193, %v3274, 0
  %v3497 = vsel %vm193, %v3275, 0
  %v3500 = vsel %vm193, %v3276, 0
  %v3503 = vsel %vm193, %v3277, 0
  %v3506 = vsel %vm193, %v3278, 0
  %v3509 = vsel %vm193, %v3279, 0
  %v3512 = vsel %vm193, %v3280, 0
  %v3515 = vsel %vm193, %v3281, 0
  %v3518 = vsel %vm193, %v3282, 0
  %v3521 = vsel %vm193, %v3283, 0
  %v3524 = vsel %vm193, %v3284, 0
  %v3527 = vsel %vm193, %v3285, 0
  %v3530 = vsel %vm193, %v3286, 0
  %v3533 = vsel %vm193, %v3287, 0
  %3535 = vmatpush.msra.mxu0 0.0
  %3536 = vmatpush.msra.mxu0 0.0
  %3537 = vmatpush.msra.mxu0 0.0
  %3538 = vmatpush.msra.mxu0 0.0
  %3539 = vmatpush.msra.mxu0 0.0
  %3540 = vmatpush.msra.mxu0 0.0
  %3541 = vmatpush.msra.mxu0 0.0
  %3542 = vmatpush.msra.mxu0 0.0
  %3543 = vmatpush.msra.mxu0 0.0
  %3544 = vmatpush.msra.mxu0 0.0
  %3545 = vmatpush.msra.mxu0 0.0
  %3546 = vmatpush.msra.mxu0 0.0
  %3547 = vmatpush.msra.mxu0 %v3291
  %3548 = vmatpush.msra.mxu0 %v3290
  %3549 = vmatpush.msra.mxu0 %v3289
  %3550 = vmatpush.msra.mxu0 %v3288
  %3551 = vmatmul.f32.gmra.mxu0 %v3293
  %v3552 = vpop.f32.mrf.mxu0
  %v3553 = vadd.f32 0.0, %v3552
  %3554 = vmatmul.f32.gmra.mxu0 %v3296
  %v3555 = vpop.f32.mrf.mxu0
  %v3556 = vadd.f32 0.0, %v3555
  %3557 = vmatmul.f32.gmra.mxu0 %v3299
  %v3558 = vpop.f32.mrf.mxu0
  %v3559 = vadd.f32 0.0, %v3558
  %3560 = vmatmul.f32.gmra.mxu0 %v3302
  %v3561 = vpop.f32.mrf.mxu0
  %v3562 = vadd.f32 0.0, %v3561
  %3563 = vmatmul.f32.gmra.mxu0 %v3305
  %v3564 = vpop.f32.mrf.mxu0
  %v3565 = vadd.f32 0.0, %v3564
  %3566 = vmatmul.f32.gmra.mxu0 %v3308
  %v3567 = vpop.f32.mrf.mxu0
  %v3568 = vadd.f32 0.0, %v3567
  %3569 = vmatmul.f32.gmra.mxu0 %v3311
  %v3570 = vpop.f32.mrf.mxu0
  %v3571 = vadd.f32 0.0, %v3570
  %3572 = vmatmul.f32.gmra.mxu0 %v3314
  %v3573 = vpop.f32.mrf.mxu0
  %v3574 = vadd.f32 0.0, %v3573
  %3575 = vmatmul.f32.gmra.mxu0 %v3317
  %v3576 = vpop.f32.mrf.mxu0
  %v3577 = vadd.f32 0.0, %v3576
  %3578 = vmatmul.f32.gmra.mxu0 %v3320
  %v3579 = vpop.f32.mrf.mxu0
  %v3580 = vadd.f32 0.0, %v3579
  %3581 = vmatmul.f32.gmra.mxu0 %v3323
  %v3582 = vpop.f32.mrf.mxu0
  %v3583 = vadd.f32 0.0, %v3582
  %3584 = vmatmul.f32.gmra.mxu0 %v3326
  %v3585 = vpop.f32.mrf.mxu0
  %v3586 = vadd.f32 0.0, %v3585
  %3587 = vmatmul.f32.gmra.mxu0 %v3329
  %v3588 = vpop.f32.mrf.mxu0
  %v3589 = vadd.f32 0.0, %v3588
  %3590 = vmatmul.f32.gmra.mxu0 %v3332
  %v3591 = vpop.f32.mrf.mxu0
  %v3592 = vadd.f32 0.0, %v3591
  %3593 = vmatmul.f32.gmra.mxu0 %v3335
  %v3594 = vpop.f32.mrf.mxu0
  %v3595 = vadd.f32 0.0, %v3594
  %3596 = vmatmul.f32.gmra.mxu0 %v3338
  %v3597 = vpop.f32.mrf.mxu0
  %v3598 = vadd.f32 0.0, %v3597
  %3599 = vmatmul.f32.gmra.mxu0 %v3341
  %v3600 = vpop.f32.mrf.mxu0
  %v3601 = vadd.f32 0.0, %v3600
  %3602 = vmatmul.f32.gmra.mxu0 %v3344
  %v3603 = vpop.f32.mrf.mxu0
  %v3604 = vadd.f32 0.0, %v3603
  %3605 = vmatmul.f32.gmra.mxu0 %v3347
  %v3606 = vpop.f32.mrf.mxu0
  %v3607 = vadd.f32 0.0, %v3606
  %3608 = vmatmul.f32.gmra.mxu0 %v3350
  %v3609 = vpop.f32.mrf.mxu0
  %v3610 = vadd.f32 0.0, %v3609
  %3611 = vmatmul.f32.gmra.mxu0 %v3353
  %v3612 = vpop.f32.mrf.mxu0
  %v3613 = vadd.f32 0.0, %v3612
  %3614 = vmatmul.f32.gmra.mxu0 %v3356
  %v3615 = vpop.f32.mrf.mxu0
  %v3616 = vadd.f32 0.0, %v3615
  %3617 = vmatmul.f32.gmra.mxu0 %v3359
  %v3618 = vpop.f32.mrf.mxu0
  %v3619 = vadd.f32 0.0, %v3618
  %3620 = vmatmul.f32.gmra.mxu0 %v3362
  %v3621 = vpop.f32.mrf.mxu0
  %v3622 = vadd.f32 0.0, %v3621
  %3623 = vmatmul.f32.gmra.mxu0 %v3365
  %v3624 = vpop.f32.mrf.mxu0
  %v3625 = vadd.f32 0.0, %v3624
  %3626 = vmatmul.f32.gmra.mxu0 %v3368
  %v3627 = vpop.f32.mrf.mxu0
  %v3628 = vadd.f32 0.0, %v3627
  %3629 = vmatmul.f32.gmra.mxu0 %v3371
  %v3630 = vpop.f32.mrf.mxu0
  %v3631 = vadd.f32 0.0, %v3630
  %3632 = vmatmul.f32.gmra.mxu0 %v3374
  %v3633 = vpop.f32.mrf.mxu0
  %v3634 = vadd.f32 0.0, %v3633
  %3635 = vmatmul.f32.gmra.mxu0 %v3377
  %v3636 = vpop.f32.mrf.mxu0
  %v3637 = vadd.f32 0.0, %v3636
  %3638 = vmatmul.f32.gmra.mxu0 %v3380
  %v3639 = vpop.f32.mrf.mxu0
  %v3640 = vadd.f32 0.0, %v3639
  %3641 = vmatmul.f32.gmra.mxu0 %v3383
  %v3642 = vpop.f32.mrf.mxu0
  %v3643 = vadd.f32 0.0, %v3642
  %3644 = vmatmul.f32.gmra.mxu0 %v3386
  %v3645 = vpop.f32.mrf.mxu0
  %v3646 = vadd.f32 0.0, %v3645
  %3647 = vmatmul.f32.gmra.mxu0 %v3389
  %v3648 = vpop.f32.mrf.mxu0
  %v3649 = vadd.f32 0.0, %v3648
  %3650 = vmatmul.f32.gmra.mxu0 %v3392
  %v3651 = vpop.f32.mrf.mxu0
  %v3652 = vadd.f32 0.0, %v3651
  %3653 = vmatmul.f32.gmra.mxu0 %v3395
  %v3654 = vpop.f32.mrf.mxu0
  %v3655 = vadd.f32 0.0, %v3654
  %3656 = vmatmul.f32.gmra.mxu0 %v3398
  %v3657 = vpop.f32.mrf.mxu0
  %v3658 = vadd.f32 0.0, %v3657
  %3659 = vmatmul.f32.gmra.mxu0 %v3401
  %v3660 = vpop.f32.mrf.mxu0
  %v3661 = vadd.f32 0.0, %v3660
  %3662 = vmatmul.f32.gmra.mxu0 %v3404
  %v3663 = vpop.f32.mrf.mxu0
  %v3664 = vadd.f32 0.0, %v3663
  %3665 = vmatmul.f32.gmra.mxu0 %v3407
  %v3666 = vpop.f32.mrf.mxu0
  %v3667 = vadd.f32 0.0, %v3666
  %3668 = vmatmul.f32.gmra.mxu0 %v3410
  %v3669 = vpop.f32.mrf.mxu0
  %v3670 = vadd.f32 0.0, %v3669
  %3671 = vmatmul.f32.gmra.mxu0 %v3413
  %v3672 = vpop.f32.mrf.mxu0
  %v3673 = vadd.f32 0.0, %v3672
  %3674 = vmatmul.f32.gmra.mxu0 %v3416
  %v3675 = vpop.f32.mrf.mxu0
  %v3676 = vadd.f32 0.0, %v3675
  %3677 = vmatmul.f32.gmra.mxu0 %v3419
  %v3678 = vpop.f32.mrf.mxu0
  %v3679 = vadd.f32 0.0, %v3678
  %3680 = vmatmul.f32.gmra.mxu0 %v3422
  %v3681 = vpop.f32.mrf.mxu0
  %v3682 = vadd.f32 0.0, %v3681
  %3683 = vmatmul.f32.gmra.mxu0 %v3425
  %v3684 = vpop.f32.mrf.mxu0
  %v3685 = vadd.f32 0.0, %v3684
  %3686 = vmatmul.f32.gmra.mxu0 %v3428
  %v3687 = vpop.f32.mrf.mxu0
  %v3688 = vadd.f32 0.0, %v3687
  %3689 = vmatmul.f32.gmra.mxu0 %v3431
  %v3690 = vpop.f32.mrf.mxu0
  %v3691 = vadd.f32 0.0, %v3690
  %3692 = vmatmul.f32.gmra.mxu0 %v3434
  %v3693 = vpop.f32.mrf.mxu0
  %v3694 = vadd.f32 0.0, %v3693
  %3695 = vmatmul.f32.gmra.mxu0 %v3437
  %v3696 = vpop.f32.mrf.mxu0
  %v3697 = vadd.f32 0.0, %v3696
  %3698 = vmatmul.f32.gmra.mxu0 %v3440
  %v3699 = vpop.f32.mrf.mxu0
  %v3700 = vadd.f32 0.0, %v3699
  %3701 = vmatmul.f32.gmra.mxu0 %v3443
  %v3702 = vpop.f32.mrf.mxu0
  %v3703 = vadd.f32 0.0, %v3702
  %3704 = vmatmul.f32.gmra.mxu0 %v3446
  %v3705 = vpop.f32.mrf.mxu0
  %v3706 = vadd.f32 0.0, %v3705
  %3707 = vmatmul.f32.gmra.mxu0 %v3449
  %v3708 = vpop.f32.mrf.mxu0
  %v3709 = vadd.f32 0.0, %v3708
  %3710 = vmatmul.f32.gmra.mxu0 %v3452
  %v3711 = vpop.f32.mrf.mxu0
  %v3712 = vadd.f32 0.0, %v3711
  %3713 = vmatmul.f32.gmra.mxu0 %v3455
  %v3714 = vpop.f32.mrf.mxu0
  %v3715 = vadd.f32 0.0, %v3714
  %3716 = vmatmul.f32.gmra.mxu0 %v3458
  %v3717 = vpop.f32.mrf.mxu0
  %v3718 = vadd.f32 0.0, %v3717
  %3719 = vmatmul.f32.gmra.mxu0 %v3461
  %v3720 = vpop.f32.mrf.mxu0
  %v3721 = vadd.f32 0.0, %v3720
  %3722 = vmatmul.f32.gmra.mxu0 %v3464
  %v3723 = vpop.f32.mrf.mxu0
  %v3724 = vadd.f32 0.0, %v3723
  %3725 = vmatmul.f32.gmra.mxu0 %v3467
  %v3726 = vpop.f32.mrf.mxu0
  %v3727 = vadd.f32 0.0, %v3726
  %3728 = vmatmul.f32.gmra.mxu0 %v3470
  %v3729 = vpop.f32.mrf.mxu0
  %v3730 = vadd.f32 0.0, %v3729
  %3731 = vmatmul.f32.gmra.mxu0 %v3473
  %v3732 = vpop.f32.mrf.mxu0
  %v3733 = vadd.f32 0.0, %v3732
  %3734 = vmatmul.f32.gmra.mxu0 %v3476
  %v3735 = vpop.f32.mrf.mxu0
  %v3736 = vadd.f32 0.0, %v3735
  %3737 = vmatmul.f32.gmra.mxu0 %v3479
  %v3738 = vpop.f32.mrf.mxu0
  %v3739 = vadd.f32 0.0, %v3738
  %3740 = vmatmul.f32.gmra.mxu0 %v3482
  %v3741 = vpop.f32.mrf.mxu0
  %v3742 = vadd.f32 0.0, %v3741
  %3743 = vmatmul.f32.gmra.mxu0 %v3485
  %v3744 = vpop.f32.mrf.mxu0
  %v3745 = vadd.f32 0.0, %v3744
  %3746 = vmatmul.f32.gmra.mxu0 %v3488
  %v3747 = vpop.f32.mrf.mxu0
  %v3748 = vadd.f32 0.0, %v3747
  %3749 = vmatmul.f32.gmra.mxu0 %v3491
  %v3750 = vpop.f32.mrf.mxu0
  %v3751 = vadd.f32 0.0, %v3750
  %3752 = vmatmul.f32.gmra.mxu0 %v3494
  %v3753 = vpop.f32.mrf.mxu0
  %v3754 = vadd.f32 0.0, %v3753
  %3755 = vmatmul.f32.gmra.mxu0 %v3497
  %v3756 = vpop.f32.mrf.mxu0
  %v3757 = vadd.f32 0.0, %v3756
  %3758 = vmatmul.f32.gmra.mxu0 %v3500
  %v3759 = vpop.f32.mrf.mxu0
  %v3760 = vadd.f32 0.0, %v3759
  %3761 = vmatmul.f32.gmra.mxu0 %v3503
  %v3762 = vpop.f32.mrf.mxu0
  %v3763 = vadd.f32 0.0, %v3762
  %3764 = vmatmul.f32.gmra.mxu0 %v3506
  %v3765 = vpop.f32.mrf.mxu0
  %v3766 = vadd.f32 0.0, %v3765
  %3767 = vmatmul.f32.gmra.mxu0 %v3509
  %v3768 = vpop.f32.mrf.mxu0
  %v3769 = vadd.f32 0.0, %v3768
  %3770 = vmatmul.f32.gmra.mxu0 %v3512
  %v3771 = vpop.f32.mrf.mxu0
  %v3772 = vadd.f32 0.0, %v3771
  %3773 = vmatmul.f32.gmra.mxu0 %v3515
  %v3774 = vpop.f32.mrf.mxu0
  %v3775 = vadd.f32 0.0, %v3774
  %3776 = vmatmul.f32.gmra.mxu0 %v3518
  %v3777 = vpop.f32.mrf.mxu0
  %v3778 = vadd.f32 0.0, %v3777
  %3779 = vmatmul.f32.gmra.mxu0 %v3521
  %v3780 = vpop.f32.mrf.mxu0
  %v3781 = vadd.f32 0.0, %v3780
  %3782 = vmatmul.f32.gmra.mxu0 %v3524
  %v3783 = vpop.f32.mrf.mxu0
  %v3784 = vadd.f32 0.0, %v3783
  %3785 = vmatmul.f32.gmra.mxu0 %v3527
  %v3786 = vpop.f32.mrf.mxu0
  %v3787 = vadd.f32 0.0, %v3786
  %3788 = vmatmul.f32.gmra.mxu0 %v3530
  %v3789 = vpop.f32.mrf.mxu0
  %v3790 = vadd.f32 0.0, %v3789
  %3791 = vmatmul.f32.gmra.mxu0 %v3533
  %v3792 = vpop.f32.mrf.mxu0
  %v3793 = vadd.f32 0.0, %v3792
  %3794 = vdwg.mxu0
  %v3795 = vadd.f32 %v3126, %v3553
  %v3796 = vadd.f32 %v3127, %v3556
  %v3797 = vadd.f32 %v3128, %v3559
  %v3798 = vadd.f32 %v3129, %v3562
  %v3799 = vadd.f32 %v3130, %v3565
  %v3800 = vadd.f32 %v3131, %v3568
  %v3801 = vadd.f32 %v3132, %v3571
  %v3802 = vadd.f32 %v3133, %v3574
  %v3803 = vadd.f32 %v3134, %v3577
  %v3804 = vadd.f32 %v3135, %v3580
  %v3805 = vadd.f32 %v3136, %v3583
  %v3806 = vadd.f32 %v3137, %v3586
  %v3807 = vadd.f32 %v3138, %v3589
  %v3808 = vadd.f32 %v3139, %v3592
  %v3809 = vadd.f32 %v3140, %v3595
  %v3810 = vadd.f32 %v3141, %v3598
  %v3811 = vadd.f32 %v3142, %v3601
  %v3812 = vadd.f32 %v3143, %v3604
  %v3813 = vadd.f32 %v3144, %v3607
  %v3814 = vadd.f32 %v3145, %v3610
  %v3815 = vadd.f32 %v3146, %v3613
  %v3816 = vadd.f32 %v3147, %v3616
  %v3817 = vadd.f32 %v3148, %v3619
  %v3818 = vadd.f32 %v3149, %v3622
  %v3819 = vadd.f32 %v3150, %v3625
  %v3820 = vadd.f32 %v3151, %v3628
  %v3821 = vadd.f32 %v3152, %v3631
  %v3822 = vadd.f32 %v3153, %v3634
  %v3823 = vadd.f32 %v3154, %v3637
  %v3824 = vadd.f32 %v3155, %v3640
  %v3825 = vadd.f32 %v3156, %v3643
  %v3826 = vadd.f32 %v3157, %v3646
  %v3827 = vadd.f32 %v3158, %v3649
  %v3828 = vadd.f32 %v3159, %v3652
  %v3829 = vadd.f32 %v3160, %v3655
  %v3830 = vadd.f32 %v3161, %v3658
  %v3831 = vadd.f32 %v3162, %v3661
  %v3832 = vadd.f32 %v3163, %v3664
  %v3833 = vadd.f32 %v3164, %v3667
  %v3834 = vadd.f32 %v3165, %v3670
  %v3835 = vadd.f32 %v3166, %v3673
  %v3836 = vadd.f32 %v3167, %v3676
  %v3837 = vadd.f32 %v3168, %v3679
  %v3838 = vadd.f32 %v3169, %v3682
  %v3839 = vadd.f32 %v3170, %v3685
  %v3840 = vadd.f32 %v3171, %v3688
  %v3841 = vadd.f32 %v3172, %v3691
  %v3842 = vadd.f32 %v3173, %v3694
  %v3843 = vadd.f32 %v3174, %v3697
  %v3844 = vadd.f32 %v3175, %v3700
  %v3845 = vadd.f32 %v3176, %v3703
  %v3846 = vadd.f32 %v3177, %v3706
  %v3847 = vadd.f32 %v3178, %v3709
  %v3848 = vadd.f32 %v3179, %v3712
  %v3849 = vadd.f32 %v3180, %v3715
  %v3850 = vadd.f32 %v3181, %v3718
  %v3851 = vadd.f32 %v3182, %v3721
  %v3852 = vadd.f32 %v3183, %v3724
  %v3853 = vadd.f32 %v3184, %v3727
  %v3854 = vadd.f32 %v3185, %v3730
  %v3855 = vadd.f32 %v3186, %v3733
  %v3856 = vadd.f32 %v3187, %v3736
  %v3857 = vadd.f32 %v3188, %v3739
  %v3858 = vadd.f32 %v3189, %v3742
  %v3859 = vadd.f32 %v3190, %v3745
  %v3860 = vadd.f32 %v3191, %v3748
  %v3861 = vadd.f32 %v3192, %v3751
  %v3862 = vadd.f32 %v3193, %v3754
  %v3863 = vadd.f32 %v3194, %v3757
  %v3864 = vadd.f32 %v3195, %v3760
  %v3865 = vadd.f32 %v3196, %v3763
  %v3866 = vadd.f32 %v3197, %v3766
  %v3867 = vadd.f32 %v3198, %v3769
  %v3868 = vadd.f32 %v3199, %v3772
  %v3869 = vadd.f32 %v3200, %v3775
  %v3870 = vadd.f32 %v3201, %v3778
  %v3871 = vadd.f32 %v3202, %v3781
  %v3872 = vadd.f32 %v3203, %v3784
  %v3873 = vadd.f32 %v3204, %v3787
  %v3874 = vadd.f32 %v3205, %v3790
  %v3875 = vadd.f32 %v3206, %v3793
  %v3876 = vld [vmem:[%s0 + $0x24] sm:$0xff]
  %v3877 = vld [vmem:[%s0 + $0x2c] sm:$0xff]
  %v3878 = vld [vmem:[%s0 + $0x34] sm:$0xff]
  %v3879 = vld [vmem:[%s0 + $0x3c] sm:$0xff]
  %v3880 = vld [vmem:[%s0 + $0x44] sm:$0xff]
  %v3881 = vld [vmem:[%s0 + $0x4c] sm:$0xff]
  %v3882 = vld [vmem:[%s0 + $0x54] sm:$0xff]
  %v3883 = vld [vmem:[%s0 + $0x5c] sm:$0xff]
  %v3884 = vld [vmem:[%s0 + $0x64] sm:$0xff]
  %v3885 = vld [vmem:[%s0 + $0x6c] sm:$0xff]
  %v3886 = vld [vmem:[%s0 + $0x74] sm:$0xff]
  %v3887 = vld [vmem:[%s0 + $0x7c] sm:$0xff]
  %v3888 = vld [vmem:[%s0 + $0x84] sm:$0xff]
  %v3889 = vld [vmem:[%s0 + $0x8c] sm:$0xff]
  %v3890 = vld [vmem:[%s0 + $0x94] sm:$0xff]
  %v3891 = vld [vmem:[%s0 + $0x9c] sm:$0xff]
  %v3892 = vld [vmem:[%s0 + $0xa4] sm:$0xff]
  %v3893 = vld [vmem:[%s0 + $0xac] sm:$0xff]
  %v3894 = vld [vmem:[%s0 + $0xb4] sm:$0xff]
  %v3895 = vld [vmem:[%s0 + $0xbc] sm:$0xff]
  %v3896 = vld [vmem:[%s0 + $0xc4] sm:$0xff]
  %v3897 = vld [vmem:[%s0 + $0xcc] sm:$0xff]
  %v3898 = vld [vmem:[%s0 + $0xd4] sm:$0xff]
  %v3899 = vld [vmem:[%s0 + $0xdc] sm:$0xff]
  %v3900 = vld [vmem:[%s0 + $0xe4] sm:$0xff]
  %v3901 = vld [vmem:[%s0 + $0xec] sm:$0xff]
  %v3902 = vld [vmem:[%s0 + $0xf4] sm:$0xff]
  %v3903 = vld [vmem:[%s0 + $0xfc] sm:$0xff]
  %v3904 = vld [vmem:[%s0 + $0x104] sm:$0xff]
  %v3905 = vld [vmem:[%s0 + $0x10c] sm:$0xff]
  %v3906 = vld [vmem:[%s0 + $0x114] sm:$0xff]
  %v3907 = vld [vmem:[%s0 + $0x11c] sm:$0xff]
  %v3908 = vld [vmem:[%s0 + $0x124] sm:$0xff]
  %v3909 = vld [vmem:[%s0 + $0x12c] sm:$0xff]
  %v3910 = vld [vmem:[%s0 + $0x134] sm:$0xff]
  %v3911 = vld [vmem:[%s0 + $0x13c] sm:$0xff]
  %v3912 = vld [vmem:[%s0 + $0x144] sm:$0xff]
  %v3913 = vld [vmem:[%s0 + $0x14c] sm:$0xff]
  %v3914 = vld [vmem:[%s0 + $0x154] sm:$0xff]
  %v3915 = vld [vmem:[%s0 + $0x15c] sm:$0xff]
  %v3916 = vld [vmem:[%s0 + $0x164] sm:$0xff]
  %v3917 = vld [vmem:[%s0 + $0x16c] sm:$0xff]
  %v3918 = vld [vmem:[%s0 + $0x174] sm:$0xff]
  %v3919 = vld [vmem:[%s0 + $0x17c] sm:$0xff]
  %v3920 = vld [vmem:[%s0 + $0x184] sm:$0xff]
  %v3921 = vld [vmem:[%s0 + $0x18c] sm:$0xff]
  %v3922 = vld [vmem:[%s0 + $0x194] sm:$0xff]
  %v3923 = vld [vmem:[%s0 + $0x19c] sm:$0xff]
  %v3924 = vld [vmem:[%s0 + $0x1a4] sm:$0xff]
  %v3925 = vld [vmem:[%s0 + $0x1ac] sm:$0xff]
  %v3926 = vld [vmem:[%s0 + $0x1b4] sm:$0xff]
  %v3927 = vld [vmem:[%s0 + $0x1bc] sm:$0xff]
  %v3928 = vld [vmem:[%s0 + $0x1c4] sm:$0xff]
  %v3929 = vld [vmem:[%s0 + $0x1cc] sm:$0xff]
  %v3930 = vld [vmem:[%s0 + $0x1d4] sm:$0xff]
  %v3931 = vld [vmem:[%s0 + $0x1dc] sm:$0xff]
  %v3932 = vld [vmem:[%s0 + $0x1e4] sm:$0xff]
  %v3933 = vld [vmem:[%s0 + $0x1ec] sm:$0xff]
  %v3934 = vld [vmem:[%s0 + $0x1f4] sm:$0xff]
  %v3935 = vld [vmem:[%s0 + $0x1fc] sm:$0xff]
  %v3936 = vld [vmem:[%s0 + $0x204] sm:$0xff]
  %v3937 = vld [vmem:[%s0 + $0x20c] sm:$0xff]
  %v3938 = vld [vmem:[%s0 + $0x214] sm:$0xff]
  %v3939 = vld [vmem:[%s0 + $0x21c] sm:$0xff]
  %v3940 = vld [vmem:[%s0 + $0x224] sm:$0xff]
  %v3941 = vld [vmem:[%s0 + $0x22c] sm:$0xff]
  %v3942 = vld [vmem:[%s0 + $0x234] sm:$0xff]
  %v3943 = vld [vmem:[%s0 + $0x23c] sm:$0xff]
  %v3944 = vld [vmem:[%s0 + $0x244] sm:$0xff]
  %v3945 = vld [vmem:[%s0 + $0x24c] sm:$0xff]
  %v3946 = vld [vmem:[%s0 + $0x254] sm:$0xff]
  %v3947 = vld [vmem:[%s0 + $0x25c] sm:$0xff]
  %v3948 = vld [vmem:[%s0 + $0x264] sm:$0xff]
  %v3949 = vld [vmem:[%s0 + $0x26c] sm:$0xff]
  %v3950 = vld [vmem:[%s0 + $0x274] sm:$0xff]
  %v3951 = vld [vmem:[%s0 + $0x27c] sm:$0xff]
  %v3952 = vld [vmem:[%s0 + $0x284] sm:$0xff]
  %v3953 = vld [vmem:[%s0 + $0x28c] sm:$0xff]
  %v3954 = vld [vmem:[%s0 + $0x294] sm:$0xff]
  %v3955 = vld [vmem:[%s0 + $0x29c] sm:$0xff]
  %v3956 = vld [vmem:[%s0 + $0x2a4] sm:$0xff]
  %v3957 = vld [vmem:[%s1 + $0xc0] sm:$0xff]
  %v3958 = vld [vmem:[%s1 + $0xc8] sm:$0xff]
  %v3959 = vld [vmem:[%s1 + $0xd0] sm:$0xff]
  %v3960 = vld [vmem:[%s1 + $0xd8] sm:$0xff]
  %v3962 = vsel %vm193, %v3876, 0
  %v3965 = vsel %vm193, %v3877, 0
  %v3968 = vsel %vm193, %v3878, 0
  %v3971 = vsel %vm193, %v3879, 0
  %v3974 = vsel %vm193, %v3880, 0
  %v3977 = vsel %vm193, %v3881, 0
  %v3980 = vsel %vm193, %v3882, 0
  %v3983 = vsel %vm193, %v3883, 0
  %v3986 = vsel %vm193, %v3884, 0
  %v3989 = vsel %vm193, %v3885, 0
  %v3992 = vsel %vm193, %v3886, 0
  %v3995 = vsel %vm193, %v3887, 0
  %v3998 = vsel %vm193, %v3888, 0
  %v4001 = vsel %vm193, %v3889, 0
  %v4004 = vsel %vm193, %v3890, 0
  %v4007 = vsel %vm193, %v3891, 0
  %v4010 = vsel %vm193, %v3892, 0
  %v4013 = vsel %vm193, %v3893, 0
  %v4016 = vsel %vm193, %v3894, 0
  %v4019 = vsel %vm193, %v3895, 0
  %v4022 = vsel %vm193, %v3896, 0
  %v4025 = vsel %vm193, %v3897, 0
  %v4028 = vsel %vm193, %v3898, 0
  %v4031 = vsel %vm193, %v3899, 0
  %v4034 = vsel %vm193, %v3900, 0
  %v4037 = vsel %vm193, %v3901, 0
  %v4040 = vsel %vm193, %v3902, 0
  %v4043 = vsel %vm193, %v3903, 0
  %v4046 = vsel %vm193, %v3904, 0
  %v4049 = vsel %vm193, %v3905, 0
  %v4052 = vsel %vm193, %v3906, 0
  %v4055 = vsel %vm193, %v3907, 0
  %v4058 = vsel %vm193, %v3908, 0
  %v4061 = vsel %vm193, %v3909, 0
  %v4064 = vsel %vm193, %v3910, 0
  %v4067 = vsel %vm193, %v3911, 0
  %v4070 = vsel %vm193, %v3912, 0
  %v4073 = vsel %vm193, %v3913, 0
  %v4076 = vsel %vm193, %v3914, 0
  %v4079 = vsel %vm193, %v3915, 0
  %v4082 = vsel %vm193, %v3916, 0
  %v4085 = vsel %vm193, %v3917, 0
  %v4088 = vsel %vm193, %v3918, 0
  %v4091 = vsel %vm193, %v3919, 0
  %v4094 = vsel %vm193, %v3920, 0
  %v4097 = vsel %vm193, %v3921, 0
  %v4100 = vsel %vm193, %v3922, 0
  %v4103 = vsel %vm193, %v3923, 0
  %v4106 = vsel %vm193, %v3924, 0
  %v4109 = vsel %vm193, %v3925, 0
  %v4112 = vsel %vm193, %v3926, 0
  %v4115 = vsel %vm193, %v3927, 0
  %v4118 = vsel %vm193, %v3928, 0
  %v4121 = vsel %vm193, %v3929, 0
  %v4124 = vsel %vm193, %v3930, 0
  %v4127 = vsel %vm193, %v3931, 0
  %v4130 = vsel %vm193, %v3932, 0
  %v4133 = vsel %vm193, %v3933, 0
  %v4136 = vsel %vm193, %v3934, 0
  %v4139 = vsel %vm193, %v3935, 0
  %v4142 = vsel %vm193, %v3936, 0
  %v4145 = vsel %vm193, %v3937, 0
  %v4148 = vsel %vm193, %v3938, 0
  %v4151 = vsel %vm193, %v3939, 0
  %v4154 = vsel %vm193, %v3940, 0
  %v4157 = vsel %vm193, %v3941, 0
  %v4160 = vsel %vm193, %v3942, 0
  %v4163 = vsel %vm193, %v3943, 0
  %v4166 = vsel %vm193, %v3944, 0
  %v4169 = vsel %vm193, %v3945, 0
  %v4172 = vsel %vm193, %v3946, 0
  %v4175 = vsel %vm193, %v3947, 0
  %v4178 = vsel %vm193, %v3948, 0
  %v4181 = vsel %vm193, %v3949, 0
  %v4184 = vsel %vm193, %v3950, 0
  %v4187 = vsel %vm193, %v3951, 0
  %v4190 = vsel %vm193, %v3952, 0
  %v4193 = vsel %vm193, %v3953, 0
  %v4196 = vsel %vm193, %v3954, 0
  %v4199 = vsel %vm193, %v3955, 0
  %v4202 = vsel %vm193, %v3956, 0
  %4204 = vmatpush.msra.mxu0 0.0
  %4205 = vmatpush.msra.mxu0 0.0
  %4206 = vmatpush.msra.mxu0 0.0
  %4207 = vmatpush.msra.mxu0 0.0
  %4208 = vmatpush.msra.mxu0 0.0
  %4209 = vmatpush.msra.mxu0 0.0
  %4210 = vmatpush.msra.mxu0 0.0
  %4211 = vmatpush.msra.mxu0 0.0
  %4212 = vmatpush.msra.mxu0 0.0
  %4213 = vmatpush.msra.mxu0 0.0
  %4214 = vmatpush.msra.mxu0 0.0
  %4215 = vmatpush.msra.mxu0 0.0
  %4216 = vmatpush.msra.mxu0 %v3960
  %4217 = vmatpush.msra.mxu0 %v3959
  %4218 = vmatpush.msra.mxu0 %v3958
  %4219 = vmatpush.msra.mxu0 %v3957
  %4220 = vmatmul.f32.gmra.mxu0 %v3962
  %v4221 = vpop.f32.mrf.mxu0
  %v4222 = vadd.f32 0.0, %v4221
  %4223 = vmatmul.f32.gmra.mxu0 %v3965
  %v4224 = vpop.f32.mrf.mxu0
  %v4225 = vadd.f32 0.0, %v4224
  %4226 = vmatmul.f32.gmra.mxu0 %v3968
  %v4227 = vpop.f32.mrf.mxu0
  %v4228 = vadd.f32 0.0, %v4227
  %4229 = vmatmul.f32.gmra.mxu0 %v3971
  %v4230 = vpop.f32.mrf.mxu0
  %v4231 = vadd.f32 0.0, %v4230
  %4232 = vmatmul.f32.gmra.mxu0 %v3974
  %v4233 = vpop.f32.mrf.mxu0
  %v4234 = vadd.f32 0.0, %v4233
  %4235 = vmatmul.f32.gmra.mxu0 %v3977
  %v4236 = vpop.f32.mrf.mxu0
  %v4237 = vadd.f32 0.0, %v4236
  %4238 = vmatmul.f32.gmra.mxu0 %v3980
  %v4239 = vpop.f32.mrf.mxu0
  %v4240 = vadd.f32 0.0, %v4239
  %4241 = vmatmul.f32.gmra.mxu0 %v3983
  %v4242 = vpop.f32.mrf.mxu0
  %v4243 = vadd.f32 0.0, %v4242
  %4244 = vmatmul.f32.gmra.mxu0 %v3986
  %v4245 = vpop.f32.mrf.mxu0
  %v4246 = vadd.f32 0.0, %v4245
  %4247 = vmatmul.f32.gmra.mxu0 %v3989
  %v4248 = vpop.f32.mrf.mxu0
  %v4249 = vadd.f32 0.0, %v4248
  %4250 = vmatmul.f32.gmra.mxu0 %v3992
  %v4251 = vpop.f32.mrf.mxu0
  %v4252 = vadd.f32 0.0, %v4251
  %4253 = vmatmul.f32.gmra.mxu0 %v3995
  %v4254 = vpop.f32.mrf.mxu0
  %v4255 = vadd.f32 0.0, %v4254
  %4256 = vmatmul.f32.gmra.mxu0 %v3998
  %v4257 = vpop.f32.mrf.mxu0
  %v4258 = vadd.f32 0.0, %v4257
  %4259 = vmatmul.f32.gmra.mxu0 %v4001
  %v4260 = vpop.f32.mrf.mxu0
  %v4261 = vadd.f32 0.0, %v4260
  %4262 = vmatmul.f32.gmra.mxu0 %v4004
  %v4263 = vpop.f32.mrf.mxu0
  %v4264 = vadd.f32 0.0, %v4263
  %4265 = vmatmul.f32.gmra.mxu0 %v4007
  %v4266 = vpop.f32.mrf.mxu0
  %v4267 = vadd.f32 0.0, %v4266
  %4268 = vmatmul.f32.gmra.mxu0 %v4010
  %v4269 = vpop.f32.mrf.mxu0
  %v4270 = vadd.f32 0.0, %v4269
  %4271 = vmatmul.f32.gmra.mxu0 %v4013
  %v4272 = vpop.f32.mrf.mxu0
  %v4273 = vadd.f32 0.0, %v4272
  %4274 = vmatmul.f32.gmra.mxu0 %v4016
  %v4275 = vpop.f32.mrf.mxu0
  %v4276 = vadd.f32 0.0, %v4275
  %4277 = vmatmul.f32.gmra.mxu0 %v4019
  %v4278 = vpop.f32.mrf.mxu0
  %v4279 = vadd.f32 0.0, %v4278
  %4280 = vmatmul.f32.gmra.mxu0 %v4022
  %v4281 = vpop.f32.mrf.mxu0
  %v4282 = vadd.f32 0.0, %v4281
  %4283 = vmatmul.f32.gmra.mxu0 %v4025
  %v4284 = vpop.f32.mrf.mxu0
  %v4285 = vadd.f32 0.0, %v4284
  %4286 = vmatmul.f32.gmra.mxu0 %v4028
  %v4287 = vpop.f32.mrf.mxu0
  %v4288 = vadd.f32 0.0, %v4287
  %4289 = vmatmul.f32.gmra.mxu0 %v4031
  %v4290 = vpop.f32.mrf.mxu0
  %v4291 = vadd.f32 0.0, %v4290
  %4292 = vmatmul.f32.gmra.mxu0 %v4034
  %v4293 = vpop.f32.mrf.mxu0
  %v4294 = vadd.f32 0.0, %v4293
  %4295 = vmatmul.f32.gmra.mxu0 %v4037
  %v4296 = vpop.f32.mrf.mxu0
  %v4297 = vadd.f32 0.0, %v4296
  %4298 = vmatmul.f32.gmra.mxu0 %v4040
  %v4299 = vpop.f32.mrf.mxu0
  %v4300 = vadd.f32 0.0, %v4299
  %4301 = vmatmul.f32.gmra.mxu0 %v4043
  %v4302 = vpop.f32.mrf.mxu0
  %v4303 = vadd.f32 0.0, %v4302
  %4304 = vmatmul.f32.gmra.mxu0 %v4046
  %v4305 = vpop.f32.mrf.mxu0
  %v4306 = vadd.f32 0.0, %v4305
  %4307 = vmatmul.f32.gmra.mxu0 %v4049
  %v4308 = vpop.f32.mrf.mxu0
  %v4309 = vadd.f32 0.0, %v4308
  %4310 = vmatmul.f32.gmra.mxu0 %v4052
  %v4311 = vpop.f32.mrf.mxu0
  %v4312 = vadd.f32 0.0, %v4311
  %4313 = vmatmul.f32.gmra.mxu0 %v4055
  %v4314 = vpop.f32.mrf.mxu0
  %v4315 = vadd.f32 0.0, %v4314
  %4316 = vmatmul.f32.gmra.mxu0 %v4058
  %v4317 = vpop.f32.mrf.mxu0
  %v4318 = vadd.f32 0.0, %v4317
  %4319 = vmatmul.f32.gmra.mxu0 %v4061
  %v4320 = vpop.f32.mrf.mxu0
  %v4321 = vadd.f32 0.0, %v4320
  %4322 = vmatmul.f32.gmra.mxu0 %v4064
  %v4323 = vpop.f32.mrf.mxu0
  %v4324 = vadd.f32 0.0, %v4323
  %4325 = vmatmul.f32.gmra.mxu0 %v4067
  %v4326 = vpop.f32.mrf.mxu0
  %v4327 = vadd.f32 0.0, %v4326
  %4328 = vmatmul.f32.gmra.mxu0 %v4070
  %v4329 = vpop.f32.mrf.mxu0
  %v4330 = vadd.f32 0.0, %v4329
  %4331 = vmatmul.f32.gmra.mxu0 %v4073
  %v4332 = vpop.f32.mrf.mxu0
  %v4333 = vadd.f32 0.0, %v4332
  %4334 = vmatmul.f32.gmra.mxu0 %v4076
  %v4335 = vpop.f32.mrf.mxu0
  %v4336 = vadd.f32 0.0, %v4335
  %4337 = vmatmul.f32.gmra.mxu0 %v4079
  %v4338 = vpop.f32.mrf.mxu0
  %v4339 = vadd.f32 0.0, %v4338
  %4340 = vmatmul.f32.gmra.mxu0 %v4082
  %v4341 = vpop.f32.mrf.mxu0
  %v4342 = vadd.f32 0.0, %v4341
  %4343 = vmatmul.f32.gmra.mxu0 %v4085
  %v4344 = vpop.f32.mrf.mxu0
  %v4345 = vadd.f32 0.0, %v4344
  %4346 = vmatmul.f32.gmra.mxu0 %v4088
  %v4347 = vpop.f32.mrf.mxu0
  %v4348 = vadd.f32 0.0, %v4347
  %4349 = vmatmul.f32.gmra.mxu0 %v4091
  %v4350 = vpop.f32.mrf.mxu0
  %v4351 = vadd.f32 0.0, %v4350
  %4352 = vmatmul.f32.gmra.mxu0 %v4094
  %v4353 = vpop.f32.mrf.mxu0
  %v4354 = vadd.f32 0.0, %v4353
  %4355 = vmatmul.f32.gmra.mxu0 %v4097
  %v4356 = vpop.f32.mrf.mxu0
  %v4357 = vadd.f32 0.0, %v4356
  %4358 = vmatmul.f32.gmra.mxu0 %v4100
  %v4359 = vpop.f32.mrf.mxu0
  %v4360 = vadd.f32 0.0, %v4359
  %4361 = vmatmul.f32.gmra.mxu0 %v4103
  %v4362 = vpop.f32.mrf.mxu0
  %v4363 = vadd.f32 0.0, %v4362
  %4364 = vmatmul.f32.gmra.mxu0 %v4106
  %v4365 = vpop.f32.mrf.mxu0
  %v4366 = vadd.f32 0.0, %v4365
  %4367 = vmatmul.f32.gmra.mxu0 %v4109
  %v4368 = vpop.f32.mrf.mxu0
  %v4369 = vadd.f32 0.0, %v4368
  %4370 = vmatmul.f32.gmra.mxu0 %v4112
  %v4371 = vpop.f32.mrf.mxu0
  %v4372 = vadd.f32 0.0, %v4371
  %4373 = vmatmul.f32.gmra.mxu0 %v4115
  %v4374 = vpop.f32.mrf.mxu0
  %v4375 = vadd.f32 0.0, %v4374
  %4376 = vmatmul.f32.gmra.mxu0 %v4118
  %v4377 = vpop.f32.mrf.mxu0
  %v4378 = vadd.f32 0.0, %v4377
  %4379 = vmatmul.f32.gmra.mxu0 %v4121
  %v4380 = vpop.f32.mrf.mxu0
  %v4381 = vadd.f32 0.0, %v4380
  %4382 = vmatmul.f32.gmra.mxu0 %v4124
  %v4383 = vpop.f32.mrf.mxu0
  %v4384 = vadd.f32 0.0, %v4383
  %4385 = vmatmul.f32.gmra.mxu0 %v4127
  %v4386 = vpop.f32.mrf.mxu0
  %v4387 = vadd.f32 0.0, %v4386
  %4388 = vmatmul.f32.gmra.mxu0 %v4130
  %v4389 = vpop.f32.mrf.mxu0
  %v4390 = vadd.f32 0.0, %v4389
  %4391 = vmatmul.f32.gmra.mxu0 %v4133
  %v4392 = vpop.f32.mrf.mxu0
  %v4393 = vadd.f32 0.0, %v4392
  %4394 = vmatmul.f32.gmra.mxu0 %v4136
  %v4395 = vpop.f32.mrf.mxu0
  %v4396 = vadd.f32 0.0, %v4395
  %4397 = vmatmul.f32.gmra.mxu0 %v4139
  %v4398 = vpop.f32.mrf.mxu0
  %v4399 = vadd.f32 0.0, %v4398
  %4400 = vmatmul.f32.gmra.mxu0 %v4142
  %v4401 = vpop.f32.mrf.mxu0
  %v4402 = vadd.f32 0.0, %v4401
  %4403 = vmatmul.f32.gmra.mxu0 %v4145
  %v4404 = vpop.f32.mrf.mxu0
  %v4405 = vadd.f32 0.0, %v4404
  %4406 = vmatmul.f32.gmra.mxu0 %v4148
  %v4407 = vpop.f32.mrf.mxu0
  %v4408 = vadd.f32 0.0, %v4407
  %4409 = vmatmul.f32.gmra.mxu0 %v4151
  %v4410 = vpop.f32.mrf.mxu0
  %v4411 = vadd.f32 0.0, %v4410
  %4412 = vmatmul.f32.gmra.mxu0 %v4154
  %v4413 = vpop.f32.mrf.mxu0
  %v4414 = vadd.f32 0.0, %v4413
  %4415 = vmatmul.f32.gmra.mxu0 %v4157
  %v4416 = vpop.f32.mrf.mxu0
  %v4417 = vadd.f32 0.0, %v4416
  %4418 = vmatmul.f32.gmra.mxu0 %v4160
  %v4419 = vpop.f32.mrf.mxu0
  %v4420 = vadd.f32 0.0, %v4419
  %4421 = vmatmul.f32.gmra.mxu0 %v4163
  %v4422 = vpop.f32.mrf.mxu0
  %v4423 = vadd.f32 0.0, %v4422
  %4424 = vmatmul.f32.gmra.mxu0 %v4166
  %v4425 = vpop.f32.mrf.mxu0
  %v4426 = vadd.f32 0.0, %v4425
  %4427 = vmatmul.f32.gmra.mxu0 %v4169
  %v4428 = vpop.f32.mrf.mxu0
  %v4429 = vadd.f32 0.0, %v4428
  %4430 = vmatmul.f32.gmra.mxu0 %v4172
  %v4431 = vpop.f32.mrf.mxu0
  %v4432 = vadd.f32 0.0, %v4431
  %4433 = vmatmul.f32.gmra.mxu0 %v4175
  %v4434 = vpop.f32.mrf.mxu0
  %v4435 = vadd.f32 0.0, %v4434
  %4436 = vmatmul.f32.gmra.mxu0 %v4178
  %v4437 = vpop.f32.mrf.mxu0
  %v4438 = vadd.f32 0.0, %v4437
  %4439 = vmatmul.f32.gmra.mxu0 %v4181
  %v4440 = vpop.f32.mrf.mxu0
  %v4441 = vadd.f32 0.0, %v4440
  %4442 = vmatmul.f32.gmra.mxu0 %v4184
  %v4443 = vpop.f32.mrf.mxu0
  %v4444 = vadd.f32 0.0, %v4443
  %4445 = vmatmul.f32.gmra.mxu0 %v4187
  %v4446 = vpop.f32.mrf.mxu0
  %v4447 = vadd.f32 0.0, %v4446
  %4448 = vmatmul.f32.gmra.mxu0 %v4190
  %v4449 = vpop.f32.mrf.mxu0
  %v4450 = vadd.f32 0.0, %v4449
  %4451 = vmatmul.f32.gmra.mxu0 %v4193
  %v4452 = vpop.f32.mrf.mxu0
  %v4453 = vadd.f32 0.0, %v4452
  %4454 = vmatmul.f32.gmra.mxu0 %v4196
  %v4455 = vpop.f32.mrf.mxu0
  %v4456 = vadd.f32 0.0, %v4455
  %4457 = vmatmul.f32.gmra.mxu0 %v4199
  %v4458 = vpop.f32.mrf.mxu0
  %v4459 = vadd.f32 0.0, %v4458
  %4460 = vmatmul.f32.gmra.mxu0 %v4202
  %v4461 = vpop.f32.mrf.mxu0
  %v4462 = vadd.f32 0.0, %v4461
  %4463 = vdwg.mxu0
  %v4464 = vadd.f32 %v3795, %v4222
  %v4465 = vadd.f32 %v3796, %v4225
  %v4466 = vadd.f32 %v3797, %v4228
  %v4467 = vadd.f32 %v3798, %v4231
  %v4468 = vadd.f32 %v3799, %v4234
  %v4469 = vadd.f32 %v3800, %v4237
  %v4470 = vadd.f32 %v3801, %v4240
  %v4471 = vadd.f32 %v3802, %v4243
  %v4472 = vadd.f32 %v3803, %v4246
  %v4473 = vadd.f32 %v3804, %v4249
  %v4474 = vadd.f32 %v3805, %v4252
  %v4475 = vadd.f32 %v3806, %v4255
  %v4476 = vadd.f32 %v3807, %v4258
  %v4477 = vadd.f32 %v3808, %v4261
  %v4478 = vadd.f32 %v3809, %v4264
  %v4479 = vadd.f32 %v3810, %v4267
  %v4480 = vadd.f32 %v3811, %v4270
  %v4481 = vadd.f32 %v3812, %v4273
  %v4482 = vadd.f32 %v3813, %v4276
  %v4483 = vadd.f32 %v3814, %v4279
  %v4484 = vadd.f32 %v3815, %v4282
  %v4485 = vadd.f32 %v3816, %v4285
  %v4486 = vadd.f32 %v3817, %v4288
  %v4487 = vadd.f32 %v3818, %v4291
  %v4488 = vadd.f32 %v3819, %v4294
  %v4489 = vadd.f32 %v3820, %v4297
  %v4490 = vadd.f32 %v3821, %v4300
  %v4491 = vadd.f32 %v3822, %v4303
  %v4492 = vadd.f32 %v3823, %v4306
  %v4493 = vadd.f32 %v3824, %v4309
  %v4494 = vadd.f32 %v3825, %v4312
  %v4495 = vadd.f32 %v3826, %v4315
  %v4496 = vadd.f32 %v3827, %v4318
  %v4497 = vadd.f32 %v3828, %v4321
  %v4498 = vadd.f32 %v3829, %v4324
  %v4499 = vadd.f32 %v3830, %v4327
  %v4500 = vadd.f32 %v3831, %v4330
  %v4501 = vadd.f32 %v3832, %v4333
  %v4502 = vadd.f32 %v3833, %v4336
  %v4503 = vadd.f32 %v3834, %v4339
  %v4504 = vadd.f32 %v3835, %v4342
  %v4505 = vadd.f32 %v3836, %v4345
  %v4506 = vadd.f32 %v3837, %v4348
  %v4507 = vadd.f32 %v3838, %v4351
  %v4508 = vadd.f32 %v3839, %v4354
  %v4509 = vadd.f32 %v3840, %v4357
  %v4510 = vadd.f32 %v3841, %v4360
  %v4511 = vadd.f32 %v3842, %v4363
  %v4512 = vadd.f32 %v3843, %v4366
  %v4513 = vadd.f32 %v3844, %v4369
  %v4514 = vadd.f32 %v3845, %v4372
  %v4515 = vadd.f32 %v3846, %v4375
  %v4516 = vadd.f32 %v3847, %v4378
  %v4517 = vadd.f32 %v3848, %v4381
  %v4518 = vadd.f32 %v3849, %v4384
  %v4519 = vadd.f32 %v3850, %v4387
  %v4520 = vadd.f32 %v3851, %v4390
  %v4521 = vadd.f32 %v3852, %v4393
  %v4522 = vadd.f32 %v3853, %v4396
  %v4523 = vadd.f32 %v3854, %v4399
  %v4524 = vadd.f32 %v3855, %v4402
  %v4525 = vadd.f32 %v3856, %v4405
  %v4526 = vadd.f32 %v3857, %v4408
  %v4527 = vadd.f32 %v3858, %v4411
  %v4528 = vadd.f32 %v3859, %v4414
  %v4529 = vadd.f32 %v3860, %v4417
  %v4530 = vadd.f32 %v3861, %v4420
  %v4531 = vadd.f32 %v3862, %v4423
  %v4532 = vadd.f32 %v3863, %v4426
  %v4533 = vadd.f32 %v3864, %v4429
  %v4534 = vadd.f32 %v3865, %v4432
  %v4535 = vadd.f32 %v3866, %v4435
  %v4536 = vadd.f32 %v3867, %v4438
  %v4537 = vadd.f32 %v3868, %v4441
  %v4538 = vadd.f32 %v3869, %v4444
  %v4539 = vadd.f32 %v3870, %v4447
  %v4540 = vadd.f32 %v3871, %v4450
  %v4541 = vadd.f32 %v3872, %v4453
  %v4542 = vadd.f32 %v3873, %v4456
  %v4543 = vadd.f32 %v3874, %v4459
  %v4544 = vadd.f32 %v3875, %v4462
  %v4545 = vld [vmem:[%s0 + $0x25] sm:$0xff]
  %v4546 = vld [vmem:[%s0 + $0x2d] sm:$0xff]
  %v4547 = vld [vmem:[%s0 + $0x35] sm:$0xff]
  %v4548 = vld [vmem:[%s0 + $0x3d] sm:$0xff]
  %v4549 = vld [vmem:[%s0 + $0x45] sm:$0xff]
  %v4550 = vld [vmem:[%s0 + $0x4d] sm:$0xff]
  %v4551 = vld [vmem:[%s0 + $0x55] sm:$0xff]
  %v4552 = vld [vmem:[%s0 + $0x5d] sm:$0xff]
  %v4553 = vld [vmem:[%s0 + $0x65] sm:$0xff]
  %v4554 = vld [vmem:[%s0 + $0x6d] sm:$0xff]
  %v4555 = vld [vmem:[%s0 + $0x75] sm:$0xff]
  %v4556 = vld [vmem:[%s0 + $0x7d] sm:$0xff]
  %v4557 = vld [vmem:[%s0 + $0x85] sm:$0xff]
  %v4558 = vld [vmem:[%s0 + $0x8d] sm:$0xff]
  %v4559 = vld [vmem:[%s0 + $0x95] sm:$0xff]
  %v4560 = vld [vmem:[%s0 + $0x9d] sm:$0xff]
  %v4561 = vld [vmem:[%s0 + $0xa5] sm:$0xff]
  %v4562 = vld [vmem:[%s0 + $0xad] sm:$0xff]
  %v4563 = vld [vmem:[%s0 + $0xb5] sm:$0xff]
  %v4564 = vld [vmem:[%s0 + $0xbd] sm:$0xff]
  %v4565 = vld [vmem:[%s0 + $0xc5] sm:$0xff]
  %v4566 = vld [vmem:[%s0 + $0xcd] sm:$0xff]
  %v4567 = vld [vmem:[%s0 + $0xd5] sm:$0xff]
  %v4568 = vld [vmem:[%s0 + $0xdd] sm:$0xff]
  %v4569 = vld [vmem:[%s0 + $0xe5] sm:$0xff]
  %v4570 = vld [vmem:[%s0 + $0xed] sm:$0xff]
  %v4571 = vld [vmem:[%s0 + $0xf5] sm:$0xff]
  %v4572 = vld [vmem:[%s0 + $0xfd] sm:$0xff]
  %v4573 = vld [vmem:[%s0 + $0x105] sm:$0xff]
  %v4574 = vld [vmem:[%s0 + $0x10d] sm:$0xff]
  %v4575 = vld [vmem:[%s0 + $0x115] sm:$0xff]
  %v4576 = vld [vmem:[%s0 + $0x11d] sm:$0xff]
  %v4577 = vld [vmem:[%s0 + $0x125] sm:$0xff]
  %v4578 = vld [vmem:[%s0 + $0x12d] sm:$0xff]
  %v4579 = vld [vmem:[%s0 + $0x135] sm:$0xff]
  %v4580 = vld [vmem:[%s0 + $0x13d] sm:$0xff]
  %v4581 = vld [vmem:[%s0 + $0x145] sm:$0xff]
  %v4582 = vld [vmem:[%s0 + $0x14d] sm:$0xff]
  %v4583 = vld [vmem:[%s0 + $0x155] sm:$0xff]
  %v4584 = vld [vmem:[%s0 + $0x15d] sm:$0xff]
  %v4585 = vld [vmem:[%s0 + $0x165] sm:$0xff]
  %v4586 = vld [vmem:[%s0 + $0x16d] sm:$0xff]
  %v4587 = vld [vmem:[%s0 + $0x175] sm:$0xff]
  %v4588 = vld [vmem:[%s0 + $0x17d] sm:$0xff]
  %v4589 = vld [vmem:[%s0 + $0x185] sm:$0xff]
  %v4590 = vld [vmem:[%s0 + $0x18d] sm:$0xff]
  %v4591 = vld [vmem:[%s0 + $0x195] sm:$0xff]
  %v4592 = vld [vmem:[%s0 + $0x19d] sm:$0xff]
  %v4593 = vld [vmem:[%s0 + $0x1a5] sm:$0xff]
  %v4594 = vld [vmem:[%s0 + $0x1ad] sm:$0xff]
  %v4595 = vld [vmem:[%s0 + $0x1b5] sm:$0xff]
  %v4596 = vld [vmem:[%s0 + $0x1bd] sm:$0xff]
  %v4597 = vld [vmem:[%s0 + $0x1c5] sm:$0xff]
  %v4598 = vld [vmem:[%s0 + $0x1cd] sm:$0xff]
  %v4599 = vld [vmem:[%s0 + $0x1d5] sm:$0xff]
  %v4600 = vld [vmem:[%s0 + $0x1dd] sm:$0xff]
  %v4601 = vld [vmem:[%s0 + $0x1e5] sm:$0xff]
  %v4602 = vld [vmem:[%s0 + $0x1ed] sm:$0xff]
  %v4603 = vld [vmem:[%s0 + $0x1f5] sm:$0xff]
  %v4604 = vld [vmem:[%s0 + $0x1fd] sm:$0xff]
  %v4605 = vld [vmem:[%s0 + $0x205] sm:$0xff]
  %v4606 = vld [vmem:[%s0 + $0x20d] sm:$0xff]
  %v4607 = vld [vmem:[%s0 + $0x215] sm:$0xff]
  %v4608 = vld [vmem:[%s0 + $0x21d] sm:$0xff]
  %v4609 = vld [vmem:[%s0 + $0x225] sm:$0xff]
  %v4610 = vld [vmem:[%s0 + $0x22d] sm:$0xff]
  %v4611 = vld [vmem:[%s0 + $0x235] sm:$0xff]
  %v4612 = vld [vmem:[%s0 + $0x23d] sm:$0xff]
  %v4613 = vld [vmem:[%s0 + $0x245] sm:$0xff]
  %v4614 = vld [vmem:[%s0 + $0x24d] sm:$0xff]
  %v4615 = vld [vmem:[%s0 + $0x255] sm:$0xff]
  %v4616 = vld [vmem:[%s0 + $0x25d] sm:$0xff]
  %v4617 = vld [vmem:[%s0 + $0x265] sm:$0xff]
  %v4618 = vld [vmem:[%s0 + $0x26d] sm:$0xff]
  %v4619 = vld [vmem:[%s0 + $0x275] sm:$0xff]
  %v4620 = vld [vmem:[%s0 + $0x27d] sm:$0xff]
  %v4621 = vld [vmem:[%s0 + $0x285] sm:$0xff]
  %v4622 = vld [vmem:[%s0 + $0x28d] sm:$0xff]
  %v4623 = vld [vmem:[%s0 + $0x295] sm:$0xff]
  %v4624 = vld [vmem:[%s0 + $0x29d] sm:$0xff]
  %v4625 = vld [vmem:[%s0 + $0x2a5] sm:$0xff]
  %v4626 = vld [vmem:[%s1 + $0xe0] sm:$0xff]
  %v4627 = vld [vmem:[%s1 + $0xe8] sm:$0xff]
  %v4628 = vld [vmem:[%s1 + $0xf0] sm:$0xff]
  %v4629 = vld [vmem:[%s1 + $0xf8] sm:$0xff]
  %v4631 = vsel %vm193, %v4545, 0
  %v4634 = vsel %vm193, %v4546, 0
  %v4637 = vsel %vm193, %v4547, 0
  %v4640 = vsel %vm193, %v4548, 0
  %v4643 = vsel %vm193, %v4549, 0
  %v4646 = vsel %vm193, %v4550, 0
  %v4649 = vsel %vm193, %v4551, 0
  %v4652 = vsel %vm193, %v4552, 0
  %v4655 = vsel %vm193, %v4553, 0
  %v4658 = vsel %vm193, %v4554, 0
  %v4661 = vsel %vm193, %v4555, 0
  %v4664 = vsel %vm193, %v4556, 0
  %v4667 = vsel %vm193, %v4557, 0
  %v4670 = vsel %vm193, %v4558, 0
  %v4673 = vsel %vm193, %v4559, 0
  %v4676 = vsel %vm193, %v4560, 0
  %v4679 = vsel %vm193, %v4561, 0
  %v4682 = vsel %vm193, %v4562, 0
  %v4685 = vsel %vm193, %v4563, 0
  %v4688 = vsel %vm193, %v4564, 0
  %v4691 = vsel %vm193, %v4565, 0
  %v4694 = vsel %vm193, %v4566, 0
  %v4697 = vsel %vm193, %v4567, 0
  %v4700 = vsel %vm193, %v4568, 0
  %v4703 = vsel %vm193, %v4569, 0
  %v4706 = vsel %vm193, %v4570, 0
  %v4709 = vsel %vm193, %v4571, 0
  %v4712 = vsel %vm193, %v4572, 0
  %v4715 = vsel %vm193, %v4573, 0
  %v4718 = vsel %vm193, %v4574, 0
  %v4721 = vsel %vm193, %v4575, 0
  %v4724 = vsel %vm193, %v4576, 0
  %v4727 = vsel %vm193, %v4577, 0
  %v4730 = vsel %vm193, %v4578, 0
  %v4733 = vsel %vm193, %v4579, 0
  %v4736 = vsel %vm193, %v4580, 0
  %v4739 = vsel %vm193, %v4581, 0
  %v4742 = vsel %vm193, %v4582, 0
  %v4745 = vsel %vm193, %v4583, 0
  %v4748 = vsel %vm193, %v4584, 0
  %v4751 = vsel %vm193, %v4585, 0
  %v4754 = vsel %vm193, %v4586, 0
  %v4757 = vsel %vm193, %v4587, 0
  %v4760 = vsel %vm193, %v4588, 0
  %v4763 = vsel %vm193, %v4589, 0
  %v4766 = vsel %vm193, %v4590, 0
  %v4769 = vsel %vm193, %v4591, 0
  %v4772 = vsel %vm193, %v4592, 0
  %v4775 = vsel %vm193, %v4593, 0
  %v4778 = vsel %vm193, %v4594, 0
  %v4781 = vsel %vm193, %v4595, 0
  %v4784 = vsel %vm193, %v4596, 0
  %v4787 = vsel %vm193, %v4597, 0
  %v4790 = vsel %vm193, %v4598, 0
  %v4793 = vsel %vm193, %v4599, 0
  %v4796 = vsel %vm193, %v4600, 0
  %v4799 = vsel %vm193, %v4601, 0
  %v4802 = vsel %vm193, %v4602, 0
  %v4805 = vsel %vm193, %v4603, 0
  %v4808 = vsel %vm193, %v4604, 0
  %v4811 = vsel %vm193, %v4605, 0
  %v4814 = vsel %vm193, %v4606, 0
  %v4817 = vsel %vm193, %v4607, 0
  %v4820 = vsel %vm193, %v4608, 0
  %v4823 = vsel %vm193, %v4609, 0
  %v4826 = vsel %vm193, %v4610, 0
  %v4829 = vsel %vm193, %v4611, 0
  %v4832 = vsel %vm193, %v4612, 0
  %v4835 = vsel %vm193, %v4613, 0
  %v4838 = vsel %vm193, %v4614, 0
  %v4841 = vsel %vm193, %v4615, 0
  %v4844 = vsel %vm193, %v4616, 0
  %v4847 = vsel %vm193, %v4617, 0
  %v4850 = vsel %vm193, %v4618, 0
  %v4853 = vsel %vm193, %v4619, 0
  %v4856 = vsel %vm193, %v4620, 0
  %v4859 = vsel %vm193, %v4621, 0
  %v4862 = vsel %vm193, %v4622, 0
  %v4865 = vsel %vm193, %v4623, 0
  %v4868 = vsel %vm193, %v4624, 0
  %v4871 = vsel %vm193, %v4625, 0
  %4873 = vmatpush.msra.mxu0 0.0
  %4874 = vmatpush.msra.mxu0 0.0
  %4875 = vmatpush.msra.mxu0 0.0
  %4876 = vmatpush.msra.mxu0 0.0
  %4877 = vmatpush.msra.mxu0 0.0
  %4878 = vmatpush.msra.mxu0 0.0
  %4879 = vmatpush.msra.mxu0 0.0
  %4880 = vmatpush.msra.mxu0 0.0
  %4881 = vmatpush.msra.mxu0 0.0
  %4882 = vmatpush.msra.mxu0 0.0
  %4883 = vmatpush.msra.mxu0 0.0
  %4884 = vmatpush.msra.mxu0 0.0
  %4885 = vmatpush.msra.mxu0 %v4629
  %4886 = vmatpush.msra.mxu0 %v4628
  %4887 = vmatpush.msra.mxu0 %v4627
  %4888 = vmatpush.msra.mxu0 %v4626
  %4889 = vmatmul.f32.gmra.mxu0 %v4631
  %v4890 = vpop.f32.mrf.mxu0
  %v4891 = vadd.f32 0.0, %v4890
  %4892 = vmatmul.f32.gmra.mxu0 %v4634
  %v4893 = vpop.f32.mrf.mxu0
  %v4894 = vadd.f32 0.0, %v4893
  %4895 = vmatmul.f32.gmra.mxu0 %v4637
  %v4896 = vpop.f32.mrf.mxu0
  %v4897 = vadd.f32 0.0, %v4896
  %4898 = vmatmul.f32.gmra.mxu0 %v4640
  %v4899 = vpop.f32.mrf.mxu0
  %v4900 = vadd.f32 0.0, %v4899
  %4901 = vmatmul.f32.gmra.mxu0 %v4643
  %v4902 = vpop.f32.mrf.mxu0
  %v4903 = vadd.f32 0.0, %v4902
  %4904 = vmatmul.f32.gmra.mxu0 %v4646
  %v4905 = vpop.f32.mrf.mxu0
  %v4906 = vadd.f32 0.0, %v4905
  %4907 = vmatmul.f32.gmra.mxu0 %v4649
  %v4908 = vpop.f32.mrf.mxu0
  %v4909 = vadd.f32 0.0, %v4908
  %4910 = vmatmul.f32.gmra.mxu0 %v4652
  %v4911 = vpop.f32.mrf.mxu0
  %v4912 = vadd.f32 0.0, %v4911
  %4913 = vmatmul.f32.gmra.mxu0 %v4655
  %v4914 = vpop.f32.mrf.mxu0
  %v4915 = vadd.f32 0.0, %v4914
  %4916 = vmatmul.f32.gmra.mxu0 %v4658
  %v4917 = vpop.f32.mrf.mxu0
  %v4918 = vadd.f32 0.0, %v4917
  %4919 = vmatmul.f32.gmra.mxu0 %v4661
  %v4920 = vpop.f32.mrf.mxu0
  %v4921 = vadd.f32 0.0, %v4920
  %4922 = vmatmul.f32.gmra.mxu0 %v4664
  %v4923 = vpop.f32.mrf.mxu0
  %v4924 = vadd.f32 0.0, %v4923
  %4925 = vmatmul.f32.gmra.mxu0 %v4667
  %v4926 = vpop.f32.mrf.mxu0
  %v4927 = vadd.f32 0.0, %v4926
  %4928 = vmatmul.f32.gmra.mxu0 %v4670
  %v4929 = vpop.f32.mrf.mxu0
  %v4930 = vadd.f32 0.0, %v4929
  %4931 = vmatmul.f32.gmra.mxu0 %v4673
  %v4932 = vpop.f32.mrf.mxu0
  %v4933 = vadd.f32 0.0, %v4932
  %4934 = vmatmul.f32.gmra.mxu0 %v4676
  %v4935 = vpop.f32.mrf.mxu0
  %v4936 = vadd.f32 0.0, %v4935
  %4937 = vmatmul.f32.gmra.mxu0 %v4679
  %v4938 = vpop.f32.mrf.mxu0
  %v4939 = vadd.f32 0.0, %v4938
  %4940 = vmatmul.f32.gmra.mxu0 %v4682
  %v4941 = vpop.f32.mrf.mxu0
  %v4942 = vadd.f32 0.0, %v4941
  %4943 = vmatmul.f32.gmra.mxu0 %v4685
  %v4944 = vpop.f32.mrf.mxu0
  %v4945 = vadd.f32 0.0, %v4944
  %4946 = vmatmul.f32.gmra.mxu0 %v4688
  %v4947 = vpop.f32.mrf.mxu0
  %v4948 = vadd.f32 0.0, %v4947
  %4949 = vmatmul.f32.gmra.mxu0 %v4691
  %v4950 = vpop.f32.mrf.mxu0
  %v4951 = vadd.f32 0.0, %v4950
  %4952 = vmatmul.f32.gmra.mxu0 %v4694
  %v4953 = vpop.f32.mrf.mxu0
  %v4954 = vadd.f32 0.0, %v4953
  %4955 = vmatmul.f32.gmra.mxu0 %v4697
  %v4956 = vpop.f32.mrf.mxu0
  %v4957 = vadd.f32 0.0, %v4956
  %4958 = vmatmul.f32.gmra.mxu0 %v4700
  %v4959 = vpop.f32.mrf.mxu0
  %v4960 = vadd.f32 0.0, %v4959
  %4961 = vmatmul.f32.gmra.mxu0 %v4703
  %v4962 = vpop.f32.mrf.mxu0
  %v4963 = vadd.f32 0.0, %v4962
  %4964 = vmatmul.f32.gmra.mxu0 %v4706
  %v4965 = vpop.f32.mrf.mxu0
  %v4966 = vadd.f32 0.0, %v4965
  %4967 = vmatmul.f32.gmra.mxu0 %v4709
  %v4968 = vpop.f32.mrf.mxu0
  %v4969 = vadd.f32 0.0, %v4968
  %4970 = vmatmul.f32.gmra.mxu0 %v4712
  %v4971 = vpop.f32.mrf.mxu0
  %v4972 = vadd.f32 0.0, %v4971
  %4973 = vmatmul.f32.gmra.mxu0 %v4715
  %v4974 = vpop.f32.mrf.mxu0
  %v4975 = vadd.f32 0.0, %v4974
  %4976 = vmatmul.f32.gmra.mxu0 %v4718
  %v4977 = vpop.f32.mrf.mxu0
  %v4978 = vadd.f32 0.0, %v4977
  %4979 = vmatmul.f32.gmra.mxu0 %v4721
  %v4980 = vpop.f32.mrf.mxu0
  %v4981 = vadd.f32 0.0, %v4980
  %4982 = vmatmul.f32.gmra.mxu0 %v4724
  %v4983 = vpop.f32.mrf.mxu0
  %v4984 = vadd.f32 0.0, %v4983
  %4985 = vmatmul.f32.gmra.mxu0 %v4727
  %v4986 = vpop.f32.mrf.mxu0
  %v4987 = vadd.f32 0.0, %v4986
  %4988 = vmatmul.f32.gmra.mxu0 %v4730
  %v4989 = vpop.f32.mrf.mxu0
  %v4990 = vadd.f32 0.0, %v4989
  %4991 = vmatmul.f32.gmra.mxu0 %v4733
  %v4992 = vpop.f32.mrf.mxu0
  %v4993 = vadd.f32 0.0, %v4992
  %4994 = vmatmul.f32.gmra.mxu0 %v4736
  %v4995 = vpop.f32.mrf.mxu0
  %v4996 = vadd.f32 0.0, %v4995
  %4997 = vmatmul.f32.gmra.mxu0 %v4739
  %v4998 = vpop.f32.mrf.mxu0
  %v4999 = vadd.f32 0.0, %v4998
  %5000 = vmatmul.f32.gmra.mxu0 %v4742
  %v5001 = vpop.f32.mrf.mxu0
  %v5002 = vadd.f32 0.0, %v5001
  %5003 = vmatmul.f32.gmra.mxu0 %v4745
  %v5004 = vpop.f32.mrf.mxu0
  %v5005 = vadd.f32 0.0, %v5004
  %5006 = vmatmul.f32.gmra.mxu0 %v4748
  %v5007 = vpop.f32.mrf.mxu0
  %v5008 = vadd.f32 0.0, %v5007
  %5009 = vmatmul.f32.gmra.mxu0 %v4751
  %v5010 = vpop.f32.mrf.mxu0
  %v5011 = vadd.f32 0.0, %v5010
  %5012 = vmatmul.f32.gmra.mxu0 %v4754
  %v5013 = vpop.f32.mrf.mxu0
  %v5014 = vadd.f32 0.0, %v5013
  %5015 = vmatmul.f32.gmra.mxu0 %v4757
  %v5016 = vpop.f32.mrf.mxu0
  %v5017 = vadd.f32 0.0, %v5016
  %5018 = vmatmul.f32.gmra.mxu0 %v4760
  %v5019 = vpop.f32.mrf.mxu0
  %v5020 = vadd.f32 0.0, %v5019
  %5021 = vmatmul.f32.gmra.mxu0 %v4763
  %v5022 = vpop.f32.mrf.mxu0
  %v5023 = vadd.f32 0.0, %v5022
  %5024 = vmatmul.f32.gmra.mxu0 %v4766
  %v5025 = vpop.f32.mrf.mxu0
  %v5026 = vadd.f32 0.0, %v5025
  %5027 = vmatmul.f32.gmra.mxu0 %v4769
  %v5028 = vpop.f32.mrf.mxu0
  %v5029 = vadd.f32 0.0, %v5028
  %5030 = vmatmul.f32.gmra.mxu0 %v4772
  %v5031 = vpop.f32.mrf.mxu0
  %v5032 = vadd.f32 0.0, %v5031
  %5033 = vmatmul.f32.gmra.mxu0 %v4775
  %v5034 = vpop.f32.mrf.mxu0
  %v5035 = vadd.f32 0.0, %v5034
  %5036 = vmatmul.f32.gmra.mxu0 %v4778
  %v5037 = vpop.f32.mrf.mxu0
  %v5038 = vadd.f32 0.0, %v5037
  %5039 = vmatmul.f32.gmra.mxu0 %v4781
  %v5040 = vpop.f32.mrf.mxu0
  %v5041 = vadd.f32 0.0, %v5040
  %5042 = vmatmul.f32.gmra.mxu0 %v4784
  %v5043 = vpop.f32.mrf.mxu0
  %v5044 = vadd.f32 0.0, %v5043
  %5045 = vmatmul.f32.gmra.mxu0 %v4787
  %v5046 = vpop.f32.mrf.mxu0
  %v5047 = vadd.f32 0.0, %v5046
  %5048 = vmatmul.f32.gmra.mxu0 %v4790
  %v5049 = vpop.f32.mrf.mxu0
  %v5050 = vadd.f32 0.0, %v5049
  %5051 = vmatmul.f32.gmra.mxu0 %v4793
  %v5052 = vpop.f32.mrf.mxu0
  %v5053 = vadd.f32 0.0, %v5052
  %5054 = vmatmul.f32.gmra.mxu0 %v4796
  %v5055 = vpop.f32.mrf.mxu0
  %v5056 = vadd.f32 0.0, %v5055
  %5057 = vmatmul.f32.gmra.mxu0 %v4799
  %v5058 = vpop.f32.mrf.mxu0
  %v5059 = vadd.f32 0.0, %v5058
  %5060 = vmatmul.f32.gmra.mxu0 %v4802
  %v5061 = vpop.f32.mrf.mxu0
  %v5062 = vadd.f32 0.0, %v5061
  %5063 = vmatmul.f32.gmra.mxu0 %v4805
  %v5064 = vpop.f32.mrf.mxu0
  %v5065 = vadd.f32 0.0, %v5064
  %5066 = vmatmul.f32.gmra.mxu0 %v4808
  %v5067 = vpop.f32.mrf.mxu0
  %v5068 = vadd.f32 0.0, %v5067
  %5069 = vmatmul.f32.gmra.mxu0 %v4811
  %v5070 = vpop.f32.mrf.mxu0
  %v5071 = vadd.f32 0.0, %v5070
  %5072 = vmatmul.f32.gmra.mxu0 %v4814
  %v5073 = vpop.f32.mrf.mxu0
  %v5074 = vadd.f32 0.0, %v5073
  %5075 = vmatmul.f32.gmra.mxu0 %v4817
  %v5076 = vpop.f32.mrf.mxu0
  %v5077 = vadd.f32 0.0, %v5076
  %5078 = vmatmul.f32.gmra.mxu0 %v4820
  %v5079 = vpop.f32.mrf.mxu0
  %v5080 = vadd.f32 0.0, %v5079
  %5081 = vmatmul.f32.gmra.mxu0 %v4823
  %v5082 = vpop.f32.mrf.mxu0
  %v5083 = vadd.f32 0.0, %v5082
  %5084 = vmatmul.f32.gmra.mxu0 %v4826
  %v5085 = vpop.f32.mrf.mxu0
  %v5086 = vadd.f32 0.0, %v5085
  %5087 = vmatmul.f32.gmra.mxu0 %v4829
  %v5088 = vpop.f32.mrf.mxu0
  %v5089 = vadd.f32 0.0, %v5088
  %5090 = vmatmul.f32.gmra.mxu0 %v4832
  %v5091 = vpop.f32.mrf.mxu0
  %v5092 = vadd.f32 0.0, %v5091
  %5093 = vmatmul.f32.gmra.mxu0 %v4835
  %v5094 = vpop.f32.mrf.mxu0
  %v5095 = vadd.f32 0.0, %v5094
  %5096 = vmatmul.f32.gmra.mxu0 %v4838
  %v5097 = vpop.f32.mrf.mxu0
  %v5098 = vadd.f32 0.0, %v5097
  %5099 = vmatmul.f32.gmra.mxu0 %v4841
  %v5100 = vpop.f32.mrf.mxu0
  %v5101 = vadd.f32 0.0, %v5100
  %5102 = vmatmul.f32.gmra.mxu0 %v4844
  %v5103 = vpop.f32.mrf.mxu0
  %v5104 = vadd.f32 0.0, %v5103
  %5105 = vmatmul.f32.gmra.mxu0 %v4847
  %v5106 = vpop.f32.mrf.mxu0
  %v5107 = vadd.f32 0.0, %v5106
  %5108 = vmatmul.f32.gmra.mxu0 %v4850
  %v5109 = vpop.f32.mrf.mxu0
  %v5110 = vadd.f32 0.0, %v5109
  %5111 = vmatmul.f32.gmra.mxu0 %v4853
  %v5112 = vpop.f32.mrf.mxu0
  %v5113 = vadd.f32 0.0, %v5112
  %5114 = vmatmul.f32.gmra.mxu0 %v4856
  %v5115 = vpop.f32.mrf.mxu0
  %v5116 = vadd.f32 0.0, %v5115
  %5117 = vmatmul.f32.gmra.mxu0 %v4859
  %v5118 = vpop.f32.mrf.mxu0
  %v5119 = vadd.f32 0.0, %v5118
  %5120 = vmatmul.f32.gmra.mxu0 %v4862
  %v5121 = vpop.f32.mrf.mxu0
  %v5122 = vadd.f32 0.0, %v5121
  %5123 = vmatmul.f32.gmra.mxu0 %v4865
  %v5124 = vpop.f32.mrf.mxu0
  %v5125 = vadd.f32 0.0, %v5124
  %5126 = vmatmul.f32.gmra.mxu0 %v4868
  %v5127 = vpop.f32.mrf.mxu0
  %v5128 = vadd.f32 0.0, %v5127
  %5129 = vmatmul.f32.gmra.mxu0 %v4871
  %v5130 = vpop.f32.mrf.mxu0
  %v5131 = vadd.f32 0.0, %v5130
  %5132 = vdwg.mxu0
  %v5133 = vadd.f32 %v4464, %v4891
  %v5134 = vadd.f32 %v4465, %v4894
  %v5135 = vadd.f32 %v4466, %v4897
  %v5136 = vadd.f32 %v4467, %v4900
  %v5137 = vadd.f32 %v4468, %v4903
  %v5138 = vadd.f32 %v4469, %v4906
  %v5139 = vadd.f32 %v4470, %v4909
  %v5140 = vadd.f32 %v4471, %v4912
  %v5141 = vadd.f32 %v4472, %v4915
  %v5142 = vadd.f32 %v4473, %v4918
  %v5143 = vadd.f32 %v4474, %v4921
  %v5144 = vadd.f32 %v4475, %v4924
  %v5145 = vadd.f32 %v4476, %v4927
  %v5146 = vadd.f32 %v4477, %v4930
  %v5147 = vadd.f32 %v4478, %v4933
  %v5148 = vadd.f32 %v4479, %v4936
  %v5149 = vadd.f32 %v4480, %v4939
  %v5150 = vadd.f32 %v4481, %v4942
  %v5151 = vadd.f32 %v4482, %v4945
  %v5152 = vadd.f32 %v4483, %v4948
  %v5153 = vadd.f32 %v4484, %v4951
  %v5154 = vadd.f32 %v4485, %v4954
  %v5155 = vadd.f32 %v4486, %v4957
  %v5156 = vadd.f32 %v4487, %v4960
  %v5157 = vadd.f32 %v4488, %v4963
  %v5158 = vadd.f32 %v4489, %v4966
  %v5159 = vadd.f32 %v4490, %v4969
  %v5160 = vadd.f32 %v4491, %v4972
  %v5161 = vadd.f32 %v4492, %v4975
  %v5162 = vadd.f32 %v4493, %v4978
  %v5163 = vadd.f32 %v4494, %v4981
  %v5164 = vadd.f32 %v4495, %v4984
  %v5165 = vadd.f32 %v4496, %v4987
  %v5166 = vadd.f32 %v4497, %v4990
  %v5167 = vadd.f32 %v4498, %v4993
  %v5168 = vadd.f32 %v4499, %v4996
  %v5169 = vadd.f32 %v4500, %v4999
  %v5170 = vadd.f32 %v4501, %v5002
  %v5171 = vadd.f32 %v4502, %v5005
  %v5172 = vadd.f32 %v4503, %v5008
  %v5173 = vadd.f32 %v4504, %v5011
  %v5174 = vadd.f32 %v4505, %v5014
  %v5175 = vadd.f32 %v4506, %v5017
  %v5176 = vadd.f32 %v4507, %v5020
  %v5177 = vadd.f32 %v4508, %v5023
  %v5178 = vadd.f32 %v4509, %v5026
  %v5179 = vadd.f32 %v4510, %v5029
  %v5180 = vadd.f32 %v4511, %v5032
  %v5181 = vadd.f32 %v4512, %v5035
  %v5182 = vadd.f32 %v4513, %v5038
  %v5183 = vadd.f32 %v4514, %v5041
  %v5184 = vadd.f32 %v4515, %v5044
  %v5185 = vadd.f32 %v4516, %v5047
  %v5186 = vadd.f32 %v4517, %v5050
  %v5187 = vadd.f32 %v4518, %v5053
  %v5188 = vadd.f32 %v4519, %v5056
  %v5189 = vadd.f32 %v4520, %v5059
  %v5190 = vadd.f32 %v4521, %v5062
  %v5191 = vadd.f32 %v4522, %v5065
  %v5192 = vadd.f32 %v4523, %v5068
  %v5193 = vadd.f32 %v4524, %v5071
  %v5194 = vadd.f32 %v4525, %v5074
  %v5195 = vadd.f32 %v4526, %v5077
  %v5196 = vadd.f32 %v4527, %v5080
  %v5197 = vadd.f32 %v4528, %v5083
  %v5198 = vadd.f32 %v4529, %v5086
  %v5199 = vadd.f32 %v4530, %v5089
  %v5200 = vadd.f32 %v4531, %v5092
  %v5201 = vadd.f32 %v4532, %v5095
  %v5202 = vadd.f32 %v4533, %v5098
  %v5203 = vadd.f32 %v4534, %v5101
  %v5204 = vadd.f32 %v4535, %v5104
  %v5205 = vadd.f32 %v4536, %v5107
  %v5206 = vadd.f32 %v4537, %v5110
  %v5207 = vadd.f32 %v4538, %v5113
  %v5208 = vadd.f32 %v4539, %v5116
  %v5209 = vadd.f32 %v4540, %v5119
  %v5210 = vadd.f32 %v4541, %v5122
  %v5211 = vadd.f32 %v4542, %v5125
  %v5212 = vadd.f32 %v4543, %v5128
  %v5213 = vadd.f32 %v4544, %v5131
  %v5214 = vld [vmem:[%s0 + $0x26] sm:$0xff]
  %v5215 = vld [vmem:[%s0 + $0x2e] sm:$0xff]
  %v5216 = vld [vmem:[%s0 + $0x36] sm:$0xff]
  %v5217 = vld [vmem:[%s0 + $0x3e] sm:$0xff]
  %v5218 = vld [vmem:[%s0 + $0x46] sm:$0xff]
  %v5219 = vld [vmem:[%s0 + $0x4e] sm:$0xff]
  %v5220 = vld [vmem:[%s0 + $0x56] sm:$0xff]
  %v5221 = vld [vmem:[%s0 + $0x5e] sm:$0xff]
  %v5222 = vld [vmem:[%s0 + $0x66] sm:$0xff]
  %v5223 = vld [vmem:[%s0 + $0x6e] sm:$0xff]
  %v5224 = vld [vmem:[%s0 + $0x76] sm:$0xff]
  %v5225 = vld [vmem:[%s0 + $0x7e] sm:$0xff]
  %v5226 = vld [vmem:[%s0 + $0x86] sm:$0xff]
  %v5227 = vld [vmem:[%s0 + $0x8e] sm:$0xff]
  %v5228 = vld [vmem:[%s0 + $0x96] sm:$0xff]
  %v5229 = vld [vmem:[%s0 + $0x9e] sm:$0xff]
  %v5230 = vld [vmem:[%s0 + $0xa6] sm:$0xff]
  %v5231 = vld [vmem:[%s0 + $0xae] sm:$0xff]
  %v5232 = vld [vmem:[%s0 + $0xb6] sm:$0xff]
  %v5233 = vld [vmem:[%s0 + $0xbe] sm:$0xff]
  %v5234 = vld [vmem:[%s0 + $0xc6] sm:$0xff]
  %v5235 = vld [vmem:[%s0 + $0xce] sm:$0xff]
  %v5236 = vld [vmem:[%s0 + $0xd6] sm:$0xff]
  %v5237 = vld [vmem:[%s0 + $0xde] sm:$0xff]
  %v5238 = vld [vmem:[%s0 + $0xe6] sm:$0xff]
  %v5239 = vld [vmem:[%s0 + $0xee] sm:$0xff]
  %v5240 = vld [vmem:[%s0 + $0xf6] sm:$0xff]
  %v5241 = vld [vmem:[%s0 + $0xfe] sm:$0xff]
  %v5242 = vld [vmem:[%s0 + $0x106] sm:$0xff]
  %v5243 = vld [vmem:[%s0 + $0x10e] sm:$0xff]
  %v5244 = vld [vmem:[%s0 + $0x116] sm:$0xff]
  %v5245 = vld [vmem:[%s0 + $0x11e] sm:$0xff]
  %v5246 = vld [vmem:[%s0 + $0x126] sm:$0xff]
  %v5247 = vld [vmem:[%s0 + $0x12e] sm:$0xff]
  %v5248 = vld [vmem:[%s0 + $0x136] sm:$0xff]
  %v5249 = vld [vmem:[%s0 + $0x13e] sm:$0xff]
  %v5250 = vld [vmem:[%s0 + $0x146] sm:$0xff]
  %v5251 = vld [vmem:[%s0 + $0x14e] sm:$0xff]
  %v5252 = vld [vmem:[%s0 + $0x156] sm:$0xff]
  %v5253 = vld [vmem:[%s0 + $0x15e] sm:$0xff]
  %v5254 = vld [vmem:[%s0 + $0x166] sm:$0xff]
  %v5255 = vld [vmem:[%s0 + $0x16e] sm:$0xff]
  %v5256 = vld [vmem:[%s0 + $0x176] sm:$0xff]
  %v5257 = vld [vmem:[%s0 + $0x17e] sm:$0xff]
  %v5258 = vld [vmem:[%s0 + $0x186] sm:$0xff]
  %v5259 = vld [vmem:[%s0 + $0x18e] sm:$0xff]
  %v5260 = vld [vmem:[%s0 + $0x196] sm:$0xff]
  %v5261 = vld [vmem:[%s0 + $0x19e] sm:$0xff]
  %v5262 = vld [vmem:[%s0 + $0x1a6] sm:$0xff]
  %v5263 = vld [vmem:[%s0 + $0x1ae] sm:$0xff]
  %v5264 = vld [vmem:[%s0 + $0x1b6] sm:$0xff]
  %v5265 = vld [vmem:[%s0 + $0x1be] sm:$0xff]
  %v5266 = vld [vmem:[%s0 + $0x1c6] sm:$0xff]
  %v5267 = vld [vmem:[%s0 + $0x1ce] sm:$0xff]
  %v5268 = vld [vmem:[%s0 + $0x1d6] sm:$0xff]
  %v5269 = vld [vmem:[%s0 + $0x1de] sm:$0xff]
  %v5270 = vld [vmem:[%s0 + $0x1e6] sm:$0xff]
  %v5271 = vld [vmem:[%s0 + $0x1ee] sm:$0xff]
  %v5272 = vld [vmem:[%s0 + $0x1f6] sm:$0xff]
  %v5273 = vld [vmem:[%s0 + $0x1fe] sm:$0xff]
  %v5274 = vld [vmem:[%s0 + $0x206] sm:$0xff]
  %v5275 = vld [vmem:[%s0 + $0x20e] sm:$0xff]
  %v5276 = vld [vmem:[%s0 + $0x216] sm:$0xff]
  %v5277 = vld [vmem:[%s0 + $0x21e] sm:$0xff]
  %v5278 = vld [vmem:[%s0 + $0x226] sm:$0xff]
  %v5279 = vld [vmem:[%s0 + $0x22e] sm:$0xff]
  %v5280 = vld [vmem:[%s0 + $0x236] sm:$0xff]
  %v5281 = vld [vmem:[%s0 + $0x23e] sm:$0xff]
  %v5282 = vld [vmem:[%s0 + $0x246] sm:$0xff]
  %v5283 = vld [vmem:[%s0 + $0x24e] sm:$0xff]
  %v5284 = vld [vmem:[%s0 + $0x256] sm:$0xff]
  %v5285 = vld [vmem:[%s0 + $0x25e] sm:$0xff]
  %v5286 = vld [vmem:[%s0 + $0x266] sm:$0xff]
  %v5287 = vld [vmem:[%s0 + $0x26e] sm:$0xff]
  %v5288 = vld [vmem:[%s0 + $0x276] sm:$0xff]
  %v5289 = vld [vmem:[%s0 + $0x27e] sm:$0xff]
  %v5290 = vld [vmem:[%s0 + $0x286] sm:$0xff]
  %v5291 = vld [vmem:[%s0 + $0x28e] sm:$0xff]
  %v5292 = vld [vmem:[%s0 + $0x296] sm:$0xff]
  %v5293 = vld [vmem:[%s0 + $0x29e] sm:$0xff]
  %v5294 = vld [vmem:[%s0 + $0x2a6] sm:$0xff]
  %v5295 = vld [vmem:[%s1 + $0x100] sm:$0xff]
  %v5296 = vld [vmem:[%s1 + $0x108] sm:$0xff]
  %v5297 = vld [vmem:[%s1 + $0x110] sm:$0xff]
  %v5298 = vld [vmem:[%s1 + $0x118] sm:$0xff]
  %v5300 = vsel %vm193, %v5214, 0
  %v5303 = vsel %vm193, %v5215, 0
  %v5306 = vsel %vm193, %v5216, 0
  %v5309 = vsel %vm193, %v5217, 0
  %v5312 = vsel %vm193, %v5218, 0
  %v5315 = vsel %vm193, %v5219, 0
  %v5318 = vsel %vm193, %v5220, 0
  %v5321 = vsel %vm193, %v5221, 0
  %v5324 = vsel %vm193, %v5222, 0
  %v5327 = vsel %vm193, %v5223, 0
  %v5330 = vsel %vm193, %v5224, 0
  %v5333 = vsel %vm193, %v5225, 0
  %v5336 = vsel %vm193, %v5226, 0
  %v5339 = vsel %vm193, %v5227, 0
  %v5342 = vsel %vm193, %v5228, 0
  %v5345 = vsel %vm193, %v5229, 0
  %v5348 = vsel %vm193, %v5230, 0
  %v5351 = vsel %vm193, %v5231, 0
  %v5354 = vsel %vm193, %v5232, 0
  %v5357 = vsel %vm193, %v5233, 0
  %v5360 = vsel %vm193, %v5234, 0
  %v5363 = vsel %vm193, %v5235, 0
  %v5366 = vsel %vm193, %v5236, 0
  %v5369 = vsel %vm193, %v5237, 0
  %v5372 = vsel %vm193, %v5238, 0
  %v5375 = vsel %vm193, %v5239, 0
  %v5378 = vsel %vm193, %v5240, 0
  %v5381 = vsel %vm193, %v5241, 0
  %v5384 = vsel %vm193, %v5242, 0
  %v5387 = vsel %vm193, %v5243, 0
  %v5390 = vsel %vm193, %v5244, 0
  %v5393 = vsel %vm193, %v5245, 0
  %v5396 = vsel %vm193, %v5246, 0
  %v5399 = vsel %vm193, %v5247, 0
  %v5402 = vsel %vm193, %v5248, 0
  %v5405 = vsel %vm193, %v5249, 0
  %v5408 = vsel %vm193, %v5250, 0
  %v5411 = vsel %vm193, %v5251, 0
  %v5414 = vsel %vm193, %v5252, 0
  %v5417 = vsel %vm193, %v5253, 0
  %v5420 = vsel %vm193, %v5254, 0
  %v5423 = vsel %vm193, %v5255, 0
  %v5426 = vsel %vm193, %v5256, 0
  %v5429 = vsel %vm193, %v5257, 0
  %v5432 = vsel %vm193, %v5258, 0
  %v5435 = vsel %vm193, %v5259, 0
  %v5438 = vsel %vm193, %v5260, 0
  %v5441 = vsel %vm193, %v5261, 0
  %v5444 = vsel %vm193, %v5262, 0
  %v5447 = vsel %vm193, %v5263, 0
  %v5450 = vsel %vm193, %v5264, 0
  %v5453 = vsel %vm193, %v5265, 0
  %v5456 = vsel %vm193, %v5266, 0
  %v5459 = vsel %vm193, %v5267, 0
  %v5462 = vsel %vm193, %v5268, 0
  %v5465 = vsel %vm193, %v5269, 0
  %v5468 = vsel %vm193, %v5270, 0
  %v5471 = vsel %vm193, %v5271, 0
  %v5474 = vsel %vm193, %v5272, 0
  %v5477 = vsel %vm193, %v5273, 0
  %v5480 = vsel %vm193, %v5274, 0
  %v5483 = vsel %vm193, %v5275, 0
  %v5486 = vsel %vm193, %v5276, 0
  %v5489 = vsel %vm193, %v5277, 0
  %v5492 = vsel %vm193, %v5278, 0
  %v5495 = vsel %vm193, %v5279, 0
  %v5498 = vsel %vm193, %v5280, 0
  %v5501 = vsel %vm193, %v5281, 0
  %v5504 = vsel %vm193, %v5282, 0
  %v5507 = vsel %vm193, %v5283, 0
  %v5510 = vsel %vm193, %v5284, 0
  %v5513 = vsel %vm193, %v5285, 0
  %v5516 = vsel %vm193, %v5286, 0
  %v5519 = vsel %vm193, %v5287, 0
  %v5522 = vsel %vm193, %v5288, 0
  %v5525 = vsel %vm193, %v5289, 0
  %v5528 = vsel %vm193, %v5290, 0
  %v5531 = vsel %vm193, %v5291, 0
  %v5534 = vsel %vm193, %v5292, 0
  %v5537 = vsel %vm193, %v5293, 0
  %v5540 = vsel %vm193, %v5294, 0
  %5542 = vmatpush.msra.mxu0 0.0
  %5543 = vmatpush.msra.mxu0 0.0
  %5544 = vmatpush.msra.mxu0 0.0
  %5545 = vmatpush.msra.mxu0 0.0
  %5546 = vmatpush.msra.mxu0 0.0
  %5547 = vmatpush.msra.mxu0 0.0
  %5548 = vmatpush.msra.mxu0 0.0
  %5549 = vmatpush.msra.mxu0 0.0
  %5550 = vmatpush.msra.mxu0 0.0
  %5551 = vmatpush.msra.mxu0 0.0
  %5552 = vmatpush.msra.mxu0 0.0
  %5553 = vmatpush.msra.mxu0 0.0
  %5554 = vmatpush.msra.mxu0 %v5298
  %5555 = vmatpush.msra.mxu0 %v5297
  %5556 = vmatpush.msra.mxu0 %v5296
  %5557 = vmatpush.msra.mxu0 %v5295
  %5558 = vmatmul.f32.gmra.mxu0 %v5300
  %v5559 = vpop.f32.mrf.mxu0
  %v5560 = vadd.f32 0.0, %v5559
  %5561 = vmatmul.f32.gmra.mxu0 %v5303
  %v5562 = vpop.f32.mrf.mxu0
  %v5563 = vadd.f32 0.0, %v5562
  %5564 = vmatmul.f32.gmra.mxu0 %v5306
  %v5565 = vpop.f32.mrf.mxu0
  %v5566 = vadd.f32 0.0, %v5565
  %5567 = vmatmul.f32.gmra.mxu0 %v5309
  %v5568 = vpop.f32.mrf.mxu0
  %v5569 = vadd.f32 0.0, %v5568
  %5570 = vmatmul.f32.gmra.mxu0 %v5312
  %v5571 = vpop.f32.mrf.mxu0
  %v5572 = vadd.f32 0.0, %v5571
  %5573 = vmatmul.f32.gmra.mxu0 %v5315
  %v5574 = vpop.f32.mrf.mxu0
  %v5575 = vadd.f32 0.0, %v5574
  %5576 = vmatmul.f32.gmra.mxu0 %v5318
  %v5577 = vpop.f32.mrf.mxu0
  %v5578 = vadd.f32 0.0, %v5577
  %5579 = vmatmul.f32.gmra.mxu0 %v5321
  %v5580 = vpop.f32.mrf.mxu0
  %v5581 = vadd.f32 0.0, %v5580
  %5582 = vmatmul.f32.gmra.mxu0 %v5324
  %v5583 = vpop.f32.mrf.mxu0
  %v5584 = vadd.f32 0.0, %v5583
  %5585 = vmatmul.f32.gmra.mxu0 %v5327
  %v5586 = vpop.f32.mrf.mxu0
  %v5587 = vadd.f32 0.0, %v5586
  %5588 = vmatmul.f32.gmra.mxu0 %v5330
  %v5589 = vpop.f32.mrf.mxu0
  %v5590 = vadd.f32 0.0, %v5589
  %5591 = vmatmul.f32.gmra.mxu0 %v5333
  %v5592 = vpop.f32.mrf.mxu0
  %v5593 = vadd.f32 0.0, %v5592
  %5594 = vmatmul.f32.gmra.mxu0 %v5336
  %v5595 = vpop.f32.mrf.mxu0
  %v5596 = vadd.f32 0.0, %v5595
  %5597 = vmatmul.f32.gmra.mxu0 %v5339
  %v5598 = vpop.f32.mrf.mxu0
  %v5599 = vadd.f32 0.0, %v5598
  %5600 = vmatmul.f32.gmra.mxu0 %v5342
  %v5601 = vpop.f32.mrf.mxu0
  %v5602 = vadd.f32 0.0, %v5601
  %5603 = vmatmul.f32.gmra.mxu0 %v5345
  %v5604 = vpop.f32.mrf.mxu0
  %v5605 = vadd.f32 0.0, %v5604
  %5606 = vmatmul.f32.gmra.mxu0 %v5348
  %v5607 = vpop.f32.mrf.mxu0
  %v5608 = vadd.f32 0.0, %v5607
  %5609 = vmatmul.f32.gmra.mxu0 %v5351
  %v5610 = vpop.f32.mrf.mxu0
  %v5611 = vadd.f32 0.0, %v5610
  %5612 = vmatmul.f32.gmra.mxu0 %v5354
  %v5613 = vpop.f32.mrf.mxu0
  %v5614 = vadd.f32 0.0, %v5613
  %5615 = vmatmul.f32.gmra.mxu0 %v5357
  %v5616 = vpop.f32.mrf.mxu0
  %v5617 = vadd.f32 0.0, %v5616
  %5618 = vmatmul.f32.gmra.mxu0 %v5360
  %v5619 = vpop.f32.mrf.mxu0
  %v5620 = vadd.f32 0.0, %v5619
  %5621 = vmatmul.f32.gmra.mxu0 %v5363
  %v5622 = vpop.f32.mrf.mxu0
  %v5623 = vadd.f32 0.0, %v5622
  %5624 = vmatmul.f32.gmra.mxu0 %v5366
  %v5625 = vpop.f32.mrf.mxu0
  %v5626 = vadd.f32 0.0, %v5625
  %5627 = vmatmul.f32.gmra.mxu0 %v5369
  %v5628 = vpop.f32.mrf.mxu0
  %v5629 = vadd.f32 0.0, %v5628
  %5630 = vmatmul.f32.gmra.mxu0 %v5372
  %v5631 = vpop.f32.mrf.mxu0
  %v5632 = vadd.f32 0.0, %v5631
  %5633 = vmatmul.f32.gmra.mxu0 %v5375
  %v5634 = vpop.f32.mrf.mxu0
  %v5635 = vadd.f32 0.0, %v5634
  %5636 = vmatmul.f32.gmra.mxu0 %v5378
  %v5637 = vpop.f32.mrf.mxu0
  %v5638 = vadd.f32 0.0, %v5637
  %5639 = vmatmul.f32.gmra.mxu0 %v5381
  %v5640 = vpop.f32.mrf.mxu0
  %v5641 = vadd.f32 0.0, %v5640
  %5642 = vmatmul.f32.gmra.mxu0 %v5384
  %v5643 = vpop.f32.mrf.mxu0
  %v5644 = vadd.f32 0.0, %v5643
  %5645 = vmatmul.f32.gmra.mxu0 %v5387
  %v5646 = vpop.f32.mrf.mxu0
  %v5647 = vadd.f32 0.0, %v5646
  %5648 = vmatmul.f32.gmra.mxu0 %v5390
  %v5649 = vpop.f32.mrf.mxu0
  %v5650 = vadd.f32 0.0, %v5649
  %5651 = vmatmul.f32.gmra.mxu0 %v5393
  %v5652 = vpop.f32.mrf.mxu0
  %v5653 = vadd.f32 0.0, %v5652
  %5654 = vmatmul.f32.gmra.mxu0 %v5396
  %v5655 = vpop.f32.mrf.mxu0
  %v5656 = vadd.f32 0.0, %v5655
  %5657 = vmatmul.f32.gmra.mxu0 %v5399
  %v5658 = vpop.f32.mrf.mxu0
  %v5659 = vadd.f32 0.0, %v5658
  %5660 = vmatmul.f32.gmra.mxu0 %v5402
  %v5661 = vpop.f32.mrf.mxu0
  %v5662 = vadd.f32 0.0, %v5661
  %5663 = vmatmul.f32.gmra.mxu0 %v5405
  %v5664 = vpop.f32.mrf.mxu0
  %v5665 = vadd.f32 0.0, %v5664
  %5666 = vmatmul.f32.gmra.mxu0 %v5408
  %v5667 = vpop.f32.mrf.mxu0
  %v5668 = vadd.f32 0.0, %v5667
  %5669 = vmatmul.f32.gmra.mxu0 %v5411
  %v5670 = vpop.f32.mrf.mxu0
  %v5671 = vadd.f32 0.0, %v5670
  %5672 = vmatmul.f32.gmra.mxu0 %v5414
  %v5673 = vpop.f32.mrf.mxu0
  %v5674 = vadd.f32 0.0, %v5673
  %5675 = vmatmul.f32.gmra.mxu0 %v5417
  %v5676 = vpop.f32.mrf.mxu0
  %v5677 = vadd.f32 0.0, %v5676
  %5678 = vmatmul.f32.gmra.mxu0 %v5420
  %v5679 = vpop.f32.mrf.mxu0
  %v5680 = vadd.f32 0.0, %v5679
  %5681 = vmatmul.f32.gmra.mxu0 %v5423
  %v5682 = vpop.f32.mrf.mxu0
  %v5683 = vadd.f32 0.0, %v5682
  %5684 = vmatmul.f32.gmra.mxu0 %v5426
  %v5685 = vpop.f32.mrf.mxu0
  %v5686 = vadd.f32 0.0, %v5685
  %5687 = vmatmul.f32.gmra.mxu0 %v5429
  %v5688 = vpop.f32.mrf.mxu0
  %v5689 = vadd.f32 0.0, %v5688
  %5690 = vmatmul.f32.gmra.mxu0 %v5432
  %v5691 = vpop.f32.mrf.mxu0
  %v5692 = vadd.f32 0.0, %v5691
  %5693 = vmatmul.f32.gmra.mxu0 %v5435
  %v5694 = vpop.f32.mrf.mxu0
  %v5695 = vadd.f32 0.0, %v5694
  %5696 = vmatmul.f32.gmra.mxu0 %v5438
  %v5697 = vpop.f32.mrf.mxu0
  %v5698 = vadd.f32 0.0, %v5697
  %5699 = vmatmul.f32.gmra.mxu0 %v5441
  %v5700 = vpop.f32.mrf.mxu0
  %v5701 = vadd.f32 0.0, %v5700
  %5702 = vmatmul.f32.gmra.mxu0 %v5444
  %v5703 = vpop.f32.mrf.mxu0
  %v5704 = vadd.f32 0.0, %v5703
  %5705 = vmatmul.f32.gmra.mxu0 %v5447
  %v5706 = vpop.f32.mrf.mxu0
  %v5707 = vadd.f32 0.0, %v5706
  %5708 = vmatmul.f32.gmra.mxu0 %v5450
  %v5709 = vpop.f32.mrf.mxu0
  %v5710 = vadd.f32 0.0, %v5709
  %5711 = vmatmul.f32.gmra.mxu0 %v5453
  %v5712 = vpop.f32.mrf.mxu0
  %v5713 = vadd.f32 0.0, %v5712
  %5714 = vmatmul.f32.gmra.mxu0 %v5456
  %v5715 = vpop.f32.mrf.mxu0
  %v5716 = vadd.f32 0.0, %v5715
  %5717 = vmatmul.f32.gmra.mxu0 %v5459
  %v5718 = vpop.f32.mrf.mxu0
  %v5719 = vadd.f32 0.0, %v5718
  %5720 = vmatmul.f32.gmra.mxu0 %v5462
  %v5721 = vpop.f32.mrf.mxu0
  %v5722 = vadd.f32 0.0, %v5721
  %5723 = vmatmul.f32.gmra.mxu0 %v5465
  %v5724 = vpop.f32.mrf.mxu0
  %v5725 = vadd.f32 0.0, %v5724
  %5726 = vmatmul.f32.gmra.mxu0 %v5468
  %v5727 = vpop.f32.mrf.mxu0
  %v5728 = vadd.f32 0.0, %v5727
  %5729 = vmatmul.f32.gmra.mxu0 %v5471
  %v5730 = vpop.f32.mrf.mxu0
  %v5731 = vadd.f32 0.0, %v5730
  %5732 = vmatmul.f32.gmra.mxu0 %v5474
  %v5733 = vpop.f32.mrf.mxu0
  %v5734 = vadd.f32 0.0, %v5733
  %5735 = vmatmul.f32.gmra.mxu0 %v5477
  %v5736 = vpop.f32.mrf.mxu0
  %v5737 = vadd.f32 0.0, %v5736
  %5738 = vmatmul.f32.gmra.mxu0 %v5480
  %v5739 = vpop.f32.mrf.mxu0
  %v5740 = vadd.f32 0.0, %v5739
  %5741 = vmatmul.f32.gmra.mxu0 %v5483
  %v5742 = vpop.f32.mrf.mxu0
  %v5743 = vadd.f32 0.0, %v5742
  %5744 = vmatmul.f32.gmra.mxu0 %v5486
  %v5745 = vpop.f32.mrf.mxu0
  %v5746 = vadd.f32 0.0, %v5745
  %5747 = vmatmul.f32.gmra.mxu0 %v5489
  %v5748 = vpop.f32.mrf.mxu0
  %v5749 = vadd.f32 0.0, %v5748
  %5750 = vmatmul.f32.gmra.mxu0 %v5492
  %v5751 = vpop.f32.mrf.mxu0
  %v5752 = vadd.f32 0.0, %v5751
  %5753 = vmatmul.f32.gmra.mxu0 %v5495
  %v5754 = vpop.f32.mrf.mxu0
  %v5755 = vadd.f32 0.0, %v5754
  %5756 = vmatmul.f32.gmra.mxu0 %v5498
  %v5757 = vpop.f32.mrf.mxu0
  %v5758 = vadd.f32 0.0, %v5757
  %5759 = vmatmul.f32.gmra.mxu0 %v5501
  %v5760 = vpop.f32.mrf.mxu0
  %v5761 = vadd.f32 0.0, %v5760
  %5762 = vmatmul.f32.gmra.mxu0 %v5504
  %v5763 = vpop.f32.mrf.mxu0
  %v5764 = vadd.f32 0.0, %v5763
  %5765 = vmatmul.f32.gmra.mxu0 %v5507
  %v5766 = vpop.f32.mrf.mxu0
  %v5767 = vadd.f32 0.0, %v5766
  %5768 = vmatmul.f32.gmra.mxu0 %v5510
  %v5769 = vpop.f32.mrf.mxu0
  %v5770 = vadd.f32 0.0, %v5769
  %5771 = vmatmul.f32.gmra.mxu0 %v5513
  %v5772 = vpop.f32.mrf.mxu0
  %v5773 = vadd.f32 0.0, %v5772
  %5774 = vmatmul.f32.gmra.mxu0 %v5516
  %v5775 = vpop.f32.mrf.mxu0
  %v5776 = vadd.f32 0.0, %v5775
  %5777 = vmatmul.f32.gmra.mxu0 %v5519
  %v5778 = vpop.f32.mrf.mxu0
  %v5779 = vadd.f32 0.0, %v5778
  %5780 = vmatmul.f32.gmra.mxu0 %v5522
  %v5781 = vpop.f32.mrf.mxu0
  %v5782 = vadd.f32 0.0, %v5781
  %5783 = vmatmul.f32.gmra.mxu0 %v5525
  %v5784 = vpop.f32.mrf.mxu0
  %v5785 = vadd.f32 0.0, %v5784
  %5786 = vmatmul.f32.gmra.mxu0 %v5528
  %v5787 = vpop.f32.mrf.mxu0
  %v5788 = vadd.f32 0.0, %v5787
  %5789 = vmatmul.f32.gmra.mxu0 %v5531
  %v5790 = vpop.f32.mrf.mxu0
  %v5791 = vadd.f32 0.0, %v5790
  %5792 = vmatmul.f32.gmra.mxu0 %v5534
  %v5793 = vpop.f32.mrf.mxu0
  %v5794 = vadd.f32 0.0, %v5793
  %5795 = vmatmul.f32.gmra.mxu0 %v5537
  %v5796 = vpop.f32.mrf.mxu0
  %v5797 = vadd.f32 0.0, %v5796
  %5798 = vmatmul.f32.gmra.mxu0 %v5540
  %v5799 = vpop.f32.mrf.mxu0
  %v5800 = vadd.f32 0.0, %v5799
  %5801 = vdwg.mxu0
  %v5802 = vadd.f32 %v5133, %v5560
  %v5803 = vadd.f32 %v5134, %v5563
  %v5804 = vadd.f32 %v5135, %v5566
  %v5805 = vadd.f32 %v5136, %v5569
  %v5806 = vadd.f32 %v5137, %v5572
  %v5807 = vadd.f32 %v5138, %v5575
  %v5808 = vadd.f32 %v5139, %v5578
  %v5809 = vadd.f32 %v5140, %v5581
  %v5810 = vadd.f32 %v5141, %v5584
  %v5811 = vadd.f32 %v5142, %v5587
  %v5812 = vadd.f32 %v5143, %v5590
  %v5813 = vadd.f32 %v5144, %v5593
  %v5814 = vadd.f32 %v5145, %v5596
  %v5815 = vadd.f32 %v5146, %v5599
  %v5816 = vadd.f32 %v5147, %v5602
  %v5817 = vadd.f32 %v5148, %v5605
  %v5818 = vadd.f32 %v5149, %v5608
  %v5819 = vadd.f32 %v5150, %v5611
  %v5820 = vadd.f32 %v5151, %v5614
  %v5821 = vadd.f32 %v5152, %v5617
  %v5822 = vadd.f32 %v5153, %v5620
  %v5823 = vadd.f32 %v5154, %v5623
  %v5824 = vadd.f32 %v5155, %v5626
  %v5825 = vadd.f32 %v5156, %v5629
  %v5826 = vadd.f32 %v5157, %v5632
  %v5827 = vadd.f32 %v5158, %v5635
  %v5828 = vadd.f32 %v5159, %v5638
  %v5829 = vadd.f32 %v5160, %v5641
  %v5830 = vadd.f32 %v5161, %v5644
  %v5831 = vadd.f32 %v5162, %v5647
  %v5832 = vadd.f32 %v5163, %v5650
  %v5833 = vadd.f32 %v5164, %v5653
  %v5834 = vadd.f32 %v5165, %v5656
  %v5835 = vadd.f32 %v5166, %v5659
  %v5836 = vadd.f32 %v5167, %v5662
  %v5837 = vadd.f32 %v5168, %v5665
  %v5838 = vadd.f32 %v5169, %v5668
  %v5839 = vadd.f32 %v5170, %v5671
  %v5840 = vadd.f32 %v5171, %v5674
  %v5841 = vadd.f32 %v5172, %v5677
  %v5842 = vadd.f32 %v5173, %v5680
  %v5843 = vadd.f32 %v5174, %v5683
  %v5844 = vadd.f32 %v5175, %v5686
  %v5845 = vadd.f32 %v5176, %v5689
  %v5846 = vadd.f32 %v5177, %v5692
  %v5847 = vadd.f32 %v5178, %v5695
  %v5848 = vadd.f32 %v5179, %v5698
  %v5849 = vadd.f32 %v5180, %v5701
  %v5850 = vadd.f32 %v5181, %v5704
  %v5851 = vadd.f32 %v5182, %v5707
  %v5852 = vadd.f32 %v5183, %v5710
  %v5853 = vadd.f32 %v5184, %v5713
  %v5854 = vadd.f32 %v5185, %v5716
  %v5855 = vadd.f32 %v5186, %v5719
  %v5856 = vadd.f32 %v5187, %v5722
  %v5857 = vadd.f32 %v5188, %v5725
  %v5858 = vadd.f32 %v5189, %v5728
  %v5859 = vadd.f32 %v5190, %v5731
  %v5860 = vadd.f32 %v5191, %v5734
  %v5861 = vadd.f32 %v5192, %v5737
  %v5862 = vadd.f32 %v5193, %v5740
  %v5863 = vadd.f32 %v5194, %v5743
  %v5864 = vadd.f32 %v5195, %v5746
  %v5865 = vadd.f32 %v5196, %v5749
  %v5866 = vadd.f32 %v5197, %v5752
  %v5867 = vadd.f32 %v5198, %v5755
  %v5868 = vadd.f32 %v5199, %v5758
  %v5869 = vadd.f32 %v5200, %v5761
  %v5870 = vadd.f32 %v5201, %v5764
  %v5871 = vadd.f32 %v5202, %v5767
  %v5872 = vadd.f32 %v5203, %v5770
  %v5873 = vadd.f32 %v5204, %v5773
  %v5874 = vadd.f32 %v5205, %v5776
  %v5875 = vadd.f32 %v5206, %v5779
  %v5876 = vadd.f32 %v5207, %v5782
  %v5877 = vadd.f32 %v5208, %v5785
  %v5878 = vadd.f32 %v5209, %v5788
  %v5879 = vadd.f32 %v5210, %v5791
  %v5880 = vadd.f32 %v5211, %v5794
  %v5881 = vadd.f32 %v5212, %v5797
  %v5882 = vadd.f32 %v5213, %v5800
  %v5883 = vld [vmem:[%s2] sm:$0x1]
  %v5885 = vperm.slane %v5883, 0
  %v5887 = vadd.f32 %v5802, %v5885
  %v5888 = vadd.f32 %v5803, %v5885
  %v5889 = vadd.f32 %v5804, %v5885
  %v5890 = vadd.f32 %v5805, %v5885
  %v5891 = vadd.f32 %v5806, %v5885
  %v5892 = vadd.f32 %v5807, %v5885
  %v5893 = vadd.f32 %v5808, %v5885
  %v5894 = vadd.f32 %v5809, %v5885
  %v5895 = vadd.f32 %v5810, %v5885
  %v5896 = vadd.f32 %v5811, %v5885
  %v5897 = vadd.f32 %v5812, %v5885
  %v5898 = vadd.f32 %v5813, %v5885
  %v5899 = vadd.f32 %v5814, %v5885
  %v5900 = vadd.f32 %v5815, %v5885
  %v5901 = vadd.f32 %v5816, %v5885
  %v5902 = vadd.f32 %v5817, %v5885
  %v5903 = vadd.f32 %v5818, %v5885
  %v5904 = vadd.f32 %v5819, %v5885
  %v5905 = vadd.f32 %v5820, %v5885
  %v5906 = vadd.f32 %v5821, %v5885
  %v5907 = vadd.f32 %v5822, %v5885
  %v5908 = vadd.f32 %v5823, %v5885
  %v5909 = vadd.f32 %v5824, %v5885
  %v5910 = vadd.f32 %v5825, %v5885
  %v5911 = vadd.f32 %v5826, %v5885
  %v5912 = vadd.f32 %v5827, %v5885
  %v5913 = vadd.f32 %v5828, %v5885
  %v5914 = vadd.f32 %v5829, %v5885
  %v5915 = vadd.f32 %v5830, %v5885
  %v5916 = vadd.f32 %v5831, %v5885
  %v5917 = vadd.f32 %v5832, %v5885
  %v5918 = vadd.f32 %v5833, %v5885
  %v5919 = vadd.f32 %v5834, %v5885
  %v5920 = vadd.f32 %v5835, %v5885
  %v5921 = vadd.f32 %v5836, %v5885
  %v5922 = vadd.f32 %v5837, %v5885
  %v5923 = vadd.f32 %v5838, %v5885
  %v5924 = vadd.f32 %v5839, %v5885
  %v5925 = vadd.f32 %v5840, %v5885
  %v5926 = vadd.f32 %v5841, %v5885
  %v5927 = vadd.f32 %v5842, %v5885
  %v5928 = vadd.f32 %v5843, %v5885
  %v5929 = vadd.f32 %v5844, %v5885
  %v5930 = vadd.f32 %v5845, %v5885
  %v5931 = vadd.f32 %v5846, %v5885
  %v5932 = vadd.f32 %v5847, %v5885
  %v5933 = vadd.f32 %v5848, %v5885
  %v5934 = vadd.f32 %v5849, %v5885
  %v5935 = vadd.f32 %v5850, %v5885
  %v5936 = vadd.f32 %v5851, %v5885
  %v5937 = vadd.f32 %v5852, %v5885
  %v5938 = vadd.f32 %v5853, %v5885
  %v5939 = vadd.f32 %v5854, %v5885
  %v5940 = vadd.f32 %v5855, %v5885
  %v5941 = vadd.f32 %v5856, %v5885
  %v5942 = vadd.f32 %v5857, %v5885
  %v5943 = vadd.f32 %v5858, %v5885
  %v5944 = vadd.f32 %v5859, %v5885
  %v5945 = vadd.f32 %v5860, %v5885
  %v5946 = vadd.f32 %v5861, %v5885
  %v5947 = vadd.f32 %v5862, %v5885
  %v5948 = vadd.f32 %v5863, %v5885
  %v5949 = vadd.f32 %v5864, %v5885
  %v5950 = vadd.f32 %v5865, %v5885
  %v5951 = vadd.f32 %v5866, %v5885
  %v5952 = vadd.f32 %v5867, %v5885
  %v5953 = vadd.f32 %v5868, %v5885
  %v5954 = vadd.f32 %v5869, %v5885
  %v5955 = vadd.f32 %v5870, %v5885
  %v5956 = vadd.f32 %v5871, %v5885
  %v5957 = vadd.f32 %v5872, %v5885
  %v5958 = vadd.f32 %v5873, %v5885
  %v5959 = vadd.f32 %v5874, %v5885
  %v5960 = vadd.f32 %v5875, %v5885
  %v5961 = vadd.f32 %v5876, %v5885
  %v5962 = vadd.f32 %v5877, %v5885
  %v5963 = vadd.f32 %v5878, %v5885
  %v5964 = vadd.f32 %v5879, %v5885
  %v5965 = vadd.f32 %v5880, %v5885
  %v5966 = vadd.f32 %v5881, %v5885
  %v5967 = vadd.f32 %v5882, %v5885
  %v5968 = vld [vmem:[%s5] sm:$0xff]
  %v5969 = vld [vmem:[%s5 + $0x8] sm:$0xff]
  %v5970 = vld [vmem:[%s5 + $0x10] sm:$0xff]
  %v5971 = vld [vmem:[%s5 + $0x18] sm:$0xff]
  %v5972 = vld [vmem:[%s5 + $0x20] sm:$0xff]
  %v5973 = vld [vmem:[%s5 + $0x28] sm:$0xff]
  %v5974 = vld [vmem:[%s5 + $0x30] sm:$0xff]
  %v5975 = vld [vmem:[%s5 + $0x38] sm:$0xff]
  %v5976 = vld [vmem:[%s5 + $0x40] sm:$0xff]
  %v5977 = vld [vmem:[%s5 + $0x48] sm:$0xff]
  %v5978 = vld [vmem:[%s5 + $0x50] sm:$0xff]
  %v5979 = vld [vmem:[%s5 + $0x58] sm:$0xff]
  %v5980 = vld [vmem:[%s5 + $0x60] sm:$0xff]
  %v5981 = vld [vmem:[%s5 + $0x68] sm:$0xff]
  %v5982 = vld [vmem:[%s5 + $0x70] sm:$0xff]
  %v5983 = vld [vmem:[%s5 + $0x78] sm:$0xff]
  %v5984 = vld [vmem:[%s5 + $0x80] sm:$0xff]
  %v5985 = vld [vmem:[%s5 + $0x88] sm:$0xff]
  %v5986 = vld [vmem:[%s5 + $0x90] sm:$0xff]
  %v5987 = vld [vmem:[%s5 + $0x98] sm:$0xff]
  %v5988 = vld [vmem:[%s5 + $0xa0] sm:$0xff]
  %v5989 = vld [vmem:[%s5 + $0xa8] sm:$0xff]
  %v5990 = vld [vmem:[%s5 + $0xb0] sm:$0xff]
  %v5991 = vld [vmem:[%s5 + $0xb8] sm:$0xff]
  %v5992 = vld [vmem:[%s5 + $0xc0] sm:$0xff]
  %v5993 = vld [vmem:[%s5 + $0xc8] sm:$0xff]
  %v5994 = vld [vmem:[%s5 + $0xd0] sm:$0xff]
  %v5995 = vld [vmem:[%s5 + $0xd8] sm:$0xff]
  %v5996 = vld [vmem:[%s5 + $0xe0] sm:$0xff]
  %v5997 = vld [vmem:[%s5 + $0xe8] sm:$0xff]
  %v5998 = vld [vmem:[%s5 + $0xf0] sm:$0xff]
  %v5999 = vld [vmem:[%s5 + $0xf8] sm:$0xff]
  %v6000 = vld [vmem:[%s5 + $0x100] sm:$0xff]
  %v6001 = vld [vmem:[%s5 + $0x108] sm:$0xff]
  %v6002 = vld [vmem:[%s5 + $0x110] sm:$0xff]
  %v6003 = vld [vmem:[%s5 + $0x118] sm:$0xff]
  %v6004 = vld [vmem:[%s5 + $0x120] sm:$0xff]
  %v6005 = vld [vmem:[%s5 + $0x128] sm:$0xff]
  %v6006 = vld [vmem:[%s5 + $0x130] sm:$0xff]
  %v6007 = vld [vmem:[%s5 + $0x138] sm:$0xff]
  %v6008 = vld [vmem:[%s5 + $0x140] sm:$0xff]
  %v6009 = vld [vmem:[%s5 + $0x148] sm:$0xff]
  %v6010 = vld [vmem:[%s5 + $0x150] sm:$0xff]
  %v6011 = vld [vmem:[%s5 + $0x158] sm:$0xff]
  %v6012 = vld [vmem:[%s5 + $0x160] sm:$0xff]
  %v6013 = vld [vmem:[%s5 + $0x168] sm:$0xff]
  %v6014 = vld [vmem:[%s5 + $0x170] sm:$0xff]
  %v6015 = vld [vmem:[%s5 + $0x178] sm:$0xff]
  %v6016 = vld [vmem:[%s5 + $0x180] sm:$0xff]
  %v6017 = vld [vmem:[%s5 + $0x188] sm:$0xff]
  %v6018 = vld [vmem:[%s5 + $0x190] sm:$0xff]
  %v6019 = vld [vmem:[%s5 + $0x198] sm:$0xff]
  %v6020 = vld [vmem:[%s5 + $0x1a0] sm:$0xff]
  %v6021 = vld [vmem:[%s5 + $0x1a8] sm:$0xff]
  %v6022 = vld [vmem:[%s5 + $0x1b0] sm:$0xff]
  %v6023 = vld [vmem:[%s5 + $0x1b8] sm:$0xff]
  %v6024 = vld [vmem:[%s5 + $0x1c0] sm:$0xff]
  %v6025 = vld [vmem:[%s5 + $0x1c8] sm:$0xff]
  %v6026 = vld [vmem:[%s5 + $0x1d0] sm:$0xff]
  %v6027 = vld [vmem:[%s5 + $0x1d8] sm:$0xff]
  %v6028 = vld [vmem:[%s5 + $0x1e0] sm:$0xff]
  %v6029 = vld [vmem:[%s5 + $0x1e8] sm:$0xff]
  %v6030 = vld [vmem:[%s5 + $0x1f0] sm:$0xff]
  %v6031 = vld [vmem:[%s5 + $0x1f8] sm:$0xff]
  %v6032 = vld [vmem:[%s5 + $0x200] sm:$0xff]
  %v6033 = vld [vmem:[%s5 + $0x208] sm:$0xff]
  %v6034 = vld [vmem:[%s5 + $0x210] sm:$0xff]
  %v6035 = vld [vmem:[%s5 + $0x218] sm:$0xff]
  %v6036 = vld [vmem:[%s5 + $0x220] sm:$0xff]
  %v6037 = vld [vmem:[%s5 + $0x228] sm:$0xff]
  %v6038 = vld [vmem:[%s5 + $0x230] sm:$0xff]
  %v6039 = vld [vmem:[%s5 + $0x238] sm:$0xff]
  %v6040 = vld [vmem:[%s5 + $0x240] sm:$0xff]
  %v6041 = vld [vmem:[%s5 + $0x248] sm:$0xff]
  %v6042 = vld [vmem:[%s5 + $0x250] sm:$0xff]
  %v6043 = vld [vmem:[%s5 + $0x258] sm:$0xff]
  %v6044 = vld [vmem:[%s5 + $0x260] sm:$0xff]
  %v6045 = vld [vmem:[%s5 + $0x268] sm:$0xff]
  %v6046 = vld [vmem:[%s5 + $0x270] sm:$0xff]
  %v6047 = vld [vmem:[%s5 + $0x278] sm:$0xff]
  %v6048 = vld [vmem:[%s5 + $0x280] sm:$0xff]
  %6050 = vset.pattern.permute.xlu0 0
  %6051 = vperm.xlu0 %6050, %v5968
  %v6052 = vpop.permute.xlu0 %6051
  %6055 = vset.pattern.permute.xlu0 0
  %6056 = vperm.xlu0 %6055, %v5969
  %v6057 = vpop.permute.xlu0 %6056
  %6060 = vset.pattern.permute.xlu0 0
  %6061 = vperm.xlu0 %6060, %v5970
  %v6062 = vpop.permute.xlu0 %6061
  %6065 = vset.pattern.permute.xlu0 0
  %6066 = vperm.xlu0 %6065, %v5971
  %v6067 = vpop.permute.xlu0 %6066
  %6070 = vset.pattern.permute.xlu0 0
  %6071 = vperm.xlu0 %6070, %v5972
  %v6072 = vpop.permute.xlu0 %6071
  %6075 = vset.pattern.permute.xlu0 0
  %6076 = vperm.xlu0 %6075, %v5973
  %v6077 = vpop.permute.xlu0 %6076
  %6080 = vset.pattern.permute.xlu0 0
  %6081 = vperm.xlu0 %6080, %v5974
  %v6082 = vpop.permute.xlu0 %6081
  %6085 = vset.pattern.permute.xlu0 0
  %6086 = vperm.xlu0 %6085, %v5975
  %v6087 = vpop.permute.xlu0 %6086
  %6090 = vset.pattern.permute.xlu0 0
  %6091 = vperm.xlu0 %6090, %v5976
  %v6092 = vpop.permute.xlu0 %6091
  %6095 = vset.pattern.permute.xlu0 0
  %6096 = vperm.xlu0 %6095, %v5977
  %v6097 = vpop.permute.xlu0 %6096
  %6100 = vset.pattern.permute.xlu0 0
  %6101 = vperm.xlu0 %6100, %v5978
  %v6102 = vpop.permute.xlu0 %6101
  %6105 = vset.pattern.permute.xlu0 0
  %6106 = vperm.xlu0 %6105, %v5979
  %v6107 = vpop.permute.xlu0 %6106
  %6110 = vset.pattern.permute.xlu0 0
  %6111 = vperm.xlu0 %6110, %v5980
  %v6112 = vpop.permute.xlu0 %6111
  %6115 = vset.pattern.permute.xlu0 0
  %6116 = vperm.xlu0 %6115, %v5981
  %v6117 = vpop.permute.xlu0 %6116
  %6120 = vset.pattern.permute.xlu0 0
  %6121 = vperm.xlu0 %6120, %v5982
  %v6122 = vpop.permute.xlu0 %6121
  %6125 = vset.pattern.permute.xlu0 0
  %6126 = vperm.xlu0 %6125, %v5983
  %v6127 = vpop.permute.xlu0 %6126
  %6130 = vset.pattern.permute.xlu0 0
  %6131 = vperm.xlu0 %6130, %v5984
  %v6132 = vpop.permute.xlu0 %6131
  %6135 = vset.pattern.permute.xlu0 0
  %6136 = vperm.xlu0 %6135, %v5985
  %v6137 = vpop.permute.xlu0 %6136
  %6140 = vset.pattern.permute.xlu0 0
  %6141 = vperm.xlu0 %6140, %v5986
  %v6142 = vpop.permute.xlu0 %6141
  %6145 = vset.pattern.permute.xlu0 0
  %6146 = vperm.xlu0 %6145, %v5987
  %v6147 = vpop.permute.xlu0 %6146
  %6150 = vset.pattern.permute.xlu0 0
  %6151 = vperm.xlu0 %6150, %v5988
  %v6152 = vpop.permute.xlu0 %6151
  %6155 = vset.pattern.permute.xlu0 0
  %6156 = vperm.xlu0 %6155, %v5989
  %v6157 = vpop.permute.xlu0 %6156
  %6160 = vset.pattern.permute.xlu0 0
  %6161 = vperm.xlu0 %6160, %v5990
  %v6162 = vpop.permute.xlu0 %6161
  %6165 = vset.pattern.permute.xlu0 0
  %6166 = vperm.xlu0 %6165, %v5991
  %v6167 = vpop.permute.xlu0 %6166
  %6170 = vset.pattern.permute.xlu0 0
  %6171 = vperm.xlu0 %6170, %v5992
  %v6172 = vpop.permute.xlu0 %6171
  %6175 = vset.pattern.permute.xlu0 0
  %6176 = vperm.xlu0 %6175, %v5993
  %v6177 = vpop.permute.xlu0 %6176
  %6180 = vset.pattern.permute.xlu0 0
  %6181 = vperm.xlu0 %6180, %v5994
  %v6182 = vpop.permute.xlu0 %6181
  %6185 = vset.pattern.permute.xlu0 0
  %6186 = vperm.xlu0 %6185, %v5995
  %v6187 = vpop.permute.xlu0 %6186
  %6190 = vset.pattern.permute.xlu0 0
  %6191 = vperm.xlu0 %6190, %v5996
  %v6192 = vpop.permute.xlu0 %6191
  %6195 = vset.pattern.permute.xlu0 0
  %6196 = vperm.xlu0 %6195, %v5997
  %v6197 = vpop.permute.xlu0 %6196
  %6200 = vset.pattern.permute.xlu0 0
  %6201 = vperm.xlu0 %6200, %v5998
  %v6202 = vpop.permute.xlu0 %6201
  %6205 = vset.pattern.permute.xlu0 0
  %6206 = vperm.xlu0 %6205, %v5999
  %v6207 = vpop.permute.xlu0 %6206
  %6210 = vset.pattern.permute.xlu0 0
  %6211 = vperm.xlu0 %6210, %v6000
  %v6212 = vpop.permute.xlu0 %6211
  %6215 = vset.pattern.permute.xlu0 0
  %6216 = vperm.xlu0 %6215, %v6001
  %v6217 = vpop.permute.xlu0 %6216
  %6220 = vset.pattern.permute.xlu0 0
  %6221 = vperm.xlu0 %6220, %v6002
  %v6222 = vpop.permute.xlu0 %6221
  %6225 = vset.pattern.permute.xlu0 0
  %6226 = vperm.xlu0 %6225, %v6003
  %v6227 = vpop.permute.xlu0 %6226
  %6230 = vset.pattern.permute.xlu0 0
  %6231 = vperm.xlu0 %6230, %v6004
  %v6232 = vpop.permute.xlu0 %6231
  %6235 = vset.pattern.permute.xlu0 0
  %6236 = vperm.xlu0 %6235, %v6005
  %v6237 = vpop.permute.xlu0 %6236
  %6240 = vset.pattern.permute.xlu0 0
  %6241 = vperm.xlu0 %6240, %v6006
  %v6242 = vpop.permute.xlu0 %6241
  %6245 = vset.pattern.permute.xlu0 0
  %6246 = vperm.xlu0 %6245, %v6007
  %v6247 = vpop.permute.xlu0 %6246
  %6250 = vset.pattern.permute.xlu0 0
  %6251 = vperm.xlu0 %6250, %v6008
  %v6252 = vpop.permute.xlu0 %6251
  %6255 = vset.pattern.permute.xlu0 0
  %6256 = vperm.xlu0 %6255, %v6009
  %v6257 = vpop.permute.xlu0 %6256
  %6260 = vset.pattern.permute.xlu0 0
  %6261 = vperm.xlu0 %6260, %v6010
  %v6262 = vpop.permute.xlu0 %6261
  %6265 = vset.pattern.permute.xlu0 0
  %6266 = vperm.xlu0 %6265, %v6011
  %v6267 = vpop.permute.xlu0 %6266
  %6270 = vset.pattern.permute.xlu0 0
  %6271 = vperm.xlu0 %6270, %v6012
  %v6272 = vpop.permute.xlu0 %6271
  %6275 = vset.pattern.permute.xlu0 0
  %6276 = vperm.xlu0 %6275, %v6013
  %v6277 = vpop.permute.xlu0 %6276
  %6280 = vset.pattern.permute.xlu0 0
  %6281 = vperm.xlu0 %6280, %v6014
  %v6282 = vpop.permute.xlu0 %6281
  %6285 = vset.pattern.permute.xlu0 0
  %6286 = vperm.xlu0 %6285, %v6015
  %v6287 = vpop.permute.xlu0 %6286
  %6290 = vset.pattern.permute.xlu0 0
  %6291 = vperm.xlu0 %6290, %v6016
  %v6292 = vpop.permute.xlu0 %6291
  %6295 = vset.pattern.permute.xlu0 0
  %6296 = vperm.xlu0 %6295, %v6017
  %v6297 = vpop.permute.xlu0 %6296
  %6300 = vset.pattern.permute.xlu0 0
  %6301 = vperm.xlu0 %6300, %v6018
  %v6302 = vpop.permute.xlu0 %6301
  %6305 = vset.pattern.permute.xlu0 0
  %6306 = vperm.xlu0 %6305, %v6019
  %v6307 = vpop.permute.xlu0 %6306
  %6310 = vset.pattern.permute.xlu0 0
  %6311 = vperm.xlu0 %6310, %v6020
  %v6312 = vpop.permute.xlu0 %6311
  %6315 = vset.pattern.permute.xlu0 0
  %6316 = vperm.xlu0 %6315, %v6021
  %v6317 = vpop.permute.xlu0 %6316
  %6320 = vset.pattern.permute.xlu0 0
  %6321 = vperm.xlu0 %6320, %v6022
  %v6322 = vpop.permute.xlu0 %6321
  %6325 = vset.pattern.permute.xlu0 0
  %6326 = vperm.xlu0 %6325, %v6023
  %v6327 = vpop.permute.xlu0 %6326
  %6330 = vset.pattern.permute.xlu0 0
  %6331 = vperm.xlu0 %6330, %v6024
  %v6332 = vpop.permute.xlu0 %6331
  %6335 = vset.pattern.permute.xlu0 0
  %6336 = vperm.xlu0 %6335, %v6025
  %v6337 = vpop.permute.xlu0 %6336
  %6340 = vset.pattern.permute.xlu0 0
  %6341 = vperm.xlu0 %6340, %v6026
  %v6342 = vpop.permute.xlu0 %6341
  %6345 = vset.pattern.permute.xlu0 0
  %6346 = vperm.xlu0 %6345, %v6027
  %v6347 = vpop.permute.xlu0 %6346
  %6350 = vset.pattern.permute.xlu0 0
  %6351 = vperm.xlu0 %6350, %v6028
  %v6352 = vpop.permute.xlu0 %6351
  %6355 = vset.pattern.permute.xlu0 0
  %6356 = vperm.xlu0 %6355, %v6029
  %v6357 = vpop.permute.xlu0 %6356
  %6360 = vset.pattern.permute.xlu0 0
  %6361 = vperm.xlu0 %6360, %v6030
  %v6362 = vpop.permute.xlu0 %6361
  %6365 = vset.pattern.permute.xlu0 0
  %6366 = vperm.xlu0 %6365, %v6031
  %v6367 = vpop.permute.xlu0 %6366
  %6370 = vset.pattern.permute.xlu0 0
  %6371 = vperm.xlu0 %6370, %v6032
  %v6372 = vpop.permute.xlu0 %6371
  %6375 = vset.pattern.permute.xlu0 0
  %6376 = vperm.xlu0 %6375, %v6033
  %v6377 = vpop.permute.xlu0 %6376
  %6380 = vset.pattern.permute.xlu0 0
  %6381 = vperm.xlu0 %6380, %v6034
  %v6382 = vpop.permute.xlu0 %6381
  %6385 = vset.pattern.permute.xlu0 0
  %6386 = vperm.xlu0 %6385, %v6035
  %v6387 = vpop.permute.xlu0 %6386
  %6390 = vset.pattern.permute.xlu0 0
  %6391 = vperm.xlu0 %6390, %v6036
  %v6392 = vpop.permute.xlu0 %6391
  %6395 = vset.pattern.permute.xlu0 0
  %6396 = vperm.xlu0 %6395, %v6037
  %v6397 = vpop.permute.xlu0 %6396
  %6400 = vset.pattern.permute.xlu0 0
  %6401 = vperm.xlu0 %6400, %v6038
  %v6402 = vpop.permute.xlu0 %6401
  %6405 = vset.pattern.permute.xlu0 0
  %6406 = vperm.xlu0 %6405, %v6039
  %v6407 = vpop.permute.xlu0 %6406
  %6410 = vset.pattern.permute.xlu0 0
  %6411 = vperm.xlu0 %6410, %v6040
  %v6412 = vpop.permute.xlu0 %6411
  %6415 = vset.pattern.permute.xlu0 0
  %6416 = vperm.xlu0 %6415, %v6041
  %v6417 = vpop.permute.xlu0 %6416
  %6420 = vset.pattern.permute.xlu0 0
  %6421 = vperm.xlu0 %6420, %v6042
  %v6422 = vpop.permute.xlu0 %6421
  %6425 = vset.pattern.permute.xlu0 0
  %6426 = vperm.xlu0 %6425, %v6043
  %v6427 = vpop.permute.xlu0 %6426
  %6430 = vset.pattern.permute.xlu0 0
  %6431 = vperm.xlu0 %6430, %v6044
  %v6432 = vpop.permute.xlu0 %6431
  %6435 = vset.pattern.permute.xlu0 0
  %6436 = vperm.xlu0 %6435, %v6045
  %v6437 = vpop.permute.xlu0 %6436
  %6440 = vset.pattern.permute.xlu0 0
  %6441 = vperm.xlu0 %6440, %v6046
  %v6442 = vpop.permute.xlu0 %6441
  %6445 = vset.pattern.permute.xlu0 0
  %6446 = vperm.xlu0 %6445, %v6047
  %v6447 = vpop.permute.xlu0 %6446
  %6450 = vset.pattern.permute.xlu0 0
  %6451 = vperm.xlu0 %6450, %v6048
  %v6452 = vpop.permute.xlu0 %6451
  %v6454 = vmul.f32 %v5887, %v6052
  %v6455 = vmul.f32 %v5888, %v6057
  %v6456 = vmul.f32 %v5889, %v6062
  %v6457 = vmul.f32 %v5890, %v6067
  %v6458 = vmul.f32 %v5891, %v6072
  %v6459 = vmul.f32 %v5892, %v6077
  %v6460 = vmul.f32 %v5893, %v6082
  %v6461 = vmul.f32 %v5894, %v6087
  %v6462 = vmul.f32 %v5895, %v6092
  %v6463 = vmul.f32 %v5896, %v6097
  %v6464 = vmul.f32 %v5897, %v6102
  %v6465 = vmul.f32 %v5898, %v6107
  %v6466 = vmul.f32 %v5899, %v6112
  %v6467 = vmul.f32 %v5900, %v6117
  %v6468 = vmul.f32 %v5901, %v6122
  %v6469 = vmul.f32 %v5902, %v6127
  %v6470 = vmul.f32 %v5903, %v6132
  %v6471 = vmul.f32 %v5904, %v6137
  %v6472 = vmul.f32 %v5905, %v6142
  %v6473 = vmul.f32 %v5906, %v6147
  %v6474 = vmul.f32 %v5907, %v6152
  %v6475 = vmul.f32 %v5908, %v6157
  %v6476 = vmul.f32 %v5909, %v6162
  %v6477 = vmul.f32 %v5910, %v6167
  %v6478 = vmul.f32 %v5911, %v6172
  %v6479 = vmul.f32 %v5912, %v6177
  %v6480 = vmul.f32 %v5913, %v6182
  %v6481 = vmul.f32 %v5914, %v6187
  %v6482 = vmul.f32 %v5915, %v6192
  %v6483 = vmul.f32 %v5916, %v6197
  %v6484 = vmul.f32 %v5917, %v6202
  %v6485 = vmul.f32 %v5918, %v6207
  %v6486 = vmul.f32 %v5919, %v6212
  %v6487 = vmul.f32 %v5920, %v6217
  %v6488 = vmul.f32 %v5921, %v6222
  %v6489 = vmul.f32 %v5922, %v6227
  %v6490 = vmul.f32 %v5923, %v6232
  %v6491 = vmul.f32 %v5924, %v6237
  %v6492 = vmul.f32 %v5925, %v6242
  %v6493 = vmul.f32 %v5926, %v6247
  %v6494 = vmul.f32 %v5927, %v6252
  %v6495 = vmul.f32 %v5928, %v6257
  %v6496 = vmul.f32 %v5929, %v6262
  %v6497 = vmul.f32 %v5930, %v6267
  %v6498 = vmul.f32 %v5931, %v6272
  %v6499 = vmul.f32 %v5932, %v6277
  %v6500 = vmul.f32 %v5933, %v6282
  %v6501 = vmul.f32 %v5934, %v6287
  %v6502 = vmul.f32 %v5935, %v6292
  %v6503 = vmul.f32 %v5936, %v6297
  %v6504 = vmul.f32 %v5937, %v6302
  %v6505 = vmul.f32 %v5938, %v6307
  %v6506 = vmul.f32 %v5939, %v6312
  %v6507 = vmul.f32 %v5940, %v6317
  %v6508 = vmul.f32 %v5941, %v6322
  %v6509 = vmul.f32 %v5942, %v6327
  %v6510 = vmul.f32 %v5943, %v6332
  %v6511 = vmul.f32 %v5944, %v6337
  %v6512 = vmul.f32 %v5945, %v6342
  %v6513 = vmul.f32 %v5946, %v6347
  %v6514 = vmul.f32 %v5947, %v6352
  %v6515 = vmul.f32 %v5948, %v6357
  %v6516 = vmul.f32 %v5949, %v6362
  %v6517 = vmul.f32 %v5950, %v6367
  %v6518 = vmul.f32 %v5951, %v6372
  %v6519 = vmul.f32 %v5952, %v6377
  %v6520 = vmul.f32 %v5953, %v6382
  %v6521 = vmul.f32 %v5954, %v6387
  %v6522 = vmul.f32 %v5955, %v6392
  %v6523 = vmul.f32 %v5956, %v6397
  %v6524 = vmul.f32 %v5957, %v6402
  %v6525 = vmul.f32 %v5958, %v6407
  %v6526 = vmul.f32 %v5959, %v6412
  %v6527 = vmul.f32 %v5960, %v6417
  %v6528 = vmul.f32 %v5961, %v6422
  %v6529 = vmul.f32 %v5962, %v6427
  %v6530 = vmul.f32 %v5963, %v6432
  %v6531 = vmul.f32 %v5964, %v6437
  %v6532 = vmul.f32 %v5965, %v6442
  %v6533 = vmul.f32 %v5966, %v6447
  %v6534 = vmul.f32 %v5967, %v6452
  %vm6535 = vcmask 130048
  %v6536 = vsel %vm6535, %v6454, 0.0
  %v6537 = vsel %vm6535, %v6455, 0.0
  %v6538 = vadd.f32 %v6536, %v6537
  %v6539 = vsel %vm6535, %v6456, 0.0
  %v6540 = vadd.f32 %v6538, %v6539
  %v6541 = vsel %vm6535, %v6457, 0.0
  %v6542 = vadd.f32 %v6540, %v6541
  %v6543 = vsel %vm6535, %v6458, 0.0
  %v6544 = vadd.f32 %v6542, %v6543
  %v6545 = vsel %vm6535, %v6459, 0.0
  %v6546 = vadd.f32 %v6544, %v6545
  %v6547 = vsel %vm6535, %v6460, 0.0
  %v6548 = vadd.f32 %v6546, %v6547
  %v6549 = vsel %vm6535, %v6461, 0.0
  %v6550 = vadd.f32 %v6548, %v6549
  %v6551 = vsel %vm6535, %v6462, 0.0
  %v6552 = vadd.f32 %v6550, %v6551
  %v6553 = vsel %vm6535, %v6463, 0.0
  %v6554 = vadd.f32 %v6552, %v6553
  %v6555 = vsel %vm6535, %v6464, 0.0
  %v6556 = vadd.f32 %v6554, %v6555
  %v6557 = vsel %vm6535, %v6465, 0.0
  %v6558 = vadd.f32 %v6556, %v6557
  %v6559 = vsel %vm6535, %v6466, 0.0
  %v6560 = vadd.f32 %v6558, %v6559
  %v6561 = vsel %vm6535, %v6467, 0.0
  %v6562 = vadd.f32 %v6560, %v6561
  %v6563 = vsel %vm6535, %v6468, 0.0
  %v6564 = vadd.f32 %v6562, %v6563
  %v6565 = vsel %vm6535, %v6469, 0.0
  %v6566 = vadd.f32 %v6564, %v6565
  %v6567 = vsel %vm6535, %v6470, 0.0
  %v6568 = vadd.f32 %v6566, %v6567
  %v6569 = vsel %vm6535, %v6471, 0.0
  %v6570 = vadd.f32 %v6568, %v6569
  %v6571 = vsel %vm6535, %v6472, 0.0
  %v6572 = vadd.f32 %v6570, %v6571
  %v6573 = vsel %vm6535, %v6473, 0.0
  %v6574 = vadd.f32 %v6572, %v6573
  %v6575 = vsel %vm6535, %v6474, 0.0
  %v6576 = vadd.f32 %v6574, %v6575
  %v6577 = vsel %vm6535, %v6475, 0.0
  %v6578 = vadd.f32 %v6576, %v6577
  %v6579 = vsel %vm6535, %v6476, 0.0
  %v6580 = vadd.f32 %v6578, %v6579
  %v6581 = vsel %vm6535, %v6477, 0.0
  %v6582 = vadd.f32 %v6580, %v6581
  %v6583 = vsel %vm6535, %v6478, 0.0
  %v6584 = vadd.f32 %v6582, %v6583
  %v6585 = vsel %vm6535, %v6479, 0.0
  %v6586 = vadd.f32 %v6584, %v6585
  %v6587 = vsel %vm6535, %v6480, 0.0
  %v6588 = vadd.f32 %v6586, %v6587
  %v6589 = vsel %vm6535, %v6481, 0.0
  %v6590 = vadd.f32 %v6588, %v6589
  %v6591 = vsel %vm6535, %v6482, 0.0
  %v6592 = vadd.f32 %v6590, %v6591
  %v6593 = vsel %vm6535, %v6483, 0.0
  %v6594 = vadd.f32 %v6592, %v6593
  %v6595 = vsel %vm6535, %v6484, 0.0
  %v6596 = vadd.f32 %v6594, %v6595
  %v6597 = vsel %vm6535, %v6485, 0.0
  %v6598 = vadd.f32 %v6596, %v6597
  %v6599 = vsel %vm6535, %v6486, 0.0
  %v6600 = vadd.f32 %v6598, %v6599
  %v6601 = vsel %vm6535, %v6487, 0.0
  %v6602 = vadd.f32 %v6600, %v6601
  %v6603 = vsel %vm6535, %v6488, 0.0
  %v6604 = vadd.f32 %v6602, %v6603
  %v6605 = vsel %vm6535, %v6489, 0.0
  %v6606 = vadd.f32 %v6604, %v6605
  %v6607 = vsel %vm6535, %v6490, 0.0
  %v6608 = vadd.f32 %v6606, %v6607
  %v6609 = vsel %vm6535, %v6491, 0.0
  %v6610 = vadd.f32 %v6608, %v6609
  %v6611 = vsel %vm6535, %v6492, 0.0
  %v6612 = vadd.f32 %v6610, %v6611
  %v6613 = vsel %vm6535, %v6493, 0.0
  %v6614 = vadd.f32 %v6612, %v6613
  %v6615 = vsel %vm6535, %v6494, 0.0
  %v6616 = vadd.f32 %v6614, %v6615
  %v6617 = vsel %vm6535, %v6495, 0.0
  %v6618 = vadd.f32 %v6616, %v6617
  %v6619 = vsel %vm6535, %v6496, 0.0
  %v6620 = vadd.f32 %v6618, %v6619
  %v6621 = vsel %vm6535, %v6497, 0.0
  %v6622 = vadd.f32 %v6620, %v6621
  %v6623 = vsel %vm6535, %v6498, 0.0
  %v6624 = vadd.f32 %v6622, %v6623
  %v6625 = vsel %vm6535, %v6499, 0.0
  %v6626 = vadd.f32 %v6624, %v6625
  %v6627 = vsel %vm6535, %v6500, 0.0
  %v6628 = vadd.f32 %v6626, %v6627
  %v6629 = vsel %vm6535, %v6501, 0.0
  %v6630 = vadd.f32 %v6628, %v6629
  %v6631 = vsel %vm6535, %v6502, 0.0
  %v6632 = vadd.f32 %v6630, %v6631
  %v6633 = vsel %vm6535, %v6503, 0.0
  %v6634 = vadd.f32 %v6632, %v6633
  %v6635 = vsel %vm6535, %v6504, 0.0
  %v6636 = vadd.f32 %v6634, %v6635
  %v6637 = vsel %vm6535, %v6505, 0.0
  %v6638 = vadd.f32 %v6636, %v6637
  %v6639 = vsel %vm6535, %v6506, 0.0
  %v6640 = vadd.f32 %v6638, %v6639
  %v6641 = vsel %vm6535, %v6507, 0.0
  %v6642 = vadd.f32 %v6640, %v6641
  %v6643 = vsel %vm6535, %v6508, 0.0
  %v6644 = vadd.f32 %v6642, %v6643
  %v6645 = vsel %vm6535, %v6509, 0.0
  %v6646 = vadd.f32 %v6644, %v6645
  %v6647 = vsel %vm6535, %v6510, 0.0
  %v6648 = vadd.f32 %v6646, %v6647
  %v6649 = vsel %vm6535, %v6511, 0.0
  %v6650 = vadd.f32 %v6648, %v6649
  %v6651 = vsel %vm6535, %v6512, 0.0
  %v6652 = vadd.f32 %v6650, %v6651
  %v6653 = vsel %vm6535, %v6513, 0.0
  %v6654 = vadd.f32 %v6652, %v6653
  %v6655 = vsel %vm6535, %v6514, 0.0
  %v6656 = vadd.f32 %v6654, %v6655
  %v6657 = vsel %vm6535, %v6515, 0.0
  %v6658 = vadd.f32 %v6656, %v6657
  %v6659 = vsel %vm6535, %v6516, 0.0
  %v6660 = vadd.f32 %v6658, %v6659
  %v6661 = vsel %vm6535, %v6517, 0.0
  %v6662 = vadd.f32 %v6660, %v6661
  %v6663 = vsel %vm6535, %v6518, 0.0
  %v6664 = vadd.f32 %v6662, %v6663
  %v6665 = vsel %vm6535, %v6519, 0.0
  %v6666 = vadd.f32 %v6664, %v6665
  %v6667 = vsel %vm6535, %v6520, 0.0
  %v6668 = vadd.f32 %v6666, %v6667
  %v6669 = vsel %vm6535, %v6521, 0.0
  %v6670 = vadd.f32 %v6668, %v6669
  %v6671 = vsel %vm6535, %v6522, 0.0
  %v6672 = vadd.f32 %v6670, %v6671
  %v6673 = vsel %vm6535, %v6523, 0.0
  %v6674 = vadd.f32 %v6672, %v6673
  %v6675 = vsel %vm6535, %v6524, 0.0
  %v6676 = vadd.f32 %v6674, %v6675
  %v6677 = vsel %vm6535, %v6525, 0.0
  %v6678 = vadd.f32 %v6676, %v6677
  %v6679 = vsel %vm6535, %v6526, 0.0
  %v6680 = vadd.f32 %v6678, %v6679
  %v6681 = vsel %vm6535, %v6527, 0.0
  %v6682 = vadd.f32 %v6680, %v6681
  %v6683 = vsel %vm6535, %v6528, 0.0
  %v6684 = vadd.f32 %v6682, %v6683
  %v6685 = vsel %vm6535, %v6529, 0.0
  %v6686 = vadd.f32 %v6684, %v6685
  %v6687 = vsel %vm6535, %v6530, 0.0
  %v6688 = vadd.f32 %v6686, %v6687
  %v6689 = vsel %vm6535, %v6531, 0.0
  %v6690 = vadd.f32 %v6688, %v6689
  %v6691 = vsel %vm6535, %v6532, 0.0
  %v6692 = vadd.f32 %v6690, %v6691
  %v6693 = vsel %vm6535, %v6533, 0.0
  %v6694 = vadd.f32 %v6692, %v6693
  %v6695 = vsel %vm6535, %v6534, 0.0
  %v6696 = vadd.f32 %v6694, %v6695
  %v6697 = vrot.slane %v6696, 4
  %v6698 = vadd.f32 %v6696, %v6697
  %v6699 = vrot.slane %v6698, 2
  %v6700 = vadd.f32 %v6698, %v6699
  %v6701 = vrot.slane %v6700, 1
  %v6702 = vadd.f32 %v6700, %v6701
  %v6703 = vmul.f32 %v6702, 0.001953125
  %v6704 = vmul.f32 %v6454, %v5887
  %v6705 = vmul.f32 %v6455, %v5888
  %v6706 = vmul.f32 %v6456, %v5889
  %v6707 = vmul.f32 %v6457, %v5890
  %v6708 = vmul.f32 %v6458, %v5891
  %v6709 = vmul.f32 %v6459, %v5892
  %v6710 = vmul.f32 %v6460, %v5893
  %v6711 = vmul.f32 %v6461, %v5894
  %v6712 = vmul.f32 %v6462, %v5895
  %v6713 = vmul.f32 %v6463, %v5896
  %v6714 = vmul.f32 %v6464, %v5897
  %v6715 = vmul.f32 %v6465, %v5898
  %v6716 = vmul.f32 %v6466, %v5899
  %v6717 = vmul.f32 %v6467, %v5900
  %v6718 = vmul.f32 %v6468, %v5901
  %v6719 = vmul.f32 %v6469, %v5902
  %v6720 = vmul.f32 %v6470, %v5903
  %v6721 = vmul.f32 %v6471, %v5904
  %v6722 = vmul.f32 %v6472, %v5905
  %v6723 = vmul.f32 %v6473, %v5906
  %v6724 = vmul.f32 %v6474, %v5907
  %v6725 = vmul.f32 %v6475, %v5908
  %v6726 = vmul.f32 %v6476, %v5909
  %v6727 = vmul.f32 %v6477, %v5910
  %v6728 = vmul.f32 %v6478, %v5911
  %v6729 = vmul.f32 %v6479, %v5912
  %v6730 = vmul.f32 %v6480, %v5913
  %v6731 = vmul.f32 %v6481, %v5914
  %v6732 = vmul.f32 %v6482, %v5915
  %v6733 = vmul.f32 %v6483, %v5916
  %v6734 = vmul.f32 %v6484, %v5917
  %v6735 = vmul.f32 %v6485, %v5918
  %v6736 = vmul.f32 %v6486, %v5919
  %v6737 = vmul.f32 %v6487, %v5920
  %v6738 = vmul.f32 %v6488, %v5921
  %v6739 = vmul.f32 %v6489, %v5922
  %v6740 = vmul.f32 %v6490, %v5923
  %v6741 = vmul.f32 %v6491, %v5924
  %v6742 = vmul.f32 %v6492, %v5925
  %v6743 = vmul.f32 %v6493, %v5926
  %v6744 = vmul.f32 %v6494, %v5927
  %v6745 = vmul.f32 %v6495, %v5928
  %v6746 = vmul.f32 %v6496, %v5929
  %v6747 = vmul.f32 %v6497, %v5930
  %v6748 = vmul.f32 %v6498, %v5931
  %v6749 = vmul.f32 %v6499, %v5932
  %v6750 = vmul.f32 %v6500, %v5933
  %v6751 = vmul.f32 %v6501, %v5934
  %v6752 = vmul.f32 %v6502, %v5935
  %v6753 = vmul.f32 %v6503, %v5936
  %v6754 = vmul.f32 %v6504, %v5937
  %v6755 = vmul.f32 %v6505, %v5938
  %v6756 = vmul.f32 %v6506, %v5939
  %v6757 = vmul.f32 %v6507, %v5940
  %v6758 = vmul.f32 %v6508, %v5941
  %v6759 = vmul.f32 %v6509, %v5942
  %v6760 = vmul.f32 %v6510, %v5943
  %v6761 = vmul.f32 %v6511, %v5944
  %v6762 = vmul.f32 %v6512, %v5945
  %v6763 = vmul.f32 %v6513, %v5946
  %v6764 = vmul.f32 %v6514, %v5947
  %v6765 = vmul.f32 %v6515, %v5948
  %v6766 = vmul.f32 %v6516, %v5949
  %v6767 = vmul.f32 %v6517, %v5950
  %v6768 = vmul.f32 %v6518, %v5951
  %v6769 = vmul.f32 %v6519, %v5952
  %v6770 = vmul.f32 %v6520, %v5953
  %v6771 = vmul.f32 %v6521, %v5954
  %v6772 = vmul.f32 %v6522, %v5955
  %v6773 = vmul.f32 %v6523, %v5956
  %v6774 = vmul.f32 %v6524, %v5957
  %v6775 = vmul.f32 %v6525, %v5958
  %v6776 = vmul.f32 %v6526, %v5959
  %v6777 = vmul.f32 %v6527, %v5960
  %v6778 = vmul.f32 %v6528, %v5961
  %v6779 = vmul.f32 %v6529, %v5962
  %v6780 = vmul.f32 %v6530, %v5963
  %v6781 = vmul.f32 %v6531, %v5964
  %v6782 = vmul.f32 %v6532, %v5965
  %v6783 = vmul.f32 %v6533, %v5966
  %v6784 = vmul.f32 %v6534, %v5967
  %v6785 = vsel %vm6535, %v6704, 0.0
  %v6786 = vsel %vm6535, %v6705, 0.0
  %v6787 = vadd.f32 %v6785, %v6786
  %v6788 = vsel %vm6535, %v6706, 0.0
  %v6789 = vadd.f32 %v6787, %v6788
  %v6790 = vsel %vm6535, %v6707, 0.0
  %v6791 = vadd.f32 %v6789, %v6790
  %v6792 = vsel %vm6535, %v6708, 0.0
  %v6793 = vadd.f32 %v6791, %v6792
  %v6794 = vsel %vm6535, %v6709, 0.0
  %v6795 = vadd.f32 %v6793, %v6794
  %v6796 = vsel %vm6535, %v6710, 0.0
  %v6797 = vadd.f32 %v6795, %v6796
  %v6798 = vsel %vm6535, %v6711, 0.0
  %v6799 = vadd.f32 %v6797, %v6798
  %v6800 = vsel %vm6535, %v6712, 0.0
  %v6801 = vadd.f32 %v6799, %v6800
  %v6802 = vsel %vm6535, %v6713, 0.0
  %v6803 = vadd.f32 %v6801, %v6802
  %v6804 = vsel %vm6535, %v6714, 0.0
  %v6805 = vadd.f32 %v6803, %v6804
  %v6806 = vsel %vm6535, %v6715, 0.0
  %v6807 = vadd.f32 %v6805, %v6806
  %v6808 = vsel %vm6535, %v6716, 0.0
  %v6809 = vadd.f32 %v6807, %v6808
  %v6810 = vsel %vm6535, %v6717, 0.0
  %v6811 = vadd.f32 %v6809, %v6810
  %v6812 = vsel %vm6535, %v6718, 0.0
  %v6813 = vadd.f32 %v6811, %v6812
  %v6814 = vsel %vm6535, %v6719, 0.0
  %v6815 = vadd.f32 %v6813, %v6814
  %v6816 = vsel %vm6535, %v6720, 0.0
  %v6817 = vadd.f32 %v6815, %v6816
  %v6818 = vsel %vm6535, %v6721, 0.0
  %v6819 = vadd.f32 %v6817, %v6818
  %v6820 = vsel %vm6535, %v6722, 0.0
  %v6821 = vadd.f32 %v6819, %v6820
  %v6822 = vsel %vm6535, %v6723, 0.0
  %v6823 = vadd.f32 %v6821, %v6822
  %v6824 = vsel %vm6535, %v6724, 0.0
  %v6825 = vadd.f32 %v6823, %v6824
  %v6826 = vsel %vm6535, %v6725, 0.0
  %v6827 = vadd.f32 %v6825, %v6826
  %v6828 = vsel %vm6535, %v6726, 0.0
  %v6829 = vadd.f32 %v6827, %v6828
  %v6830 = vsel %vm6535, %v6727, 0.0
  %v6831 = vadd.f32 %v6829, %v6830
  %v6832 = vsel %vm6535, %v6728, 0.0
  %v6833 = vadd.f32 %v6831, %v6832
  %v6834 = vsel %vm6535, %v6729, 0.0
  %v6835 = vadd.f32 %v6833, %v6834
  %v6836 = vsel %vm6535, %v6730, 0.0
  %v6837 = vadd.f32 %v6835, %v6836
  %v6838 = vsel %vm6535, %v6731, 0.0
  %v6839 = vadd.f32 %v6837, %v6838
  %v6840 = vsel %vm6535, %v6732, 0.0
  %v6841 = vadd.f32 %v6839, %v6840
  %v6842 = vsel %vm6535, %v6733, 0.0
  %v6843 = vadd.f32 %v6841, %v6842
  %v6844 = vsel %vm6535, %v6734, 0.0
  %v6845 = vadd.f32 %v6843, %v6844
  %v6846 = vsel %vm6535, %v6735, 0.0
  %v6847 = vadd.f32 %v6845, %v6846
  %v6848 = vsel %vm6535, %v6736, 0.0
  %v6849 = vadd.f32 %v6847, %v6848
  %v6850 = vsel %vm6535, %v6737, 0.0
  %v6851 = vadd.f32 %v6849, %v6850
  %v6852 = vsel %vm6535, %v6738, 0.0
  %v6853 = vadd.f32 %v6851, %v6852
  %v6854 = vsel %vm6535, %v6739, 0.0
  %v6855 = vadd.f32 %v6853, %v6854
  %v6856 = vsel %vm6535, %v6740, 0.0
  %v6857 = vadd.f32 %v6855, %v6856
  %v6858 = vsel %vm6535, %v6741, 0.0
  %v6859 = vadd.f32 %v6857, %v6858
  %v6860 = vsel %vm6535, %v6742, 0.0
  %v6861 = vadd.f32 %v6859, %v6860
  %v6862 = vsel %vm6535, %v6743, 0.0
  %v6863 = vadd.f32 %v6861, %v6862
  %v6864 = vsel %vm6535, %v6744, 0.0
  %v6865 = vadd.f32 %v6863, %v6864
  %v6866 = vsel %vm6535, %v6745, 0.0
  %v6867 = vadd.f32 %v6865, %v6866
  %v6868 = vsel %vm6535, %v6746, 0.0
  %v6869 = vadd.f32 %v6867, %v6868
  %v6870 = vsel %vm6535, %v6747, 0.0
  %v6871 = vadd.f32 %v6869, %v6870
  %v6872 = vsel %vm6535, %v6748, 0.0
  %v6873 = vadd.f32 %v6871, %v6872
  %v6874 = vsel %vm6535, %v6749, 0.0
  %v6875 = vadd.f32 %v6873, %v6874
  %v6876 = vsel %vm6535, %v6750, 0.0
  %v6877 = vadd.f32 %v6875, %v6876
  %v6878 = vsel %vm6535, %v6751, 0.0
  %v6879 = vadd.f32 %v6877, %v6878
  %v6880 = vsel %vm6535, %v6752, 0.0
  %v6881 = vadd.f32 %v6879, %v6880
  %v6882 = vsel %vm6535, %v6753, 0.0
  %v6883 = vadd.f32 %v6881, %v6882
  %v6884 = vsel %vm6535, %v6754, 0.0
  %v6885 = vadd.f32 %v6883, %v6884
  %v6886 = vsel %vm6535, %v6755, 0.0
  %v6887 = vadd.f32 %v6885, %v6886
  %v6888 = vsel %vm6535, %v6756, 0.0
  %v6889 = vadd.f32 %v6887, %v6888
  %v6890 = vsel %vm6535, %v6757, 0.0
  %v6891 = vadd.f32 %v6889, %v6890
  %v6892 = vsel %vm6535, %v6758, 0.0
  %v6893 = vadd.f32 %v6891, %v6892
  %v6894 = vsel %vm6535, %v6759, 0.0
  %v6895 = vadd.f32 %v6893, %v6894
  %v6896 = vsel %vm6535, %v6760, 0.0
  %v6897 = vadd.f32 %v6895, %v6896
  %v6898 = vsel %vm6535, %v6761, 0.0
  %v6899 = vadd.f32 %v6897, %v6898
  %v6900 = vsel %vm6535, %v6762, 0.0
  %v6901 = vadd.f32 %v6899, %v6900
  %v6902 = vsel %vm6535, %v6763, 0.0
  %v6903 = vadd.f32 %v6901, %v6902
  %v6904 = vsel %vm6535, %v6764, 0.0
  %v6905 = vadd.f32 %v6903, %v6904
  %v6906 = vsel %vm6535, %v6765, 0.0
  %v6907 = vadd.f32 %v6905, %v6906
  %v6908 = vsel %vm6535, %v6766, 0.0
  %v6909 = vadd.f32 %v6907, %v6908
  %v6910 = vsel %vm6535, %v6767, 0.0
  %v6911 = vadd.f32 %v6909, %v6910
  %v6912 = vsel %vm6535, %v6768, 0.0
  %v6913 = vadd.f32 %v6911, %v6912
  %v6914 = vsel %vm6535, %v6769, 0.0
  %v6915 = vadd.f32 %v6913, %v6914
  %v6916 = vsel %vm6535, %v6770, 0.0
  %v6917 = vadd.f32 %v6915, %v6916
  %v6918 = vsel %vm6535, %v6771, 0.0
  %v6919 = vadd.f32 %v6917, %v6918
  %v6920 = vsel %vm6535, %v6772, 0.0
  %v6921 = vadd.f32 %v6919, %v6920
  %v6922 = vsel %vm6535, %v6773, 0.0
  %v6923 = vadd.f32 %v6921, %v6922
  %v6924 = vsel %vm6535, %v6774, 0.0
  %v6925 = vadd.f32 %v6923, %v6924
  %v6926 = vsel %vm6535, %v6775, 0.0
  %v6927 = vadd.f32 %v6925, %v6926
  %v6928 = vsel %vm6535, %v6776, 0.0
  %v6929 = vadd.f32 %v6927, %v6928
  %v6930 = vsel %vm6535, %v6777, 0.0
  %v6931 = vadd.f32 %v6929, %v6930
  %v6932 = vsel %vm6535, %v6778, 0.0
  %v6933 = vadd.f32 %v6931, %v6932
  %v6934 = vsel %vm6535, %v6779, 0.0
  %v6935 = vadd.f32 %v6933, %v6934
  %v6936 = vsel %vm6535, %v6780, 0.0
  %v6937 = vadd.f32 %v6935, %v6936
  %v6938 = vsel %vm6535, %v6781, 0.0
  %v6939 = vadd.f32 %v6937, %v6938
  %v6940 = vsel %vm6535, %v6782, 0.0
  %v6941 = vadd.f32 %v6939, %v6940
  %v6942 = vsel %vm6535, %v6783, 0.0
  %v6943 = vadd.f32 %v6941, %v6942
  %v6944 = vsel %vm6535, %v6784, 0.0
  %v6945 = vadd.f32 %v6943, %v6944
  %v6946 = vrot.slane %v6945, 4
  %v6947 = vadd.f32 %v6945, %v6946
  %v6948 = vrot.slane %v6947, 2
  %v6949 = vadd.f32 %v6947, %v6948
  %v6950 = vrot.slane %v6949, 1
  %v6951 = vadd.f32 %v6949, %v6950
  %v6952 = vmul.f32 %v6951, 0.001953125
  %v6953 = vmul.f32 %v6703, %v6703
  %v6954 = vsub.f32 %v6952, %v6953
  %v6955 = vmax.f32 %v6954, 0.0
  %v6956 = vld [vmem:[%s3] sm:$0x1]
  %v6957 = vadd.f32 %v6955, 1e-05
  %v6958 = vrsqrt.pop %v6957
  %v6959 = vmul.f32 %v6958, %v6957
  %v6960 = vmul.f32 %v6959, %v6958
  %v6961 = vmul.f32 0.5, %v6960
  %v6962 = vsub.f32 1.5, %v6961
  %v6963 = vmul.f32 %v6958, %v6962
  %vm6964 = vweird.f32 %v6957
  %vm6965 = vweird.f32 %v6958
  %vm6966 = vmor %vm6964, %vm6965
  %v6967 = vsel %vm6966, %v6958, %v6963
  %v6968 = vmul.f32 %v6956, %v6967
  %v6969 = vld [vmem:[%s4] sm:$0x1]
  %v6970 = vmul.f32 %v6703, %v6968
  %v6971 = vsub.f32 %v6969, %v6970
  %v6973 = vperm.slane %v6968, 0
  %v6975 = vmul.f32 %v5887, %v6973
  %v6976 = vmul.f32 %v5888, %v6973
  %v6977 = vmul.f32 %v5889, %v6973
  %v6978 = vmul.f32 %v5890, %v6973
  %v6979 = vmul.f32 %v5891, %v6973
  %v6980 = vmul.f32 %v5892, %v6973
  %v6981 = vmul.f32 %v5893, %v6973
  %v6982 = vmul.f32 %v5894, %v6973
  %v6983 = vmul.f32 %v5895, %v6973
  %v6984 = vmul.f32 %v5896, %v6973
  %v6985 = vmul.f32 %v5897, %v6973
  %v6986 = vmul.f32 %v5898, %v6973
  %v6987 = vmul.f32 %v5899, %v6973
  %v6988 = vmul.f32 %v5900, %v6973
  %v6989 = vmul.f32 %v5901, %v6973
  %v6990 = vmul.f32 %v5902, %v6973
  %v6991 = vmul.f32 %v5903, %v6973
  %v6992 = vmul.f32 %v5904, %v6973
  %v6993 = vmul.f32 %v5905, %v6973
  %v6994 = vmul.f32 %v5906, %v6973
  %v6995 = vmul.f32 %v5907, %v6973
  %v6996 = vmul.f32 %v5908, %v6973
  %v6997 = vmul.f32 %v5909, %v6973
  %v6998 = vmul.f32 %v5910, %v6973
  %v6999 = vmul.f32 %v5911, %v6973
  %v7000 = vmul.f32 %v5912, %v6973
  %v7001 = vmul.f32 %v5913, %v6973
  %v7002 = vmul.f32 %v5914, %v6973
  %v7003 = vmul.f32 %v5915, %v6973
  %v7004 = vmul.f32 %v5916, %v6973
  %v7005 = vmul.f32 %v5917, %v6973
  %v7006 = vmul.f32 %v5918, %v6973
  %v7007 = vmul.f32 %v5919, %v6973
  %v7008 = vmul.f32 %v5920, %v6973
  %v7009 = vmul.f32 %v5921, %v6973
  %v7010 = vmul.f32 %v5922, %v6973
  %v7011 = vmul.f32 %v5923, %v6973
  %v7012 = vmul.f32 %v5924, %v6973
  %v7013 = vmul.f32 %v5925, %v6973
  %v7014 = vmul.f32 %v5926, %v6973
  %v7015 = vmul.f32 %v5927, %v6973
  %v7016 = vmul.f32 %v5928, %v6973
  %v7017 = vmul.f32 %v5929, %v6973
  %v7018 = vmul.f32 %v5930, %v6973
  %v7019 = vmul.f32 %v5931, %v6973
  %v7020 = vmul.f32 %v5932, %v6973
  %v7021 = vmul.f32 %v5933, %v6973
  %v7022 = vmul.f32 %v5934, %v6973
  %v7023 = vmul.f32 %v5935, %v6973
  %v7024 = vmul.f32 %v5936, %v6973
  %v7025 = vmul.f32 %v5937, %v6973
  %v7026 = vmul.f32 %v5938, %v6973
  %v7027 = vmul.f32 %v5939, %v6973
  %v7028 = vmul.f32 %v5940, %v6973
  %v7029 = vmul.f32 %v5941, %v6973
  %v7030 = vmul.f32 %v5942, %v6973
  %v7031 = vmul.f32 %v5943, %v6973
  %v7032 = vmul.f32 %v5944, %v6973
  %v7033 = vmul.f32 %v5945, %v6973
  %v7034 = vmul.f32 %v5946, %v6973
  %v7035 = vmul.f32 %v5947, %v6973
  %v7036 = vmul.f32 %v5948, %v6973
  %v7037 = vmul.f32 %v5949, %v6973
  %v7038 = vmul.f32 %v5950, %v6973
  %v7039 = vmul.f32 %v5951, %v6973
  %v7040 = vmul.f32 %v5952, %v6973
  %v7041 = vmul.f32 %v5953, %v6973
  %v7042 = vmul.f32 %v5954, %v6973
  %v7043 = vmul.f32 %v5955, %v6973
  %v7044 = vmul.f32 %v5956, %v6973
  %v7045 = vmul.f32 %v5957, %v6973
  %v7046 = vmul.f32 %v5958, %v6973
  %v7047 = vmul.f32 %v5959, %v6973
  %v7048 = vmul.f32 %v5960, %v6973
  %v7049 = vmul.f32 %v5961, %v6973
  %v7050 = vmul.f32 %v5962, %v6973
  %v7051 = vmul.f32 %v5963, %v6973
  %v7052 = vmul.f32 %v5964, %v6973
  %v7053 = vmul.f32 %v5965, %v6973
  %v7054 = vmul.f32 %v5966, %v6973
  %v7055 = vmul.f32 %v5967, %v6973
  %v7057 = vperm.slane %v6971, 0
  %v7059 = vadd.f32 %v6975, %v7057
  %v7060 = vadd.f32 %v6976, %v7057
  %v7061 = vadd.f32 %v6977, %v7057
  %v7062 = vadd.f32 %v6978, %v7057
  %v7063 = vadd.f32 %v6979, %v7057
  %v7064 = vadd.f32 %v6980, %v7057
  %v7065 = vadd.f32 %v6981, %v7057
  %v7066 = vadd.f32 %v6982, %v7057
  %v7067 = vadd.f32 %v6983, %v7057
  %v7068 = vadd.f32 %v6984, %v7057
  %v7069 = vadd.f32 %v6985, %v7057
  %v7070 = vadd.f32 %v6986, %v7057
  %v7071 = vadd.f32 %v6987, %v7057
  %v7072 = vadd.f32 %v6988, %v7057
  %v7073 = vadd.f32 %v6989, %v7057
  %v7074 = vadd.f32 %v6990, %v7057
  %v7075 = vadd.f32 %v6991, %v7057
  %v7076 = vadd.f32 %v6992, %v7057
  %v7077 = vadd.f32 %v6993, %v7057
  %v7078 = vadd.f32 %v6994, %v7057
  %v7079 = vadd.f32 %v6995, %v7057
  %v7080 = vadd.f32 %v6996, %v7057
  %v7081 = vadd.f32 %v6997, %v7057
  %v7082 = vadd.f32 %v6998, %v7057
  %v7083 = vadd.f32 %v6999, %v7057
  %v7084 = vadd.f32 %v7000, %v7057
  %v7085 = vadd.f32 %v7001, %v7057
  %v7086 = vadd.f32 %v7002, %v7057
  %v7087 = vadd.f32 %v7003, %v7057
  %v7088 = vadd.f32 %v7004, %v7057
  %v7089 = vadd.f32 %v7005, %v7057
  %v7090 = vadd.f32 %v7006, %v7057
  %v7091 = vadd.f32 %v7007, %v7057
  %v7092 = vadd.f32 %v7008, %v7057
  %v7093 = vadd.f32 %v7009, %v7057
  %v7094 = vadd.f32 %v7010, %v7057
  %v7095 = vadd.f32 %v7011, %v7057
  %v7096 = vadd.f32 %v7012, %v7057
  %v7097 = vadd.f32 %v7013, %v7057
  %v7098 = vadd.f32 %v7014, %v7057
  %v7099 = vadd.f32 %v7015, %v7057
  %v7100 = vadd.f32 %v7016, %v7057
  %v7101 = vadd.f32 %v7017, %v7057
  %v7102 = vadd.f32 %v7018, %v7057
  %v7103 = vadd.f32 %v7019, %v7057
  %v7104 = vadd.f32 %v7020, %v7057
  %v7105 = vadd.f32 %v7021, %v7057
  %v7106 = vadd.f32 %v7022, %v7057
  %v7107 = vadd.f32 %v7023, %v7057
  %v7108 = vadd.f32 %v7024, %v7057
  %v7109 = vadd.f32 %v7025, %v7057
  %v7110 = vadd.f32 %v7026, %v7057
  %v7111 = vadd.f32 %v7027, %v7057
  %v7112 = vadd.f32 %v7028, %v7057
  %v7113 = vadd.f32 %v7029, %v7057
  %v7114 = vadd.f32 %v7030, %v7057
  %v7115 = vadd.f32 %v7031, %v7057
  %v7116 = vadd.f32 %v7032, %v7057
  %v7117 = vadd.f32 %v7033, %v7057
  %v7118 = vadd.f32 %v7034, %v7057
  %v7119 = vadd.f32 %v7035, %v7057
  %v7120 = vadd.f32 %v7036, %v7057
  %v7121 = vadd.f32 %v7037, %v7057
  %v7122 = vadd.f32 %v7038, %v7057
  %v7123 = vadd.f32 %v7039, %v7057
  %v7124 = vadd.f32 %v7040, %v7057
  %v7125 = vadd.f32 %v7041, %v7057
  %v7126 = vadd.f32 %v7042, %v7057
  %v7127 = vadd.f32 %v7043, %v7057
  %v7128 = vadd.f32 %v7044, %v7057
  %v7129 = vadd.f32 %v7045, %v7057
  %v7130 = vadd.f32 %v7046, %v7057
  %v7131 = vadd.f32 %v7047, %v7057
  %v7132 = vadd.f32 %v7048, %v7057
  %v7133 = vadd.f32 %v7049, %v7057
  %v7134 = vadd.f32 %v7050, %v7057
  %v7135 = vadd.f32 %v7051, %v7057
  %v7136 = vadd.f32 %v7052, %v7057
  %v7137 = vadd.f32 %v7053, %v7057
  %v7138 = vadd.f32 %v7054, %v7057
  %v7139 = vadd.f32 %v7055, %v7057
  %v7140 = vmax.f32 %v7059, 0.0
  %v7141 = vmax.f32 %v7060, 0.0
  %v7142 = vmax.f32 %v7061, 0.0
  %v7143 = vmax.f32 %v7062, 0.0
  %v7144 = vmax.f32 %v7063, 0.0
  %v7145 = vmax.f32 %v7064, 0.0
  %v7146 = vmax.f32 %v7065, 0.0
  %v7147 = vmax.f32 %v7066, 0.0
  %v7148 = vmax.f32 %v7067, 0.0
  %v7149 = vmax.f32 %v7068, 0.0
  %v7150 = vmax.f32 %v7069, 0.0
  %v7151 = vmax.f32 %v7070, 0.0
  %v7152 = vmax.f32 %v7071, 0.0
  %v7153 = vmax.f32 %v7072, 0.0
  %v7154 = vmax.f32 %v7073, 0.0
  %v7155 = vmax.f32 %v7074, 0.0
  %v7156 = vmax.f32 %v7075, 0.0
  %v7157 = vmax.f32 %v7076, 0.0
  %v7158 = vmax.f32 %v7077, 0.0
  %v7159 = vmax.f32 %v7078, 0.0
  %v7160 = vmax.f32 %v7079, 0.0
  %v7161 = vmax.f32 %v7080, 0.0
  %v7162 = vmax.f32 %v7081, 0.0
  %v7163 = vmax.f32 %v7082, 0.0
  %v7164 = vmax.f32 %v7083, 0.0
  %v7165 = vmax.f32 %v7084, 0.0
  %v7166 = vmax.f32 %v7085, 0.0
  %v7167 = vmax.f32 %v7086, 0.0
  %v7168 = vmax.f32 %v7087, 0.0
  %v7169 = vmax.f32 %v7088, 0.0
  %v7170 = vmax.f32 %v7089, 0.0
  %v7171 = vmax.f32 %v7090, 0.0
  %v7172 = vmax.f32 %v7091, 0.0
  %v7173 = vmax.f32 %v7092, 0.0
  %v7174 = vmax.f32 %v7093, 0.0
  %v7175 = vmax.f32 %v7094, 0.0
  %v7176 = vmax.f32 %v7095, 0.0
  %v7177 = vmax.f32 %v7096, 0.0
  %v7178 = vmax.f32 %v7097, 0.0
  %v7179 = vmax.f32 %v7098, 0.0
  %v7180 = vmax.f32 %v7099, 0.0
  %v7181 = vmax.f32 %v7100, 0.0
  %v7182 = vmax.f32 %v7101, 0.0
  %v7183 = vmax.f32 %v7102, 0.0
  %v7184 = vmax.f32 %v7103, 0.0
  %v7185 = vmax.f32 %v7104, 0.0
  %v7186 = vmax.f32 %v7105, 0.0
  %v7187 = vmax.f32 %v7106, 0.0
  %v7188 = vmax.f32 %v7107, 0.0
  %v7189 = vmax.f32 %v7108, 0.0
  %v7190 = vmax.f32 %v7109, 0.0
  %v7191 = vmax.f32 %v7110, 0.0
  %v7192 = vmax.f32 %v7111, 0.0
  %v7193 = vmax.f32 %v7112, 0.0
  %v7194 = vmax.f32 %v7113, 0.0
  %v7195 = vmax.f32 %v7114, 0.0
  %v7196 = vmax.f32 %v7115, 0.0
  %v7197 = vmax.f32 %v7116, 0.0
  %v7198 = vmax.f32 %v7117, 0.0
  %v7199 = vmax.f32 %v7118, 0.0
  %v7200 = vmax.f32 %v7119, 0.0
  %v7201 = vmax.f32 %v7120, 0.0
  %v7202 = vmax.f32 %v7121, 0.0
  %v7203 = vmax.f32 %v7122, 0.0
  %v7204 = vmax.f32 %v7123, 0.0
  %v7205 = vmax.f32 %v7124, 0.0
  %v7206 = vmax.f32 %v7125, 0.0
  %v7207 = vmax.f32 %v7126, 0.0
  %v7208 = vmax.f32 %v7127, 0.0
  %v7209 = vmax.f32 %v7128, 0.0
  %v7210 = vmax.f32 %v7129, 0.0
  %v7211 = vmax.f32 %v7130, 0.0
  %v7212 = vmax.f32 %v7131, 0.0
  %v7213 = vmax.f32 %v7132, 0.0
  %v7214 = vmax.f32 %v7133, 0.0
  %v7215 = vmax.f32 %v7134, 0.0
  %v7216 = vmax.f32 %v7135, 0.0
  %v7217 = vmax.f32 %v7136, 0.0
  %v7218 = vmax.f32 %v7137, 0.0
  %v7219 = vmax.f32 %v7138, 0.0
  %v7220 = vmax.f32 %v7139, 0.0
  %7221 = vst.msk [vmem:[%s6] sm:$0xff] %vm6535, %v7140
  %7222 = vst.msk [vmem:[%s6 + $0x8] sm:$0xff] %vm6535, %v7141
  %7223 = vst.msk [vmem:[%s6 + $0x10] sm:$0xff] %vm6535, %v7142
  %7224 = vst.msk [vmem:[%s6 + $0x18] sm:$0xff] %vm6535, %v7143
  %7225 = vst.msk [vmem:[%s6 + $0x20] sm:$0xff] %vm6535, %v7144
  %7226 = vst.msk [vmem:[%s6 + $0x28] sm:$0xff] %vm6535, %v7145
  %7227 = vst.msk [vmem:[%s6 + $0x30] sm:$0xff] %vm6535, %v7146
  %7228 = vst.msk [vmem:[%s6 + $0x38] sm:$0xff] %vm6535, %v7147
  %7229 = vst.msk [vmem:[%s6 + $0x40] sm:$0xff] %vm6535, %v7148
  %7230 = vst.msk [vmem:[%s6 + $0x48] sm:$0xff] %vm6535, %v7149
  %7231 = vst.msk [vmem:[%s6 + $0x50] sm:$0xff] %vm6535, %v7150
  %7232 = vst.msk [vmem:[%s6 + $0x58] sm:$0xff] %vm6535, %v7151
  %7233 = vst.msk [vmem:[%s6 + $0x60] sm:$0xff] %vm6535, %v7152
  %7234 = vst.msk [vmem:[%s6 + $0x68] sm:$0xff] %vm6535, %v7153
  %7235 = vst.msk [vmem:[%s6 + $0x70] sm:$0xff] %vm6535, %v7154
  %7236 = vst.msk [vmem:[%s6 + $0x78] sm:$0xff] %vm6535, %v7155
  %7237 = vst.msk [vmem:[%s6 + $0x80] sm:$0xff] %vm6535, %v7156
  %7238 = vst.msk [vmem:[%s6 + $0x88] sm:$0xff] %vm6535, %v7157
  %7239 = vst.msk [vmem:[%s6 + $0x90] sm:$0xff] %vm6535, %v7158
  %7240 = vst.msk [vmem:[%s6 + $0x98] sm:$0xff] %vm6535, %v7159
  %7241 = vst.msk [vmem:[%s6 + $0xa0] sm:$0xff] %vm6535, %v7160
  %7242 = vst.msk [vmem:[%s6 + $0xa8] sm:$0xff] %vm6535, %v7161
  %7243 = vst.msk [vmem:[%s6 + $0xb0] sm:$0xff] %vm6535, %v7162
  %7244 = vst.msk [vmem:[%s6 + $0xb8] sm:$0xff] %vm6535, %v7163
  %7245 = vst.msk [vmem:[%s6 + $0xc0] sm:$0xff] %vm6535, %v7164
  %7246 = vst.msk [vmem:[%s6 + $0xc8] sm:$0xff] %vm6535, %v7165
  %7247 = vst.msk [vmem:[%s6 + $0xd0] sm:$0xff] %vm6535, %v7166
  %7248 = vst.msk [vmem:[%s6 + $0xd8] sm:$0xff] %vm6535, %v7167
  %7249 = vst.msk [vmem:[%s6 + $0xe0] sm:$0xff] %vm6535, %v7168
  %7250 = vst.msk [vmem:[%s6 + $0xe8] sm:$0xff] %vm6535, %v7169
  %7251 = vst.msk [vmem:[%s6 + $0xf0] sm:$0xff] %vm6535, %v7170
  %7252 = vst.msk [vmem:[%s6 + $0xf8] sm:$0xff] %vm6535, %v7171
  %7253 = vst.msk [vmem:[%s6 + $0x100] sm:$0xff] %vm6535, %v7172
  %7254 = vst.msk [vmem:[%s6 + $0x108] sm:$0xff] %vm6535, %v7173
  %7255 = vst.msk [vmem:[%s6 + $0x110] sm:$0xff] %vm6535, %v7174
  %7256 = vst.msk [vmem:[%s6 + $0x118] sm:$0xff] %vm6535, %v7175
  %7257 = vst.msk [vmem:[%s6 + $0x120] sm:$0xff] %vm6535, %v7176
  %7258 = vst.msk [vmem:[%s6 + $0x128] sm:$0xff] %vm6535, %v7177
  %7259 = vst.msk [vmem:[%s6 + $0x130] sm:$0xff] %vm6535, %v7178
  %7260 = vst.msk [vmem:[%s6 + $0x138] sm:$0xff] %vm6535, %v7179
  %7261 = vst.msk [vmem:[%s6 + $0x140] sm:$0xff] %vm6535, %v7180
  %7262 = vst.msk [vmem:[%s6 + $0x148] sm:$0xff] %vm6535, %v7181
  %7263 = vst.msk [vmem:[%s6 + $0x150] sm:$0xff] %vm6535, %v7182
  %7264 = vst.msk [vmem:[%s6 + $0x158] sm:$0xff] %vm6535, %v7183
  %7265 = vst.msk [vmem:[%s6 + $0x160] sm:$0xff] %vm6535, %v7184
  %7266 = vst.msk [vmem:[%s6 + $0x168] sm:$0xff] %vm6535, %v7185
  %7267 = vst.msk [vmem:[%s6 + $0x170] sm:$0xff] %vm6535, %v7186
  %7268 = vst.msk [vmem:[%s6 + $0x178] sm:$0xff] %vm6535, %v7187
  %7269 = vst.msk [vmem:[%s6 + $0x180] sm:$0xff] %vm6535, %v7188
  %7270 = vst.msk [vmem:[%s6 + $0x188] sm:$0xff] %vm6535, %v7189
  %7271 = vst.msk [vmem:[%s6 + $0x190] sm:$0xff] %vm6535, %v7190
  %7272 = vst.msk [vmem:[%s6 + $0x198] sm:$0xff] %vm6535, %v7191
  %7273 = vst.msk [vmem:[%s6 + $0x1a0] sm:$0xff] %vm6535, %v7192
  %7274 = vst.msk [vmem:[%s6 + $0x1a8] sm:$0xff] %vm6535, %v7193
  %7275 = vst.msk [vmem:[%s6 + $0x1b0] sm:$0xff] %vm6535, %v7194
  %7276 = vst.msk [vmem:[%s6 + $0x1b8] sm:$0xff] %vm6535, %v7195
  %7277 = vst.msk [vmem:[%s6 + $0x1c0] sm:$0xff] %vm6535, %v7196
  %7278 = vst.msk [vmem:[%s6 + $0x1c8] sm:$0xff] %vm6535, %v7197
  %7279 = vst.msk [vmem:[%s6 + $0x1d0] sm:$0xff] %vm6535, %v7198
  %7280 = vst.msk [vmem:[%s6 + $0x1d8] sm:$0xff] %vm6535, %v7199
  %7281 = vst.msk [vmem:[%s6 + $0x1e0] sm:$0xff] %vm6535, %v7200
  %7282 = vst.msk [vmem:[%s6 + $0x1e8] sm:$0xff] %vm6535, %v7201
  %7283 = vst.msk [vmem:[%s6 + $0x1f0] sm:$0xff] %vm6535, %v7202
  %7284 = vst.msk [vmem:[%s6 + $0x1f8] sm:$0xff] %vm6535, %v7203
  %7285 = vst.msk [vmem:[%s6 + $0x200] sm:$0xff] %vm6535, %v7204
  %7286 = vst.msk [vmem:[%s6 + $0x208] sm:$0xff] %vm6535, %v7205
  %7287 = vst.msk [vmem:[%s6 + $0x210] sm:$0xff] %vm6535, %v7206
  %7288 = vst.msk [vmem:[%s6 + $0x218] sm:$0xff] %vm6535, %v7207
  %7289 = vst.msk [vmem:[%s6 + $0x220] sm:$0xff] %vm6535, %v7208
  %7290 = vst.msk [vmem:[%s6 + $0x228] sm:$0xff] %vm6535, %v7209
  %7291 = vst.msk [vmem:[%s6 + $0x230] sm:$0xff] %vm6535, %v7210
  %7292 = vst.msk [vmem:[%s6 + $0x238] sm:$0xff] %vm6535, %v7211
  %7293 = vst.msk [vmem:[%s6 + $0x240] sm:$0xff] %vm6535, %v7212
  %7294 = vst.msk [vmem:[%s6 + $0x248] sm:$0xff] %vm6535, %v7213
  %7295 = vst.msk [vmem:[%s6 + $0x250] sm:$0xff] %vm6535, %v7214
  %7296 = vst.msk [vmem:[%s6 + $0x258] sm:$0xff] %vm6535, %v7215
  %7297 = vst.msk [vmem:[%s6 + $0x260] sm:$0xff] %vm6535, %v7216
  %7298 = vst.msk [vmem:[%s6 + $0x268] sm:$0xff] %vm6535, %v7217
  %7299 = vst.msk [vmem:[%s6 + $0x270] sm:$0xff] %vm6535, %v7218
  %7300 = vst.msk [vmem:[%s6 + $0x278] sm:$0xff] %vm6535, %v7219
  %7301 = vst.msk [vmem:[%s6 + $0x280] sm:$0xff] %vm6535, %v7220
  // Predicated region
  $region26: #{_reconstruct_impl.1} parent=0 // pred_check
    _
  $region27: #{_reconstruct_impl.1} parent=0 // pred_check_branch
    %7303 = sbr.rel (0) target = $region29
  $region28: #{_reconstruct_impl.1} parent=0 // pred_region
    _
  $region29: #{_reconstruct_impl.1} parent=0 // pred_fallthru
    _
  // Predicated region
  $region30: #{_reconstruct_impl.1} parent=0 // pred_check
    _
  $region31: #{_reconstruct_impl.1} parent=0 // pred_check_branch
    %7305 = sbr.rel (0) target = $region33
  $region32: #{_reconstruct_impl.1} parent=0 // pred_region
    _
  $region33: #{_reconstruct_impl.1} parent=0 // pred_fallthru
    _

</llo_original>
